<compile_context>
chip_gen: v5e
topology: v5e:2x2
jax: 0.10.0
libtpu: 0.0.40
codegen_flags: <defaults>
</compile_context>

<pallas_src>
import jax
import jax.numpy as jnp
from jax.experimental import pallas as pl
from jax.experimental.pallas import tpu as pltpu

# Small, forward-consistent hyperparameters (parser defaults replaced with small values).
LATENT_DIM = 32
CHANNELS = 1
IMG_SIZE = 16
IMG_SHAPE = (CHANNELS, IMG_SIZE, IMG_SIZE)
IMG_FLAT = CHANNELS * IMG_SIZE * IMG_SIZE  # 256 (multiple of 128 -> lane-dense output)
BATCH = 8

BN_EPS = 0.8        # nn.BatchNorm1d(out_feat, 0.8) -> eps=0.8
LRELU_SLOPE = 0.2

HIDDEN = (128, 256, 512, 1024)  # fixed by the module definition
CHUNK = 256                      # layer-4 feature-slab width for W4/W5 streaming
N_CHUNKS = HIDDEN[3] // CHUNK    # 4

# Packed small-vector layout: [b1 | g2 | be2 | g3 | be3 | g4 | be4 | b5]
# Every offset/size is a multiple of 128 -> static lane-aligned slices, no tile crossing.
_B1_OFF = 0
_G2_OFF = _B1_OFF + 128
_BE2_OFF = _G2_OFF + 256
_G3_OFF = _BE2_OFF + 256
_BE3_OFF = _G3_OFF + 512
_G4_OFF = _BE3_OFF + 512
_BE4_OFF = _G4_OFF + 1024
_B5_OFF = _BE4_OFF + 1024
_VEC_TOTAL = _B5_OFF + IMG_FLAT  # 3968 = 31 * 128


def _leaky_relu(x):
    # Valid for 0 <= slope < 1: max(x, slope*x) == LeakyReLU(x).
    return jnp.maximum(x, LRELU_SLOPE * x)


def _bn_train_single_pass(x, gamma, beta):
    """Training-mode BatchNorm1d, single pass: independent sum / sum-of-squares reductions."""
    inv_b = 1.0 / x.shape[0]
    s1 = jnp.sum(x, axis=0, keepdims=True)
    s2 = jnp.sum(x * x, axis=0, keepdims=True)
    mean = s1 * inv_b
    var = s2 * inv_b - mean * mean          # biased variance; eps=0.8 dominates rounding
    return (x - mean) * jax.lax.rsqrt(var + BN_EPS) * gamma + beta


def _bn_train_ref(x, gamma, beta):
    """Two-pass PyTorch-exact formulation for the fp32 reference."""
    mean = jnp.mean(x, axis=0, keepdims=True)
    var = jnp.mean((x - mean) ** 2, axis=0, keepdims=True)
    return (x - mean) * jax.lax.rsqrt(var + BN_EPS) * gamma + beta


def generator_kernel(z_ref, w1_ref, vec_ref, w2_hbm, w3_hbm, w4_hbm, w5_hbm, out_ref,
                     w2_vmem, w3_vmem, w4_vmem, w5_vmem, sem23, sem45):
    # Issue every weight stream up front, ordered by first use so the DMA engine delivers
    # W2 -> W3 -> (W4 chunk c, W5 chunk c) roughly in the order compute consumes them.
    # Nothing below gates kernel start on a prologue DMA except the tiny z/W1/vec operands.
    w2_copy = pltpu.make_async_copy(w2_hbm, w2_vmem, sem23.at[0])
    w3_copy = pltpu.make_async_copy(w3_hbm, w3_vmem, sem23.at[1])
    w2_copy.start()
    w3_copy.start()
    w4_copies = []
    w5_copies = []
    for c in range(N_CHUNKS):
        c4 = pltpu.make_async_copy(w4_hbm.at[c], w4_vmem.at[c], sem45.at[0, c])
        c5 = pltpu.make_async_copy(w5_hbm.at[c], w5_vmem.at[c], sem45.at[1, c])
        c4.start()
        c5.start()
        w4_copies.append(c4)
        w5_copies.append(c5)

    # block(latent_dim, 128, normalize=False): Linear + bias + LeakyReLU
    z = z_ref[...].astype(jnp.bfloat16)
    h = jnp.dot(z, w1_ref[...], preferred_element_type=jnp.float32)
    h = _leaky_relu(h + vec_ref[:, _B1_OFF:_B1_OFF + 128])

    # block(128, 256): Linear (pre-BN bias cancelled by batch-mean subtraction) + BN + LReLU
    w2_copy.wait()
    h = jnp.dot(h.astype(jnp.bfloat16), w2_vmem[...], preferred_element_type=jnp.float32)
    h = _leaky_relu(_bn_train_single_pass(h,
                                          vec_ref[:, _G2_OFF:_G2_OFF + 256],
                                          vec_ref[:, _BE2_OFF:_BE2_OFF + 256]))

    # block(256, 512)
    w3_copy.wait()
    h = jnp.dot(h.astype(jnp.bfloat16), w3_vmem[...], preferred_element_type=jnp.float32)
    h = _leaky_relu(_bn_train_single_pass(h,
                                          vec_ref[:, _G3_OFF:_G3_OFF + 512],
                                          vec_ref[:, _BE3_OFF:_BE3_OFF + 512]))
    h3 = h.astype(jnp.bfloat16)

    # block(512, 1024) + Linear(1024, prod(img_shape)), chunked over 256-wide feature slabs
    # of the 1024-dim hidden layer.  Per chunk: layer-4 dot -> BN (per-feature, so slabs are
    # exact) -> LeakyReLU -> layer-5 partial product accumulated in fp32.
    acc = jnp.zeros((h3.shape[0], IMG_FLAT), jnp.float32)
    for c in range(N_CHUNKS):
        w4_copies[c].wait()
        h4 = jnp.dot(h3, w4_vmem[c], preferred_element_type=jnp.float32)
        g4 = vec_ref[:, _G4_OFF + c * CHUNK:_G4_OFF + (c + 1) * CHUNK]
        be4 = vec_ref[:, _BE4_OFF + c * CHUNK:_BE4_OFF + (c + 1) * CHUNK]
        h4 = _leaky_relu(_bn_train_single_pass(h4, g4, be4)).astype(jnp.bfloat16)
        w5_copies[c].wait()
        acc = acc + jnp.dot(h4, w5_vmem[c], preferred_element_type=jnp.float32)

    # + b5, Tanh
    out_ref[...] = jnp.tanh(acc + vec_ref[:, _B5_OFF:_B5_OFF + IMG_FLAT])


def init_params(key):
    """Deterministic PyTorch-style init: uniform(-1/sqrt(fan_in), 1/sqrt(fan_in)).

    Linear weights are stored transposed, shape (in_feat, out_feat), so forward is x @ W + b.
    All parameters are kept in fp32 here (reference precision); the kernel wrapper casts
    the weight matrices to bf16 and packs the small vectors.
    """
    dims = [LATENT_DIM, *HIDDEN, IMG_FLAT]
    params = {}
    for li in range(5):
        in_f, out_f = dims[li], dims[li + 1]
        key, kw, kb = jax.random.split(key, 3)
        bound = 1.0 / float(in_f) ** 0.5
        params[f"w{li + 1}"] = jax.random.uniform(kw, (in_f, out_f), jnp.float32, -bound, bound)
        params[f"b{li + 1}"] = jax.random.uniform(kb, (out_f,), jnp.float32, -bound, bound)
        if li in (1, 2, 3):  # normalize=True blocks
            params[f"g{li + 1}"] = jnp.ones((out_f,), jnp.float32)   # BN gamma
            params[f"be{li + 1}"] = jnp.zeros((out_f,), jnp.float32)  # BN beta
    return params


def pack_params(p):
    """Kernel operand layout.

    * bf16 weights; W4/W5 pre-split into contiguous 256-wide chunks so each chunk DMA is a
      single contiguous transfer:  W4 -> (4, 512, 256) column slabs, W5 -> (4, 256, 256) row slabs.
    * b2/b3/b4 are intentionally NOT shipped: training-mode BatchNorm's batch-mean subtraction
      cancels them exactly (NOT valid for eval/running-stats BN).
    * Remaining small vectors packed into one (1, 3968) fp32 array, 128-aligned segments.
    """
    w1 = p["w1"].astype(jnp.bfloat16)
    w2 = p["w2"].astype(jnp.bfloat16)
    w3 = p["w3"].astype(jnp.bfloat16)
    w4c = p["w4"].astype(jnp.bfloat16).reshape(HIDDEN[2], N_CHUNKS, CHUNK).transpose(1, 0, 2)
    w5c = p["w5"].astype(jnp.bfloat16).reshape(N_CHUNKS, CHUNK, IMG_FLAT)
    vec = jnp.concatenate([
        p["b1"], p["g2"], p["be2"], p["g3"], p["be3"], p["g4"], p["be4"], p["b5"],
    ]).reshape(1, _VEC_TOTAL)
    return w1, w2, w3, w4c, w5c, vec


def generator_forward(z, params):
    b = z.shape[0]
    w1, w2, w3, w4c, w5c, vec = pack_params(params)
    vmem = pl.BlockSpec(memory_space=pltpu.MemorySpace.VMEM)
    hbm = pl.BlockSpec(memory_space=pl.ANY)  # streamed manually inside the kernel
    out_flat = pl.pallas_call(
        generator_kernel,
        out_shape=jax.ShapeDtypeStruct((b, IMG_FLAT), jnp.float32),
        in_specs=[vmem, vmem, vmem, hbm, hbm, hbm, hbm],
        out_specs=vmem,
        scratch_shapes=[
            pltpu.VMEM((HIDDEN[0], HIDDEN[1]), jnp.bfloat16),          # W2 landing (128,256)
            pltpu.VMEM((HIDDEN[1], HIDDEN[2]), jnp.bfloat16),          # W3 landing (256,512)
            pltpu.VMEM((N_CHUNKS, HIDDEN[2], CHUNK), jnp.bfloat16),    # W4 chunks (4,512,256)
            pltpu.VMEM((N_CHUNKS, CHUNK, IMG_FLAT), jnp.bfloat16),     # W5 chunks (4,256,256)
            pltpu.SemaphoreType.DMA((2,)),                             # W2 / W3
            pltpu.SemaphoreType.DMA((2, N_CHUNKS)),                    # W4 / W5 chunks
        ],
        compiler_params=pltpu.CompilerParams(vmem_limit_bytes=16 << 20),
    )(z, w1, vec, w2, w3, w4c, w5c)
    # img = img.view(img.size(0), *img_shape)  ->  NCHW
    return out_flat.reshape(b, *IMG_SHAPE)


def generator_reference(z, p):
    """Pure-JAX fp32 reference with the exact PyTorch forward (incl. pre-BN biases)."""
    h = _leaky_relu(z @ p["w1"] + p["b1"])
    for i in (2, 3, 4):
        h = h @ p[f"w{i}"] + p[f"b{i}"]
        h = _leaky_relu(_bn_train_ref(h, p[f"g{i}"], p[f"be{i}"]))
    h = h @ p["w5"] + p["b5"]
    return jnp.tanh(h).reshape(z.shape[0], *IMG_SHAPE)


if __name__ == "__main__":
    key = jax.random.PRNGKey(0)
    key_z, key_p = jax.random.split(key)
    z = jax.random.normal(key_z, (BATCH, LATENT_DIM), jnp.float32)
    params = init_params(key_p)

    img = generator_forward(z, params)
    jax.block_until_ready(img)

    assert img.shape == (BATCH, CHANNELS, IMG_SIZE, IMG_SIZE), img.shape
    assert img.dtype == jnp.float32

    # Tolerance check vs. full-precision PyTorch-semantics reference (bf16 weights in the
    # kernel => not bit-exact; fp32 accumulation keeps the error small).
    ref = generator_reference(z, params)
    max_err = float(jnp.max(jnp.abs(img - ref)))
    assert max_err < 0.08, f"max abs err vs fp32 reference: {max_err}"

    print("KERNEL_OK")
</pallas_src>

<mosaic_0001>
module attributes {stable_mosaic.version = 11 : i64} {
  func.func @generator_kernel(%arg0: memref<8x32xf32, #tpu.memory_space<vmem>>, %arg1: memref<32x128xbf16, #tpu.memory_space<vmem>>, %arg2: memref<1x3968xf32, #tpu.memory_space<vmem>>, %arg3: memref<128x256xbf16, #tpu.memory_space<any>>, %arg4: memref<256x512xbf16, #tpu.memory_space<any>>, %arg5: memref<4x512x256xbf16, #tpu.memory_space<any>>, %arg6: memref<4x256x256xbf16, #tpu.memory_space<any>>, %arg7: memref<8x256xf32, #tpu.memory_space<vmem>>, %arg8: memref<128x256xbf16, #tpu.memory_space<vmem>>, %arg9: memref<256x512xbf16, #tpu.memory_space<vmem>>, %arg10: memref<4x512x256xbf16, #tpu.memory_space<vmem>>, %arg11: memref<4x256x256xbf16, #tpu.memory_space<vmem>>, %arg12: memref<2x!tpu.dma_semaphore, #tpu.memory_space<semaphore_mem>>, %arg13: memref<2x4x!tpu.dma_semaphore, #tpu.memory_space<semaphore_mem>>) attributes {dimension_semantics = [], scalar_prefetch = 0 : i64, scratch_operands = 6 : i64, tpu.core_type = #tpu.core_type<tc>} {
    %c0_i32 = arith.constant 0 : i32
    %0 = tpu.memref_slice %arg12[%c0_i32] : memref<2x!tpu.dma_semaphore, #tpu.memory_space<semaphore_mem>> -> memref<1x!tpu.dma_semaphore, #tpu.memory_space<semaphore_mem>>
    %1 = tpu.memref_squeeze %0 : memref<1x!tpu.dma_semaphore, #tpu.memory_space<semaphore_mem>> -> memref<!tpu.dma_semaphore, #tpu.memory_space<semaphore_mem>>
    tpu.enqueue_dma source(%arg3 : memref<128x256xbf16, #tpu.memory_space<any>>) target(%arg8 : memref<128x256xbf16, #tpu.memory_space<vmem>>) target_semaphore(%1 : memref<!tpu.dma_semaphore, #tpu.memory_space<semaphore_mem>>)
    %c1_i32 = arith.constant 1 : i32
    %2 = tpu.memref_slice %arg12[%c1_i32] : memref<2x!tpu.dma_semaphore, #tpu.memory_space<semaphore_mem>> -> memref<1x!tpu.dma_semaphore, #tpu.memory_space<semaphore_mem>>
    %3 = tpu.memref_squeeze %2 : memref<1x!tpu.dma_semaphore, #tpu.memory_space<semaphore_mem>> -> memref<!tpu.dma_semaphore, #tpu.memory_space<semaphore_mem>>
    tpu.enqueue_dma source(%arg4 : memref<256x512xbf16, #tpu.memory_space<any>>) target(%arg9 : memref<256x512xbf16, #tpu.memory_space<vmem>>) target_semaphore(%3 : memref<!tpu.dma_semaphore, #tpu.memory_space<semaphore_mem>>)
    %c0_i32_0 = arith.constant 0 : i32
    %c0_i32_1 = arith.constant 0 : i32
    %c0_i32_2 = arith.constant 0 : i32
    %c0_i32_3 = arith.constant 0 : i32
    %c0_i32_4 = arith.constant 0 : i32
    %c0_i32_5 = arith.constant 0 : i32
    %4 = tpu.memref_slice %arg5[%c0_i32_0, %c0_i32_4, %c0_i32_5] : memref<4x512x256xbf16, #tpu.memory_space<any>> -> memref<1x512x256xbf16, #tpu.memory_space<any>>
    %5 = tpu.memref_squeeze %4 : memref<1x512x256xbf16, #tpu.memory_space<any>> -> memref<512x256xbf16, #tpu.memory_space<any>>
    %c0_i32_6 = arith.constant 0 : i32
    %c0_i32_7 = arith.constant 0 : i32
    %6 = tpu.memref_slice %arg10[%c0_i32_1, %c0_i32_6, %c0_i32_7] : memref<4x512x256xbf16, #tpu.memory_space<vmem>> -> memref<1x512x256xbf16, #tpu.memory_space<vmem>>
    %7 = tpu.memref_squeeze %6 : memref<1x512x256xbf16, #tpu.memory_space<vmem>> -> memref<512x256xbf16, #tpu.memory_space<vmem>>
    %8 = tpu.memref_slice %arg13[%c0_i32_2, %c0_i32_3] : memref<2x4x!tpu.dma_semaphore, #tpu.memory_space<semaphore_mem>> -> memref<1x1x!tpu.dma_semaphore, #tpu.memory_space<semaphore_mem>>
    %9 = tpu.memref_squeeze %8 : memref<1x1x!tpu.dma_semaphore, #tpu.memory_space<semaphore_mem>> -> memref<!tpu.dma_semaphore, #tpu.memory_space<semaphore_mem>>
    tpu.enqueue_dma source(%5 : memref<512x256xbf16, #tpu.memory_space<any>>) target(%7 : memref<512x256xbf16, #tpu.memory_space<vmem>>) target_semaphore(%9 : memref<!tpu.dma_semaphore, #tpu.memory_space<semaphore_mem>>)
    %c0_i32_8 = arith.constant 0 : i32
    %c0_i32_9 = arith.constant 0 : i32
    %c1_i32_10 = arith.constant 1 : i32
    %c0_i32_11 = arith.constant 0 : i32
    %c0_i32_12 = arith.constant 0 : i32
    %c0_i32_13 = arith.constant 0 : i32
    %10 = tpu.memref_slice %arg6[%c0_i32_8, %c0_i32_12, %c0_i32_13] : memref<4x256x256xbf16, #tpu.memory_space<any>> -> memref<1x256x256xbf16, #tpu.memory_space<any>>
    %11 = tpu.memref_squeeze %10 : memref<1x256x256xbf16, #tpu.memory_space<any>> -> memref<256x256xbf16, #tpu.memory_space<any>>
    %c0_i32_14 = arith.constant 0 : i32
    %c0_i32_15 = arith.constant 0 : i32
    %12 = tpu.memref_slice %arg11[%c0_i32_9, %c0_i32_14, %c0_i32_15] : memref<4x256x256xbf16, #tpu.memory_space<vmem>> -> memref<1x256x256xbf16, #tpu.memory_space<vmem>>
    %13 = tpu.memref_squeeze %12 : memref<1x256x256xbf16, #tpu.memory_space<vmem>> -> memref<256x256xbf16, #tpu.memory_space<vmem>>
    %14 = tpu.memref_slice %arg13[%c1_i32_10, %c0_i32_11] : memref<2x4x!tpu.dma_semaphore, #tpu.memory_space<semaphore_mem>> -> memref<1x1x!tpu.dma_semaphore, #tpu.memory_space<semaphore_mem>>
    %15 = tpu.memref_squeeze %14 : memref<1x1x!tpu.dma_semaphore, #tpu.memory_space<semaphore_mem>> -> memref<!tpu.dma_semaphore, #tpu.memory_space<semaphore_mem>>
    tpu.enqueue_dma source(%11 : memref<256x256xbf16, #tpu.memory_space<any>>) target(%13 : memref<256x256xbf16, #tpu.memory_space<vmem>>) target_semaphore(%15 : memref<!tpu.dma_semaphore, #tpu.memory_space<semaphore_mem>>)
    %c1_i32_16 = arith.constant 1 : i32
    %c1_i32_17 = arith.constant 1 : i32
    %c0_i32_18 = arith.constant 0 : i32
    %c1_i32_19 = arith.constant 1 : i32
    %c0_i32_20 = arith.constant 0 : i32
    %c0_i32_21 = arith.constant 0 : i32
    %16 = tpu.memref_slice %arg5[%c1_i32_16, %c0_i32_20, %c0_i32_21] : memref<4x512x256xbf16, #tpu.memory_space<any>> -> memref<1x512x256xbf16, #tpu.memory_space<any>>
    %17 = tpu.memref_squeeze %16 : memref<1x512x256xbf16, #tpu.memory_space<any>> -> memref<512x256xbf16, #tpu.memory_space<any>>
    %c0_i32_22 = arith.constant 0 : i32
    %c0_i32_23 = arith.constant 0 : i32
    %18 = tpu.memref_slice %arg10[%c1_i32_17, %c0_i32_22, %c0_i32_23] : memref<4x512x256xbf16, #tpu.memory_space<vmem>> -> memref<1x512x256xbf16, #tpu.memory_space<vmem>>
    %19 = tpu.memref_squeeze %18 : memref<1x512x256xbf16, #tpu.memory_space<vmem>> -> memref<512x256xbf16, #tpu.memory_space<vmem>>
    %20 = tpu.memref_slice %arg13[%c0_i32_18, %c1_i32_19] : memref<2x4x!tpu.dma_semaphore, #tpu.memory_space<semaphore_mem>> -> memref<1x1x!tpu.dma_semaphore, #tpu.memory_space<semaphore_mem>>
    %21 = tpu.memref_squeeze %20 : memref<1x1x!tpu.dma_semaphore, #tpu.memory_space<semaphore_mem>> -> memref<!tpu.dma_semaphore, #tpu.memory_space<semaphore_mem>>
    tpu.enqueue_dma source(%17 : memref<512x256xbf16, #tpu.memory_space<any>>) target(%19 : memref<512x256xbf16, #tpu.memory_space<vmem>>) target_semaphore(%21 : memref<!tpu.dma_semaphore, #tpu.memory_space<semaphore_mem>>)
    %c1_i32_24 = arith.constant 1 : i32
    %c1_i32_25 = arith.constant 1 : i32
    %c1_i32_26 = arith.constant 1 : i32
    %c1_i32_27 = arith.constant 1 : i32
    %c0_i32_28 = arith.constant 0 : i32
    %c0_i32_29 = arith.constant 0 : i32
    %22 = tpu.memref_slice %arg6[%c1_i32_24, %c0_i32_28, %c0_i32_29] : memref<4x256x256xbf16, #tpu.memory_space<any>> -> memref<1x256x256xbf16, #tpu.memory_space<any>>
    %23 = tpu.memref_squeeze %22 : memref<1x256x256xbf16, #tpu.memory_space<any>> -> memref<256x256xbf16, #tpu.memory_space<any>>
    %c0_i32_30 = arith.constant 0 : i32
    %c0_i32_31 = arith.constant 0 : i32
    %24 = tpu.memref_slice %arg11[%c1_i32_25, %c0_i32_30, %c0_i32_31] : memref<4x256x256xbf16, #tpu.memory_space<vmem>> -> memref<1x256x256xbf16, #tpu.memory_space<vmem>>
    %25 = tpu.memref_squeeze %24 : memref<1x256x256xbf16, #tpu.memory_space<vmem>> -> memref<256x256xbf16, #tpu.memory_space<vmem>>
    %26 = tpu.memref_slice %arg13[%c1_i32_26, %c1_i32_27] : memref<2x4x!tpu.dma_semaphore, #tpu.memory_space<semaphore_mem>> -> memref<1x1x!tpu.dma_semaphore, #tpu.memory_space<semaphore_mem>>
    %27 = tpu.memref_squeeze %26 : memref<1x1x!tpu.dma_semaphore, #tpu.memory_space<semaphore_mem>> -> memref<!tpu.dma_semaphore, #tpu.memory_space<semaphore_mem>>
    tpu.enqueue_dma source(%23 : memref<256x256xbf16, #tpu.memory_space<any>>) target(%25 : memref<256x256xbf16, #tpu.memory_space<vmem>>) target_semaphore(%27 : memref<!tpu.dma_semaphore, #tpu.memory_space<semaphore_mem>>)
    %c2_i32 = arith.constant 2 : i32
    %c2_i32_32 = arith.constant 2 : i32
    %c0_i32_33 = arith.constant 0 : i32
    %c2_i32_34 = arith.constant 2 : i32
    %c0_i32_35 = arith.constant 0 : i32
    %c0_i32_36 = arith.constant 0 : i32
    %28 = tpu.memref_slice %arg5[%c2_i32, %c0_i32_35, %c0_i32_36] : memref<4x512x256xbf16, #tpu.memory_space<any>> -> memref<1x512x256xbf16, #tpu.memory_space<any>>
    %29 = tpu.memref_squeeze %28 : memref<1x512x256xbf16, #tpu.memory_space<any>> -> memref<512x256xbf16, #tpu.memory_space<any>>
    %c0_i32_37 = arith.constant 0 : i32
    %c0_i32_38 = arith.constant 0 : i32
    %30 = tpu.memref_slice %arg10[%c2_i32_32, %c0_i32_37, %c0_i32_38] : memref<4x512x256xbf16, #tpu.memory_space<vmem>> -> memref<1x512x256xbf16, #tpu.memory_space<vmem>>
    %31 = tpu.memref_squeeze %30 : memref<1x512x256xbf16, #tpu.memory_space<vmem>> -> memref<512x256xbf16, #tpu.memory_space<vmem>>
    %32 = tpu.memref_slice %arg13[%c0_i32_33, %c2_i32_34] : memref<2x4x!tpu.dma_semaphore, #tpu.memory_space<semaphore_mem>> -> memref<1x1x!tpu.dma_semaphore, #tpu.memory_space<semaphore_mem>>
    %33 = tpu.memref_squeeze %32 : memref<1x1x!tpu.dma_semaphore, #tpu.memory_space<semaphore_mem>> -> memref<!tpu.dma_semaphore, #tpu.memory_space<semaphore_mem>>
    tpu.enqueue_dma source(%29 : memref<512x256xbf16, #tpu.memory_space<any>>) target(%31 : memref<512x256xbf16, #tpu.memory_space<vmem>>) target_semaphore(%33 : memref<!tpu.dma_semaphore, #tpu.memory_space<semaphore_mem>>)
    %c2_i32_39 = arith.constant 2 : i32
    %c2_i32_40 = arith.constant 2 : i32
    %c1_i32_41 = arith.constant 1 : i32
    %c2_i32_42 = arith.constant 2 : i32
    %c0_i32_43 = arith.constant 0 : i32
    %c0_i32_44 = arith.constant 0 : i32
    %34 = tpu.memref_slice %arg6[%c2_i32_39, %c0_i32_43, %c0_i32_44] : memref<4x256x256xbf16, #tpu.memory_space<any>> -> memref<1x256x256xbf16, #tpu.memory_space<any>>
    %35 = tpu.memref_squeeze %34 : memref<1x256x256xbf16, #tpu.memory_space<any>> -> memref<256x256xbf16, #tpu.memory_space<any>>
    %c0_i32_45 = arith.constant 0 : i32
    %c0_i32_46 = arith.constant 0 : i32
    %36 = tpu.memref_slice %arg11[%c2_i32_40, %c0_i32_45, %c0_i32_46] : memref<4x256x256xbf16, #tpu.memory_space<vmem>> -> memref<1x256x256xbf16, #tpu.memory_space<vmem>>
    %37 = tpu.memref_squeeze %36 : memref<1x256x256xbf16, #tpu.memory_space<vmem>> -> memref<256x256xbf16, #tpu.memory_space<vmem>>
    %38 = tpu.memref_slice %arg13[%c1_i32_41, %c2_i32_42] : memref<2x4x!tpu.dma_semaphore, #tpu.memory_space<semaphore_mem>> -> memref<1x1x!tpu.dma_semaphore, #tpu.memory_space<semaphore_mem>>
    %39 = tpu.memref_squeeze %38 : memref<1x1x!tpu.dma_semaphore, #tpu.memory_space<semaphore_mem>> -> memref<!tpu.dma_semaphore, #tpu.memory_space<semaphore_mem>>
    tpu.enqueue_dma source(%35 : memref<256x256xbf16, #tpu.memory_space<any>>) target(%37 : memref<256x256xbf16, #tpu.memory_space<vmem>>) target_semaphore(%39 : memref<!tpu.dma_semaphore, #tpu.memory_space<semaphore_mem>>)
    %c3_i32 = arith.constant 3 : i32
    %c3_i32_47 = arith.constant 3 : i32
    %c0_i32_48 = arith.constant 0 : i32
    %c3_i32_49 = arith.constant 3 : i32
    %c0_i32_50 = arith.constant 0 : i32
    %c0_i32_51 = arith.constant 0 : i32
    %40 = tpu.memref_slice %arg5[%c3_i32, %c0_i32_50, %c0_i32_51] : memref<4x512x256xbf16, #tpu.memory_space<any>> -> memref<1x512x256xbf16, #tpu.memory_space<any>>
    %41 = tpu.memref_squeeze %40 : memref<1x512x256xbf16, #tpu.memory_space<any>> -> memref<512x256xbf16, #tpu.memory_space<any>>
    %c0_i32_52 = arith.constant 0 : i32
    %c0_i32_53 = arith.constant 0 : i32
    %42 = tpu.memref_slice %arg10[%c3_i32_47, %c0_i32_52, %c0_i32_53] : memref<4x512x256xbf16, #tpu.memory_space<vmem>> -> memref<1x512x256xbf16, #tpu.memory_space<vmem>>
    %43 = tpu.memref_squeeze %42 : memref<1x512x256xbf16, #tpu.memory_space<vmem>> -> memref<512x256xbf16, #tpu.memory_space<vmem>>
    %44 = tpu.memref_slice %arg13[%c0_i32_48, %c3_i32_49] : memref<2x4x!tpu.dma_semaphore, #tpu.memory_space<semaphore_mem>> -> memref<1x1x!tpu.dma_semaphore, #tpu.memory_space<semaphore_mem>>
    %45 = tpu.memref_squeeze %44 : memref<1x1x!tpu.dma_semaphore, #tpu.memory_space<semaphore_mem>> -> memref<!tpu.dma_semaphore, #tpu.memory_space<semaphore_mem>>
    tpu.enqueue_dma source(%41 : memref<512x256xbf16, #tpu.memory_space<any>>) target(%43 : memref<512x256xbf16, #tpu.memory_space<vmem>>) target_semaphore(%45 : memref<!tpu.dma_semaphore, #tpu.memory_space<semaphore_mem>>)
    %c3_i32_54 = arith.constant 3 : i32
    %c3_i32_55 = arith.constant 3 : i32
    %c1_i32_56 = arith.constant 1 : i32
    %c3_i32_57 = arith.constant 3 : i32
    %c0_i32_58 = arith.constant 0 : i32
    %c0_i32_59 = arith.constant 0 : i32
    %46 = tpu.memref_slice %arg6[%c3_i32_54, %c0_i32_58, %c0_i32_59] : memref<4x256x256xbf16, #tpu.memory_space<any>> -> memref<1x256x256xbf16, #tpu.memory_space<any>>
    %47 = tpu.memref_squeeze %46 : memref<1x256x256xbf16, #tpu.memory_space<any>> -> memref<256x256xbf16, #tpu.memory_space<any>>
    %c0_i32_60 = arith.constant 0 : i32
    %c0_i32_61 = arith.constant 0 : i32
    %48 = tpu.memref_slice %arg11[%c3_i32_55, %c0_i32_60, %c0_i32_61] : memref<4x256x256xbf16, #tpu.memory_space<vmem>> -> memref<1x256x256xbf16, #tpu.memory_space<vmem>>
    %49 = tpu.memref_squeeze %48 : memref<1x256x256xbf16, #tpu.memory_space<vmem>> -> memref<256x256xbf16, #tpu.memory_space<vmem>>
    %50 = tpu.memref_slice %arg13[%c1_i32_56, %c3_i32_57] : memref<2x4x!tpu.dma_semaphore, #tpu.memory_space<semaphore_mem>> -> memref<1x1x!tpu.dma_semaphore, #tpu.memory_space<semaphore_mem>>
    %51 = tpu.memref_squeeze %50 : memref<1x1x!tpu.dma_semaphore, #tpu.memory_space<semaphore_mem>> -> memref<!tpu.dma_semaphore, #tpu.memory_space<semaphore_mem>>
    tpu.enqueue_dma source(%47 : memref<256x256xbf16, #tpu.memory_space<any>>) target(%49 : memref<256x256xbf16, #tpu.memory_space<vmem>>) target_semaphore(%51 : memref<!tpu.dma_semaphore, #tpu.memory_space<semaphore_mem>>)
    %c0 = arith.constant 0 : index
    %c0_62 = arith.constant 0 : index
    %52 = vector.load %arg0[%c0, %c0_62] : memref<8x32xf32, #tpu.memory_space<vmem>>, vector<8x32xf32>
    %53 = arith.truncf %52 : vector<8x32xf32> to vector<8x32xbf16>
    %c0_63 = arith.constant 0 : index
    %c0_64 = arith.constant 0 : index
    %54 = vector.load %arg1[%c0_63, %c0_64] : memref<32x128xbf16, #tpu.memory_space<vmem>>, vector<32x128xbf16>
    %cst = arith.constant dense<0.000000e+00> : vector<8x128xf32>
    %55 = tpu.matmul %53, %54, %cst {dimension_numbers = #tpu.dot_dimension_numbers<[1], [0], [0], [1], [0, 0, 1, 1], [], []>} : vector<8x32xbf16>, vector<32x128xbf16>, vector<8x128xf32> -> vector<8x128xf32>
    %c0_65 = arith.constant 0 : index
    %c0_66 = arith.constant 0 : index
    %56 = vector.load %arg2[%c0_65, %c0_66] : memref<1x3968xf32, #tpu.memory_space<vmem>>, vector<1x128xf32>
    %57 = vector.broadcast %56 : vector<1x128xf32> to vector<8x128xf32>
    %58 = arith.addf %55, %57 : vector<8x128xf32>
    %cst_67 = arith.constant 2.000000e-01 : f32
    %59 = vector.broadcast %cst_67 : f32 to vector<8x128xf32>
    %60 = arith.mulf %59, %58 : vector<8x128xf32>
    %61 = arith.maximumf %58, %60 : vector<8x128xf32>
    %c0_i32_68 = arith.constant 0 : i32
    %62 = tpu.memref_slice %arg12[%c0_i32_68] : memref<2x!tpu.dma_semaphore, #tpu.memory_space<semaphore_mem>> -> memref<1x!tpu.dma_semaphore, #tpu.memory_space<semaphore_mem>>
    %63 = tpu.memref_squeeze %62 : memref<1x!tpu.dma_semaphore, #tpu.memory_space<semaphore_mem>> -> memref<!tpu.dma_semaphore, #tpu.memory_space<semaphore_mem>>
    tpu.wait_dma2 semaphore(%63 : memref<!tpu.dma_semaphore, #tpu.memory_space<semaphore_mem>>) src(%arg3 : memref<128x256xbf16, #tpu.memory_space<any>>) dst(%arg8 : memref<128x256xbf16, #tpu.memory_space<vmem>>)
    %64 = arith.truncf %61 : vector<8x128xf32> to vector<8x128xbf16>
    %c0_69 = arith.constant 0 : index
    %c0_70 = arith.constant 0 : index
    %65 = vector.load %arg8[%c0_69, %c0_70] : memref<128x256xbf16, #tpu.memory_space<vmem>>, vector<128x256xbf16>
    %cst_71 = arith.constant dense<0.000000e+00> : vector<8x256xf32>
    %66 = tpu.matmul %64, %65, %cst_71 {dimension_numbers = #tpu.dot_dimension_numbers<[1], [0], [0], [1], [0, 0, 1, 1], [], []>} : vector<8x128xbf16>, vector<128x256xbf16>, vector<8x256xf32> -> vector<8x256xf32>
    %c0_72 = arith.constant 0 : index
    %c128 = arith.constant 128 : index
    %67 = vector.load %arg2[%c0_72, %c128] : memref<1x3968xf32, #tpu.memory_space<vmem>>, vector<1x256xf32>
    %c0_73 = arith.constant 0 : index
    %c384 = arith.constant 384 : index
    %68 = vector.load %arg2[%c0_73, %c384] : memref<1x3968xf32, #tpu.memory_space<vmem>>, vector<1x256xf32>
    %cst_74 = arith.constant dense<0.000000e+00> : vector<256xf32>
    %69 = vector.multi_reduction <add>, %66, %cst_74 [0] : vector<8x256xf32> to vector<256xf32>
    %70 = vector.shape_cast %69 : vector<256xf32> to vector<1x256xf32>
    %71 = arith.mulf %66, %66 : vector<8x256xf32>
    %cst_75 = arith.constant dense<0.000000e+00> : vector<256xf32>
    %72 = vector.multi_reduction <add>, %71, %cst_75 [0] : vector<8x256xf32> to vector<256xf32>
    %73 = vector.shape_cast %72 : vector<256xf32> to vector<1x256xf32>
    %cst_76 = arith.constant 1.250000e-01 : f32
    %74 = vector.broadcast %cst_76 : f32 to vector<1x256xf32>
    %75 = arith.mulf %70, %74 : vector<1x256xf32>
    %cst_77 = arith.constant 1.250000e-01 : f32
    %76 = vector.broadcast %cst_77 : f32 to vector<1x256xf32>
    %77 = arith.mulf %73, %76 : vector<1x256xf32>
    %78 = arith.mulf %75, %75 : vector<1x256xf32>
    %79 = arith.subf %77, %78 : vector<1x256xf32>
    %80 = vector.broadcast %75 : vector<1x256xf32> to vector<8x256xf32>
    %81 = arith.subf %66, %80 : vector<8x256xf32>
    %cst_78 = arith.constant 8.000000e-01 : f32
    %82 = vector.broadcast %cst_78 : f32 to vector<1x256xf32>
    %83 = arith.addf %79, %82 : vector<1x256xf32>
    %84 = math.rsqrt %83 : vector<1x256xf32>
    %85 = vector.broadcast %84 : vector<1x256xf32> to vector<8x256xf32>
    %86 = arith.mulf %81, %85 : vector<8x256xf32>
    %87 = vector.broadcast %67 : vector<1x256xf32> to vector<8x256xf32>
    %88 = arith.mulf %86, %87 : vector<8x256xf32>
    %89 = vector.broadcast %68 : vector<1x256xf32> to vector<8x256xf32>
    %90 = arith.addf %88, %89 : vector<8x256xf32>
    %cst_79 = arith.constant 2.000000e-01 : f32
    %91 = vector.broadcast %cst_79 : f32 to vector<8x256xf32>
    %92 = arith.mulf %91, %90 : vector<8x256xf32>
    %93 = arith.maximumf %90, %92 : vector<8x256xf32>
    %c1_i32_80 = arith.constant 1 : i32
    %94 = tpu.memref_slice %arg12[%c1_i32_80] : memref<2x!tpu.dma_semaphore, #tpu.memory_space<semaphore_mem>> -> memref<1x!tpu.dma_semaphore, #tpu.memory_space<semaphore_mem>>
    %95 = tpu.memref_squeeze %94 : memref<1x!tpu.dma_semaphore, #tpu.memory_space<semaphore_mem>> -> memref<!tpu.dma_semaphore, #tpu.memory_space<semaphore_mem>>
    tpu.wait_dma2 semaphore(%95 : memref<!tpu.dma_semaphore, #tpu.memory_space<semaphore_mem>>) src(%arg4 : memref<256x512xbf16, #tpu.memory_space<any>>) dst(%arg9 : memref<256x512xbf16, #tpu.memory_space<vmem>>)
    %96 = arith.truncf %93 : vector<8x256xf32> to vector<8x256xbf16>
    %c0_81 = arith.constant 0 : index
    %c0_82 = arith.constant 0 : index
    %97 = vector.load %arg9[%c0_81, %c0_82] : memref<256x512xbf16, #tpu.memory_space<vmem>>, vector<256x512xbf16>
    %cst_83 = arith.constant dense<0.000000e+00> : vector<8x512xf32>
    %98 = tpu.matmul %96, %97, %cst_83 {dimension_numbers = #tpu.dot_dimension_numbers<[1], [0], [0], [1], [0, 0, 1, 1], [], []>} : vector<8x256xbf16>, vector<256x512xbf16>, vector<8x512xf32> -> vector<8x512xf32>
    %c0_84 = arith.constant 0 : index
    %c640 = arith.constant 640 : index
    %99 = vector.load %arg2[%c0_84, %c640] : memref<1x3968xf32, #tpu.memory_space<vmem>>, vector<1x512xf32>
    %c0_85 = arith.constant 0 : index
    %c1152 = arith.constant 1152 : index
    %100 = vector.load %arg2[%c0_85, %c1152] : memref<1x3968xf32, #tpu.memory_space<vmem>>, vector<1x512xf32>
    %cst_86 = arith.constant dense<0.000000e+00> : vector<512xf32>
    %101 = vector.multi_reduction <add>, %98, %cst_86 [0] : vector<8x512xf32> to vector<512xf32>
    %102 = vector.shape_cast %101 : vector<512xf32> to vector<1x512xf32>
    %103 = arith.mulf %98, %98 : vector<8x512xf32>
    %cst_87 = arith.constant dense<0.000000e+00> : vector<512xf32>
    %104 = vector.multi_reduction <add>, %103, %cst_87 [0] : vector<8x512xf32> to vector<512xf32>
    %105 = vector.shape_cast %104 : vector<512xf32> to vector<1x512xf32>
    %cst_88 = arith.constant 1.250000e-01 : f32
    %106 = vector.broadcast %cst_88 : f32 to vector<1x512xf32>
    %107 = arith.mulf %102, %106 : vector<1x512xf32>
    %cst_89 = arith.constant 1.250000e-01 : f32
    %108 = vector.broadcast %cst_89 : f32 to vector<1x512xf32>
    %109 = arith.mulf %105, %108 : vector<1x512xf32>
    %110 = arith.mulf %107, %107 : vector<1x512xf32>
    %111 = arith.subf %109, %110 : vector<1x512xf32>
    %112 = vector.broadcast %107 : vector<1x512xf32> to vector<8x512xf32>
    %113 = arith.subf %98, %112 : vector<8x512xf32>
    %cst_90 = arith.constant 8.000000e-01 : f32
    %114 = vector.broadcast %cst_90 : f32 to vector<1x512xf32>
    %115 = arith.addf %111, %114 : vector<1x512xf32>
    %116 = math.rsqrt %115 : vector<1x512xf32>
    %117 = vector.broadcast %116 : vector<1x512xf32> to vector<8x512xf32>
    %118 = arith.mulf %113, %117 : vector<8x512xf32>
    %119 = vector.broadcast %99 : vector<1x512xf32> to vector<8x512xf32>
    %120 = arith.mulf %118, %119 : vector<8x512xf32>
    %121 = vector.broadcast %100 : vector<1x512xf32> to vector<8x512xf32>
    %122 = arith.addf %120, %121 : vector<8x512xf32>
    %cst_91 = arith.constant 2.000000e-01 : f32
    %123 = vector.broadcast %cst_91 : f32 to vector<8x512xf32>
    %124 = arith.mulf %123, %122 : vector<8x512xf32>
    %125 = arith.maximumf %122, %124 : vector<8x512xf32>
    %126 = arith.truncf %125 : vector<8x512xf32> to vector<8x512xbf16>
    %cst_92 = arith.constant 0.000000e+00 : f32
    %127 = vector.broadcast %cst_92 : f32 to vector<8x256xf32>
    %c0_i32_93 = arith.constant 0 : i32
    %c0_i32_94 = arith.constant 0 : i32
    %c0_i32_95 = arith.constant 0 : i32
    %c0_i32_96 = arith.constant 0 : i32
    %c0_i32_97 = arith.constant 0 : i32
    %c0_i32_98 = arith.constant 0 : i32
    %128 = tpu.memref_slice %arg5[%c0_i32_93, %c0_i32_97, %c0_i32_98] : memref<4x512x256xbf16, #tpu.memory_space<any>> -> memref<1x512x256xbf16, #tpu.memory_space<any>>
    %129 = tpu.memref_squeeze %128 : memref<1x512x256xbf16, #tpu.memory_space<any>> -> memref<512x256xbf16, #tpu.memory_space<any>>
    %c0_i32_99 = arith.constant 0 : i32
    %c0_i32_100 = arith.constant 0 : i32
    %130 = tpu.memref_slice %arg10[%c0_i32_94, %c0_i32_99, %c0_i32_100] : memref<4x512x256xbf16, #tpu.memory_space<vmem>> -> memref<1x512x256xbf16, #tpu.memory_space<vmem>>
    %131 = tpu.memref_squeeze %130 : memref<1x512x256xbf16, #tpu.memory_space<vmem>> -> memref<512x256xbf16, #tpu.memory_space<vmem>>
    %132 = tpu.memref_slice %arg13[%c0_i32_95, %c0_i32_96] : memref<2x4x!tpu.dma_semaphore, #tpu.memory_space<semaphore_mem>> -> memref<1x1x!tpu.dma_semaphore, #tpu.memory_space<semaphore_mem>>
    %133 = tpu.memref_squeeze %132 : memref<1x1x!tpu.dma_semaphore, #tpu.memory_space<semaphore_mem>> -> memref<!tpu.dma_semaphore, #tpu.memory_space<semaphore_mem>>
    tpu.wait_dma2 semaphore(%133 : memref<!tpu.dma_semaphore, #tpu.memory_space<semaphore_mem>>) src(%129 : memref<512x256xbf16, #tpu.memory_space<any>>) dst(%131 : memref<512x256xbf16, #tpu.memory_space<vmem>>)
    %c0_101 = arith.constant 0 : index
    %c0_102 = arith.constant 0 : index
    %c0_103 = arith.constant 0 : index
    %134 = vector.load %arg10[%c0_101, %c0_102, %c0_103] : memref<4x512x256xbf16, #tpu.memory_space<vmem>>, vector<1x512x256xbf16>
    %135 = vector.shape_cast %134 : vector<1x512x256xbf16> to vector<512x256xbf16>
    %cst_104 = arith.constant dense<0.000000e+00> : vector<8x256xf32>
    %136 = tpu.matmul %126, %135, %cst_104 {dimension_numbers = #tpu.dot_dimension_numbers<[1], [0], [0], [1], [0, 0, 1, 1], [], []>} : vector<8x512xbf16>, vector<512x256xbf16>, vector<8x256xf32> -> vector<8x256xf32>
    %c0_105 = arith.constant 0 : index
    %c1664 = arith.constant 1664 : index
    %137 = vector.load %arg2[%c0_105, %c1664] : memref<1x3968xf32, #tpu.memory_space<vmem>>, vector<1x256xf32>
    %c0_106 = arith.constant 0 : index
    %c2688 = arith.constant 2688 : index
    %138 = vector.load %arg2[%c0_106, %c2688] : memref<1x3968xf32, #tpu.memory_space<vmem>>, vector<1x256xf32>
    %cst_107 = arith.constant dense<0.000000e+00> : vector<256xf32>
    %139 = vector.multi_reduction <add>, %136, %cst_107 [0] : vector<8x256xf32> to vector<256xf32>
    %140 = vector.shape_cast %139 : vector<256xf32> to vector<1x256xf32>
    %141 = arith.mulf %136, %136 : vector<8x256xf32>
    %cst_108 = arith.constant dense<0.000000e+00> : vector<256xf32>
    %142 = vector.multi_reduction <add>, %141, %cst_108 [0] : vector<8x256xf32> to vector<256xf32>
    %143 = vector.shape_cast %142 : vector<256xf32> to vector<1x256xf32>
    %cst_109 = arith.constant 1.250000e-01 : f32
    %144 = vector.broadcast %cst_109 : f32 to vector<1x256xf32>
    %145 = arith.mulf %140, %144 : vector<1x256xf32>
    %cst_110 = arith.constant 1.250000e-01 : f32
    %146 = vector.broadcast %cst_110 : f32 to vector<1x256xf32>
    %147 = arith.mulf %143, %146 : vector<1x256xf32>
    %148 = arith.mulf %145, %145 : vector<1x256xf32>
    %149 = arith.subf %147, %148 : vector<1x256xf32>
    %150 = vector.broadcast %145 : vector<1x256xf32> to vector<8x256xf32>
    %151 = arith.subf %136, %150 : vector<8x256xf32>
    %cst_111 = arith.constant 8.000000e-01 : f32
    %152 = vector.broadcast %cst_111 : f32 to vector<1x256xf32>
    %153 = arith.addf %149, %152 : vector<1x256xf32>
    %154 = math.rsqrt %153 : vector<1x256xf32>
    %155 = vector.broadcast %154 : vector<1x256xf32> to vector<8x256xf32>
    %156 = arith.mulf %151, %155 : vector<8x256xf32>
    %157 = vector.broadcast %137 : vector<1x256xf32> to vector<8x256xf32>
    %158 = arith.mulf %156, %157 : vector<8x256xf32>
    %159 = vector.broadcast %138 : vector<1x256xf32> to vector<8x256xf32>
    %160 = arith.addf %158, %159 : vector<8x256xf32>
    %cst_112 = arith.constant 2.000000e-01 : f32
    %161 = vector.broadcast %cst_112 : f32 to vector<8x256xf32>
    %162 = arith.mulf %161, %160 : vector<8x256xf32>
    %163 = arith.maximumf %160, %162 : vector<8x256xf32>
    %164 = arith.truncf %163 : vector<8x256xf32> to vector<8x256xbf16>
    %c0_i32_113 = arith.constant 0 : i32
    %c0_i32_114 = arith.constant 0 : i32
    %c1_i32_115 = arith.constant 1 : i32
    %c0_i32_116 = arith.constant 0 : i32
    %c0_i32_117 = arith.constant 0 : i32
    %c0_i32_118 = arith.constant 0 : i32
    %165 = tpu.memref_slice %arg6[%c0_i32_113, %c0_i32_117, %c0_i32_118] : memref<4x256x256xbf16, #tpu.memory_space<any>> -> memref<1x256x256xbf16, #tpu.memory_space<any>>
    %166 = tpu.memref_squeeze %165 : memref<1x256x256xbf16, #tpu.memory_space<any>> -> memref<256x256xbf16, #tpu.memory_space<any>>
    %c0_i32_119 = arith.constant 0 : i32
    %c0_i32_120 = arith.constant 0 : i32
    %167 = tpu.memref_slice %arg11[%c0_i32_114, %c0_i32_119, %c0_i32_120] : memref<4x256x256xbf16, #tpu.memory_space<vmem>> -> memref<1x256x256xbf16, #tpu.memory_space<vmem>>
    %168 = tpu.memref_squeeze %167 : memref<1x256x256xbf16, #tpu.memory_space<vmem>> -> memref<256x256xbf16, #tpu.memory_space<vmem>>
    %169 = tpu.memref_slice %arg13[%c1_i32_115, %c0_i32_116] : memref<2x4x!tpu.dma_semaphore, #tpu.memory_space<semaphore_mem>> -> memref<1x1x!tpu.dma_semaphore, #tpu.memory_space<semaphore_mem>>
    %170 = tpu.memref_squeeze %169 : memref<1x1x!tpu.dma_semaphore, #tpu.memory_space<semaphore_mem>> -> memref<!tpu.dma_semaphore, #tpu.memory_space<semaphore_mem>>
    tpu.wait_dma2 semaphore(%170 : memref<!tpu.dma_semaphore, #tpu.memory_space<semaphore_mem>>) src(%166 : memref<256x256xbf16, #tpu.memory_space<any>>) dst(%168 : memref<256x256xbf16, #tpu.memory_space<vmem>>)
    %c0_121 = arith.constant 0 : index
    %c0_122 = arith.constant 0 : index
    %c0_123 = arith.constant 0 : index
    %171 = vector.load %arg11[%c0_121, %c0_122, %c0_123] : memref<4x256x256xbf16, #tpu.memory_space<vmem>>, vector<1x256x256xbf16>
    %172 = vector.shape_cast %171 : vector<1x256x256xbf16> to vector<256x256xbf16>
    %cst_124 = arith.constant dense<0.000000e+00> : vector<8x256xf32>
    %173 = tpu.matmul %164, %172, %cst_124 {dimension_numbers = #tpu.dot_dimension_numbers<[1], [0], [0], [1], [0, 0, 1, 1], [], []>} : vector<8x256xbf16>, vector<256x256xbf16>, vector<8x256xf32> -> vector<8x256xf32>
    %174 = arith.addf %127, %173 : vector<8x256xf32>
    %c1_i32_125 = arith.constant 1 : i32
    %c1_i32_126 = arith.constant 1 : i32
    %c0_i32_127 = arith.constant 0 : i32
    %c1_i32_128 = arith.constant 1 : i32
    %c0_i32_129 = arith.constant 0 : i32
    %c0_i32_130 = arith.constant 0 : i32
    %175 = tpu.memref_slice %arg5[%c1_i32_125, %c0_i32_129, %c0_i32_130] : memref<4x512x256xbf16, #tpu.memory_space<any>> -> memref<1x512x256xbf16, #tpu.memory_space<any>>
    %176 = tpu.memref_squeeze %175 : memref<1x512x256xbf16, #tpu.memory_space<any>> -> memref<512x256xbf16, #tpu.memory_space<any>>
    %c0_i32_131 = arith.constant 0 : i32
    %c0_i32_132 = arith.constant 0 : i32
    %177 = tpu.memref_slice %arg10[%c1_i32_126, %c0_i32_131, %c0_i32_132] : memref<4x512x256xbf16, #tpu.memory_space<vmem>> -> memref<1x512x256xbf16, #tpu.memory_space<vmem>>
    %178 = tpu.memref_squeeze %177 : memref<1x512x256xbf16, #tpu.memory_space<vmem>> -> memref<512x256xbf16, #tpu.memory_space<vmem>>
    %179 = tpu.memref_slice %arg13[%c0_i32_127, %c1_i32_128] : memref<2x4x!tpu.dma_semaphore, #tpu.memory_space<semaphore_mem>> -> memref<1x1x!tpu.dma_semaphore, #tpu.memory_space<semaphore_mem>>
    %180 = tpu.memref_squeeze %179 : memref<1x1x!tpu.dma_semaphore, #tpu.memory_space<semaphore_mem>> -> memref<!tpu.dma_semaphore, #tpu.memory_space<semaphore_mem>>
    tpu.wait_dma2 semaphore(%180 : memref<!tpu.dma_semaphore, #tpu.memory_space<semaphore_mem>>) src(%176 : memref<512x256xbf16, #tpu.memory_space<any>>) dst(%178 : memref<512x256xbf16, #tpu.memory_space<vmem>>)
    %c1 = arith.constant 1 : index
    %c0_133 = arith.constant 0 : index
    %c0_134 = arith.constant 0 : index
    %181 = vector.load %arg10[%c1, %c0_133, %c0_134] : memref<4x512x256xbf16, #tpu.memory_space<vmem>>, vector<1x512x256xbf16>
    %182 = vector.shape_cast %181 : vector<1x512x256xbf16> to vector<512x256xbf16>
    %cst_135 = arith.constant dense<0.000000e+00> : vector<8x256xf32>
    %183 = tpu.matmul %126, %182, %cst_135 {dimension_numbers = #tpu.dot_dimension_numbers<[1], [0], [0], [1], [0, 0, 1, 1], [], []>} : vector<8x512xbf16>, vector<512x256xbf16>, vector<8x256xf32> -> vector<8x256xf32>
    %c0_136 = arith.constant 0 : index
    %c1920 = arith.constant 1920 : index
    %184 = vector.load %arg2[%c0_136, %c1920] : memref<1x3968xf32, #tpu.memory_space<vmem>>, vector<1x256xf32>
    %c0_137 = arith.constant 0 : index
    %c2944 = arith.constant 2944 : index
    %185 = vector.load %arg2[%c0_137, %c2944] : memref<1x3968xf32, #tpu.memory_space<vmem>>, vector<1x256xf32>
    %cst_138 = arith.constant dense<0.000000e+00> : vector<256xf32>
    %186 = vector.multi_reduction <add>, %183, %cst_138 [0] : vector<8x256xf32> to vector<256xf32>
    %187 = vector.shape_cast %186 : vector<256xf32> to vector<1x256xf32>
    %188 = arith.mulf %183, %183 : vector<8x256xf32>
    %cst_139 = arith.constant dense<0.000000e+00> : vector<256xf32>
    %189 = vector.multi_reduction <add>, %188, %cst_139 [0] : vector<8x256xf32> to vector<256xf32>
    %190 = vector.shape_cast %189 : vector<256xf32> to vector<1x256xf32>
    %cst_140 = arith.constant 1.250000e-01 : f32
    %191 = vector.broadcast %cst_140 : f32 to vector<1x256xf32>
    %192 = arith.mulf %187, %191 : vector<1x256xf32>
    %cst_141 = arith.constant 1.250000e-01 : f32
    %193 = vector.broadcast %cst_141 : f32 to vector<1x256xf32>
    %194 = arith.mulf %190, %193 : vector<1x256xf32>
    %195 = arith.mulf %192, %192 : vector<1x256xf32>
    %196 = arith.subf %194, %195 : vector<1x256xf32>
    %197 = vector.broadcast %192 : vector<1x256xf32> to vector<8x256xf32>
    %198 = arith.subf %183, %197 : vector<8x256xf32>
    %cst_142 = arith.constant 8.000000e-01 : f32
    %199 = vector.broadcast %cst_142 : f32 to vector<1x256xf32>
    %200 = arith.addf %196, %199 : vector<1x256xf32>
    %201 = math.rsqrt %200 : vector<1x256xf32>
    %202 = vector.broadcast %201 : vector<1x256xf32> to vector<8x256xf32>
    %203 = arith.mulf %198, %202 : vector<8x256xf32>
    %204 = vector.broadcast %184 : vector<1x256xf32> to vector<8x256xf32>
    %205 = arith.mulf %203, %204 : vector<8x256xf32>
    %206 = vector.broadcast %185 : vector<1x256xf32> to vector<8x256xf32>
    %207 = arith.addf %205, %206 : vector<8x256xf32>
    %cst_143 = arith.constant 2.000000e-01 : f32
    %208 = vector.broadcast %cst_143 : f32 to vector<8x256xf32>
    %209 = arith.mulf %208, %207 : vector<8x256xf32>
    %210 = arith.maximumf %207, %209 : vector<8x256xf32>
    %211 = arith.truncf %210 : vector<8x256xf32> to vector<8x256xbf16>
    %c1_i32_144 = arith.constant 1 : i32
    %c1_i32_145 = arith.constant 1 : i32
    %c1_i32_146 = arith.constant 1 : i32
    %c1_i32_147 = arith.constant 1 : i32
    %c0_i32_148 = arith.constant 0 : i32
    %c0_i32_149 = arith.constant 0 : i32
    %212 = tpu.memref_slice %arg6[%c1_i32_144, %c0_i32_148, %c0_i32_149] : memref<4x256x256xbf16, #tpu.memory_space<any>> -> memref<1x256x256xbf16, #tpu.memory_space<any>>
    %213 = tpu.memref_squeeze %212 : memref<1x256x256xbf16, #tpu.memory_space<any>> -> memref<256x256xbf16, #tpu.memory_space<any>>
    %c0_i32_150 = arith.constant 0 : i32
    %c0_i32_151 = arith.constant 0 : i32
    %214 = tpu.memref_slice %arg11[%c1_i32_145, %c0_i32_150, %c0_i32_151] : memref<4x256x256xbf16, #tpu.memory_space<vmem>> -> memref<1x256x256xbf16, #tpu.memory_space<vmem>>
    %215 = tpu.memref_squeeze %214 : memref<1x256x256xbf16, #tpu.memory_space<vmem>> -> memref<256x256xbf16, #tpu.memory_space<vmem>>
    %216 = tpu.memref_slice %arg13[%c1_i32_146, %c1_i32_147] : memref<2x4x!tpu.dma_semaphore, #tpu.memory_space<semaphore_mem>> -> memref<1x1x!tpu.dma_semaphore, #tpu.memory_space<semaphore_mem>>
    %217 = tpu.memref_squeeze %216 : memref<1x1x!tpu.dma_semaphore, #tpu.memory_space<semaphore_mem>> -> memref<!tpu.dma_semaphore, #tpu.memory_space<semaphore_mem>>
    tpu.wait_dma2 semaphore(%217 : memref<!tpu.dma_semaphore, #tpu.memory_space<semaphore_mem>>) src(%213 : memref<256x256xbf16, #tpu.memory_space<any>>) dst(%215 : memref<256x256xbf16, #tpu.memory_space<vmem>>)
    %c1_152 = arith.constant 1 : index
    %c0_153 = arith.constant 0 : index
    %c0_154 = arith.constant 0 : index
    %218 = vector.load %arg11[%c1_152, %c0_153, %c0_154] : memref<4x256x256xbf16, #tpu.memory_space<vmem>>, vector<1x256x256xbf16>
    %219 = vector.shape_cast %218 : vector<1x256x256xbf16> to vector<256x256xbf16>
    %cst_155 = arith.constant dense<0.000000e+00> : vector<8x256xf32>
    %220 = tpu.matmul %211, %219, %cst_155 {dimension_numbers = #tpu.dot_dimension_numbers<[1], [0], [0], [1], [0, 0, 1, 1], [], []>} : vector<8x256xbf16>, vector<256x256xbf16>, vector<8x256xf32> -> vector<8x256xf32>
    %221 = arith.addf %174, %220 : vector<8x256xf32>
    %c2_i32_156 = arith.constant 2 : i32
    %c2_i32_157 = arith.constant 2 : i32
    %c0_i32_158 = arith.constant 0 : i32
    %c2_i32_159 = arith.constant 2 : i32
    %c0_i32_160 = arith.constant 0 : i32
    %c0_i32_161 = arith.constant 0 : i32
    %222 = tpu.memref_slice %arg5[%c2_i32_156, %c0_i32_160, %c0_i32_161] : memref<4x512x256xbf16, #tpu.memory_space<any>> -> memref<1x512x256xbf16, #tpu.memory_space<any>>
    %223 = tpu.memref_squeeze %222 : memref<1x512x256xbf16, #tpu.memory_space<any>> -> memref<512x256xbf16, #tpu.memory_space<any>>
    %c0_i32_162 = arith.constant 0 : i32
    %c0_i32_163 = arith.constant 0 : i32
    %224 = tpu.memref_slice %arg10[%c2_i32_157, %c0_i32_162, %c0_i32_163] : memref<4x512x256xbf16, #tpu.memory_space<vmem>> -> memref<1x512x256xbf16, #tpu.memory_space<vmem>>
    %225 = tpu.memref_squeeze %224 : memref<1x512x256xbf16, #tpu.memory_space<vmem>> -> memref<512x256xbf16, #tpu.memory_space<vmem>>
    %226 = tpu.memref_slice %arg13[%c0_i32_158, %c2_i32_159] : memref<2x4x!tpu.dma_semaphore, #tpu.memory_space<semaphore_mem>> -> memref<1x1x!tpu.dma_semaphore, #tpu.memory_space<semaphore_mem>>
    %227 = tpu.memref_squeeze %226 : memref<1x1x!tpu.dma_semaphore, #tpu.memory_space<semaphore_mem>> -> memref<!tpu.dma_semaphore, #tpu.memory_space<semaphore_mem>>
    tpu.wait_dma2 semaphore(%227 : memref<!tpu.dma_semaphore, #tpu.memory_space<semaphore_mem>>) src(%223 : memref<512x256xbf16, #tpu.memory_space<any>>) dst(%225 : memref<512x256xbf16, #tpu.memory_space<vmem>>)
    %c2 = arith.constant 2 : index
    %c0_164 = arith.constant 0 : index
    %c0_165 = arith.constant 0 : index
    %228 = vector.load %arg10[%c2, %c0_164, %c0_165] : memref<4x512x256xbf16, #tpu.memory_space<vmem>>, vector<1x512x256xbf16>
    %229 = vector.shape_cast %228 : vector<1x512x256xbf16> to vector<512x256xbf16>
    %cst_166 = arith.constant dense<0.000000e+00> : vector<8x256xf32>
    %230 = tpu.matmul %126, %229, %cst_166 {dimension_numbers = #tpu.dot_dimension_numbers<[1], [0], [0], [1], [0, 0, 1, 1], [], []>} : vector<8x512xbf16>, vector<512x256xbf16>, vector<8x256xf32> -> vector<8x256xf32>
    %c0_167 = arith.constant 0 : index
    %c2176 = arith.constant 2176 : index
    %231 = vector.load %arg2[%c0_167, %c2176] : memref<1x3968xf32, #tpu.memory_space<vmem>>, vector<1x256xf32>
    %c0_168 = arith.constant 0 : index
    %c3200 = arith.constant 3200 : index
    %232 = vector.load %arg2[%c0_168, %c3200] : memref<1x3968xf32, #tpu.memory_space<vmem>>, vector<1x256xf32>
    %cst_169 = arith.constant dense<0.000000e+00> : vector<256xf32>
    %233 = vector.multi_reduction <add>, %230, %cst_169 [0] : vector<8x256xf32> to vector<256xf32>
    %234 = vector.shape_cast %233 : vector<256xf32> to vector<1x256xf32>
    %235 = arith.mulf %230, %230 : vector<8x256xf32>
    %cst_170 = arith.constant dense<0.000000e+00> : vector<256xf32>
    %236 = vector.multi_reduction <add>, %235, %cst_170 [0] : vector<8x256xf32> to vector<256xf32>
    %237 = vector.shape_cast %236 : vector<256xf32> to vector<1x256xf32>
    %cst_171 = arith.constant 1.250000e-01 : f32
    %238 = vector.broadcast %cst_171 : f32 to vector<1x256xf32>
    %239 = arith.mulf %234, %238 : vector<1x256xf32>
    %cst_172 = arith.constant 1.250000e-01 : f32
    %240 = vector.broadcast %cst_172 : f32 to vector<1x256xf32>
    %241 = arith.mulf %237, %240 : vector<1x256xf32>
    %242 = arith.mulf %239, %239 : vector<1x256xf32>
    %243 = arith.subf %241, %242 : vector<1x256xf32>
    %244 = vector.broadcast %239 : vector<1x256xf32> to vector<8x256xf32>
    %245 = arith.subf %230, %244 : vector<8x256xf32>
    %cst_173 = arith.constant 8.000000e-01 : f32
    %246 = vector.broadcast %cst_173 : f32 to vector<1x256xf32>
    %247 = arith.addf %243, %246 : vector<1x256xf32>
    %248 = math.rsqrt %247 : vector<1x256xf32>
    %249 = vector.broadcast %248 : vector<1x256xf32> to vector<8x256xf32>
    %250 = arith.mulf %245, %249 : vector<8x256xf32>
    %251 = vector.broadcast %231 : vector<1x256xf32> to vector<8x256xf32>
    %252 = arith.mulf %250, %251 : vector<8x256xf32>
    %253 = vector.broadcast %232 : vector<1x256xf32> to vector<8x256xf32>
    %254 = arith.addf %252, %253 : vector<8x256xf32>
    %cst_174 = arith.constant 2.000000e-01 : f32
    %255 = vector.broadcast %cst_174 : f32 to vector<8x256xf32>
    %256 = arith.mulf %255, %254 : vector<8x256xf32>
    %257 = arith.maximumf %254, %256 : vector<8x256xf32>
    %258 = arith.truncf %257 : vector<8x256xf32> to vector<8x256xbf16>
    %c2_i32_175 = arith.constant 2 : i32
    %c2_i32_176 = arith.constant 2 : i32
    %c1_i32_177 = arith.constant 1 : i32
    %c2_i32_178 = arith.constant 2 : i32
    %c0_i32_179 = arith.constant 0 : i32
    %c0_i32_180 = arith.constant 0 : i32
    %259 = tpu.memref_slice %arg6[%c2_i32_175, %c0_i32_179, %c0_i32_180] : memref<4x256x256xbf16, #tpu.memory_space<any>> -> memref<1x256x256xbf16, #tpu.memory_space<any>>
    %260 = tpu.memref_squeeze %259 : memref<1x256x256xbf16, #tpu.memory_space<any>> -> memref<256x256xbf16, #tpu.memory_space<any>>
    %c0_i32_181 = arith.constant 0 : i32
    %c0_i32_182 = arith.constant 0 : i32
    %261 = tpu.memref_slice %arg11[%c2_i32_176, %c0_i32_181, %c0_i32_182] : memref<4x256x256xbf16, #tpu.memory_space<vmem>> -> memref<1x256x256xbf16, #tpu.memory_space<vmem>>
    %262 = tpu.memref_squeeze %261 : memref<1x256x256xbf16, #tpu.memory_space<vmem>> -> memref<256x256xbf16, #tpu.memory_space<vmem>>
    %263 = tpu.memref_slice %arg13[%c1_i32_177, %c2_i32_178] : memref<2x4x!tpu.dma_semaphore, #tpu.memory_space<semaphore_mem>> -> memref<1x1x!tpu.dma_semaphore, #tpu.memory_space<semaphore_mem>>
    %264 = tpu.memref_squeeze %263 : memref<1x1x!tpu.dma_semaphore, #tpu.memory_space<semaphore_mem>> -> memref<!tpu.dma_semaphore, #tpu.memory_space<semaphore_mem>>
    tpu.wait_dma2 semaphore(%264 : memref<!tpu.dma_semaphore, #tpu.memory_space<semaphore_mem>>) src(%260 : memref<256x256xbf16, #tpu.memory_space<any>>) dst(%262 : memref<256x256xbf16, #tpu.memory_space<vmem>>)
    %c2_183 = arith.constant 2 : index
    %c0_184 = arith.constant 0 : index
    %c0_185 = arith.constant 0 : index
    %265 = vector.load %arg11[%c2_183, %c0_184, %c0_185] : memref<4x256x256xbf16, #tpu.memory_space<vmem>>, vector<1x256x256xbf16>
    %266 = vector.shape_cast %265 : vector<1x256x256xbf16> to vector<256x256xbf16>
    %cst_186 = arith.constant dense<0.000000e+00> : vector<8x256xf32>
    %267 = tpu.matmul %258, %266, %cst_186 {dimension_numbers = #tpu.dot_dimension_numbers<[1], [0], [0], [1], [0, 0, 1, 1], [], []>} : vector<8x256xbf16>, vector<256x256xbf16>, vector<8x256xf32> -> vector<8x256xf32>
    %268 = arith.addf %221, %267 : vector<8x256xf32>
    %c3_i32_187 = arith.constant 3 : i32
    %c3_i32_188 = arith.constant 3 : i32
    %c0_i32_189 = arith.constant 0 : i32
    %c3_i32_190 = arith.constant 3 : i32
    %c0_i32_191 = arith.constant 0 : i32
    %c0_i32_192 = arith.constant 0 : i32
    %269 = tpu.memref_slice %arg5[%c3_i32_187, %c0_i32_191, %c0_i32_192] : memref<4x512x256xbf16, #tpu.memory_space<any>> -> memref<1x512x256xbf16, #tpu.memory_space<any>>
    %270 = tpu.memref_squeeze %269 : memref<1x512x256xbf16, #tpu.memory_space<any>> -> memref<512x256xbf16, #tpu.memory_space<any>>
    %c0_i32_193 = arith.constant 0 : i32
    %c0_i32_194 = arith.constant 0 : i32
    %271 = tpu.memref_slice %arg10[%c3_i32_188, %c0_i32_193, %c0_i32_194] : memref<4x512x256xbf16, #tpu.memory_space<vmem>> -> memref<1x512x256xbf16, #tpu.memory_space<vmem>>
    %272 = tpu.memref_squeeze %271 : memref<1x512x256xbf16, #tpu.memory_space<vmem>> -> memref<512x256xbf16, #tpu.memory_space<vmem>>
    %273 = tpu.memref_slice %arg13[%c0_i32_189, %c3_i32_190] : memref<2x4x!tpu.dma_semaphore, #tpu.memory_space<semaphore_mem>> -> memref<1x1x!tpu.dma_semaphore, #tpu.memory_space<semaphore_mem>>
    %274 = tpu.memref_squeeze %273 : memref<1x1x!tpu.dma_semaphore, #tpu.memory_space<semaphore_mem>> -> memref<!tpu.dma_semaphore, #tpu.memory_space<semaphore_mem>>
    tpu.wait_dma2 semaphore(%274 : memref<!tpu.dma_semaphore, #tpu.memory_space<semaphore_mem>>) src(%270 : memref<512x256xbf16, #tpu.memory_space<any>>) dst(%272 : memref<512x256xbf16, #tpu.memory_space<vmem>>)
    %c3 = arith.constant 3 : index
    %c0_195 = arith.constant 0 : index
    %c0_196 = arith.constant 0 : index
    %275 = vector.load %arg10[%c3, %c0_195, %c0_196] : memref<4x512x256xbf16, #tpu.memory_space<vmem>>, vector<1x512x256xbf16>
    %276 = vector.shape_cast %275 : vector<1x512x256xbf16> to vector<512x256xbf16>
    %cst_197 = arith.constant dense<0.000000e+00> : vector<8x256xf32>
    %277 = tpu.matmul %126, %276, %cst_197 {dimension_numbers = #tpu.dot_dimension_numbers<[1], [0], [0], [1], [0, 0, 1, 1], [], []>} : vector<8x512xbf16>, vector<512x256xbf16>, vector<8x256xf32> -> vector<8x256xf32>
    %c0_198 = arith.constant 0 : index
    %c2432 = arith.constant 2432 : index
    %278 = vector.load %arg2[%c0_198, %c2432] : memref<1x3968xf32, #tpu.memory_space<vmem>>, vector<1x256xf32>
    %c0_199 = arith.constant 0 : index
    %c3456 = arith.constant 3456 : index
    %279 = vector.load %arg2[%c0_199, %c3456] : memref<1x3968xf32, #tpu.memory_space<vmem>>, vector<1x256xf32>
    %cst_200 = arith.constant dense<0.000000e+00> : vector<256xf32>
    %280 = vector.multi_reduction <add>, %277, %cst_200 [0] : vector<8x256xf32> to vector<256xf32>
    %281 = vector.shape_cast %280 : vector<256xf32> to vector<1x256xf32>
    %282 = arith.mulf %277, %277 : vector<8x256xf32>
    %cst_201 = arith.constant dense<0.000000e+00> : vector<256xf32>
    %283 = vector.multi_reduction <add>, %282, %cst_201 [0] : vector<8x256xf32> to vector<256xf32>
    %284 = vector.shape_cast %283 : vector<256xf32> to vector<1x256xf32>
    %cst_202 = arith.constant 1.250000e-01 : f32
    %285 = vector.broadcast %cst_202 : f32 to vector<1x256xf32>
    %286 = arith.mulf %281, %285 : vector<1x256xf32>
    %cst_203 = arith.constant 1.250000e-01 : f32
    %287 = vector.broadcast %cst_203 : f32 to vector<1x256xf32>
    %288 = arith.mulf %284, %287 : vector<1x256xf32>
    %289 = arith.mulf %286, %286 : vector<1x256xf32>
    %290 = arith.subf %288, %289 : vector<1x256xf32>
    %291 = vector.broadcast %286 : vector<1x256xf32> to vector<8x256xf32>
    %292 = arith.subf %277, %291 : vector<8x256xf32>
    %cst_204 = arith.constant 8.000000e-01 : f32
    %293 = vector.broadcast %cst_204 : f32 to vector<1x256xf32>
    %294 = arith.addf %290, %293 : vector<1x256xf32>
    %295 = math.rsqrt %294 : vector<1x256xf32>
    %296 = vector.broadcast %295 : vector<1x256xf32> to vector<8x256xf32>
    %297 = arith.mulf %292, %296 : vector<8x256xf32>
    %298 = vector.broadcast %278 : vector<1x256xf32> to vector<8x256xf32>
    %299 = arith.mulf %297, %298 : vector<8x256xf32>
    %300 = vector.broadcast %279 : vector<1x256xf32> to vector<8x256xf32>
    %301 = arith.addf %299, %300 : vector<8x256xf32>
    %cst_205 = arith.constant 2.000000e-01 : f32
    %302 = vector.broadcast %cst_205 : f32 to vector<8x256xf32>
    %303 = arith.mulf %302, %301 : vector<8x256xf32>
    %304 = arith.maximumf %301, %303 : vector<8x256xf32>
    %305 = arith.truncf %304 : vector<8x256xf32> to vector<8x256xbf16>
    %c3_i32_206 = arith.constant 3 : i32
    %c3_i32_207 = arith.constant 3 : i32
    %c1_i32_208 = arith.constant 1 : i32
    %c3_i32_209 = arith.constant 3 : i32
    %c0_i32_210 = arith.constant 0 : i32
    %c0_i32_211 = arith.constant 0 : i32
    %306 = tpu.memref_slice %arg6[%c3_i32_206, %c0_i32_210, %c0_i32_211] : memref<4x256x256xbf16, #tpu.memory_space<any>> -> memref<1x256x256xbf16, #tpu.memory_space<any>>
    %307 = tpu.memref_squeeze %306 : memref<1x256x256xbf16, #tpu.memory_space<any>> -> memref<256x256xbf16, #tpu.memory_space<any>>
    %c0_i32_212 = arith.constant 0 : i32
    %c0_i32_213 = arith.constant 0 : i32
    %308 = tpu.memref_slice %arg11[%c3_i32_207, %c0_i32_212, %c0_i32_213] : memref<4x256x256xbf16, #tpu.memory_space<vmem>> -> memref<1x256x256xbf16, #tpu.memory_space<vmem>>
    %309 = tpu.memref_squeeze %308 : memref<1x256x256xbf16, #tpu.memory_space<vmem>> -> memref<256x256xbf16, #tpu.memory_space<vmem>>
    %310 = tpu.memref_slice %arg13[%c1_i32_208, %c3_i32_209] : memref<2x4x!tpu.dma_semaphore, #tpu.memory_space<semaphore_mem>> -> memref<1x1x!tpu.dma_semaphore, #tpu.memory_space<semaphore_mem>>
    %311 = tpu.memref_squeeze %310 : memref<1x1x!tpu.dma_semaphore, #tpu.memory_space<semaphore_mem>> -> memref<!tpu.dma_semaphore, #tpu.memory_space<semaphore_mem>>
    tpu.wait_dma2 semaphore(%311 : memref<!tpu.dma_semaphore, #tpu.memory_space<semaphore_mem>>) src(%307 : memref<256x256xbf16, #tpu.memory_space<any>>) dst(%309 : memref<256x256xbf16, #tpu.memory_space<vmem>>)
    %c3_214 = arith.constant 3 : index
    %c0_215 = arith.constant 0 : index
    %c0_216 = arith.constant 0 : index
    %312 = vector.load %arg11[%c3_214, %c0_215, %c0_216] : memref<4x256x256xbf16, #tpu.memory_space<vmem>>, vector<1x256x256xbf16>
    %313 = vector.shape_cast %312 : vector<1x256x256xbf16> to vector<256x256xbf16>
    %cst_217 = arith.constant dense<0.000000e+00> : vector<8x256xf32>
    %314 = tpu.matmul %305, %313, %cst_217 {dimension_numbers = #tpu.dot_dimension_numbers<[1], [0], [0], [1], [0, 0, 1, 1], [], []>} : vector<8x256xbf16>, vector<256x256xbf16>, vector<8x256xf32> -> vector<8x256xf32>
    %315 = arith.addf %268, %314 : vector<8x256xf32>
    %c0_218 = arith.constant 0 : index
    %c3712 = arith.constant 3712 : index
    %316 = vector.load %arg2[%c0_218, %c3712] : memref<1x3968xf32, #tpu.memory_space<vmem>>, vector<1x256xf32>
    %317 = vector.broadcast %316 : vector<1x256xf32> to vector<8x256xf32>
    %318 = arith.addf %315, %317 : vector<8x256xf32>
    %319 = math.tanh %318 : vector<8x256xf32>
    %c0_219 = arith.constant 0 : index
    %c0_220 = arith.constant 0 : index
    %320 = vector.load %arg7[%c0_219, %c0_220] : memref<8x256xf32, #tpu.memory_space<vmem>>, vector<8x256xf32>
    tpu.vector_store %arg7[%c0_219, %c0_220], %319 {strides = array<i32>} : memref<8x256xf32, #tpu.memory_space<vmem>>, vector<8x256xf32>,
    return
  }
}

</mosaic_0001>

<llo_original>
// kernel: tpu_custom_call.1
$region0: #{tpu_custom_call.1}
  #allocation0 [shape = 'u32[]', space=smem, size = 0x4, offset = 0x4, fixed_abs, tag = 'smem constant byte address 0x4 - core index']
  #allocation1 [shape = 'u32[72,128]{1,0:T(1,128)}', space=vmem, size = 0x9000, scoped, tag = 'internal scratch']
  #allocation2 [shape = 'bf16[128,256]{1,0:T(8,128)(2,1)}', space=vmem, size = 0x10000, scoped, tag = 'scratch operand']
  #allocation3 [shape = 'bf16[256,512]{1,0:T(8,128)(2,1)}', space=vmem, size = 0x40000, scoped, tag = 'scratch operand']
  #allocation4 [shape = 'bf16[4,512,256]{2,1,0:T(8,128)(2,1)}', space=vmem, size = 0x100000, scoped, tag = 'scratch operand']
  #allocation5 [shape = 'bf16[4,256,256]{2,1,0:T(8,128)(2,1)}', space=vmem, size = 0x80000, scoped, tag = 'scratch operand']
  #allocation6 [shape = 's32[2]{0}', space=sflag, size = 0x8, scoped, tag = 'scratch operand']
  #allocation7 [shape = 's32[8]{0}', space=sflag, size = 0x20, scoped, tag = 'scratch operand']
  #allocation15 [shape = 's32[]', space=sflag, size = 0x4, offset = 0, fixed_abs, tag = 'sflag constant byte address 0x0 - dummy sync flag']
  #allocation16 [shape = 's32[]', space=sflag, size = 0x4, offset = 0, fixed_abs, tag = 'sflag constant byte address 0x0 - dummy sync flag']
  #allocation17 [shape = 'u32[]', space=smem, size = 0x4, offset = 0x44, fixed_abs, tag = 'smem constant byte address 0x44 - assertion arg 0']
  #allocation18 [shape = 'u32[]', space=smem, size = 0x4, offset = 0x48, fixed_abs, tag = 'smem constant byte address 0x48 - assertion arg 1']
  #allocation19 [shape = 's32[]', space=sflag, size = 0x4, offset = 0, fixed_abs, tag = 'sflag constant byte address 0x0 - dummy sync flag']
  #allocation20 [shape = 's32[]', space=sflag, size = 0x4, offset = 0, fixed_abs, tag = 'sflag constant byte address 0x0 - dummy sync flag']
  #allocation21 [shape = 's32[]', space=sflag, size = 0x4, offset = 0, fixed_abs, tag = 'sflag constant byte address 0x0 - dummy sync flag']
  #allocation22 [shape = 's32[]', space=sflag, size = 0x4, offset = 0, fixed_abs, tag = 'sflag constant byte address 0x0 - dummy sync flag']
  #allocation23 [shape = 's32[]', space=sflag, size = 0x4, offset = 0, fixed_abs, tag = 'sflag constant byte address 0x0 - dummy sync flag']
  #allocation24 [shape = 's32[]', space=sflag, size = 0x4, offset = 0, fixed_abs, tag = 'sflag constant byte address 0x0 - dummy sync flag']
  #allocation25 [shape = 's32[]', space=sflag, size = 0x4, offset = 0, fixed_abs, tag = 'sflag constant byte address 0x0 - dummy sync flag']
  #allocation26 [shape = 's32[]', space=sflag, size = 0x4, offset = 0, fixed_abs, tag = 'sflag constant byte address 0x0 - dummy sync flag']
  #allocation27 [shape = 's32[]', space=sflag, size = 0x4, offset = 0, fixed_abs, tag = 'sflag constant byte address 0x0 - dummy sync flag']
  #allocation28 [shape = 's32[]', space=sflag, size = 0x4, offset = 0, fixed_abs, tag = 'sflag constant byte address 0x0 - dummy sync flag']
  #allocation29 [shape = 's32[]', space=sflag, size = 0x4, offset = 0, fixed_abs, tag = 'sflag constant byte address 0x0 - dummy sync flag']
  #allocation30 [shape = 's32[]', space=sflag, size = 0x4, offset = 0, fixed_abs, tag = 'sflag constant byte address 0x0 - dummy sync flag']
  #allocation31 [shape = 's32[]', space=sflag, size = 0x4, offset = 0, fixed_abs, tag = 'sflag constant byte address 0x0 - dummy sync flag']
  #allocation32 [shape = 's32[]', space=sflag, size = 0x4, offset = 0, fixed_abs, tag = 'sflag constant byte address 0x0 - dummy sync flag']
  #allocation33 [shape = 's32[]', space=sflag, size = 0x4, offset = 0, fixed_abs, tag = 'sflag constant byte address 0x0 - dummy sync flag']
  #allocation34 [shape = 's32[]', space=sflag, size = 0x4, offset = 0, fixed_abs, tag = 'sflag constant byte address 0x0 - dummy sync flag']
  #allocation35 [shape = 's32[]', space=sflag, size = 0x4, offset = 0, fixed_abs, tag = 'sflag constant byte address 0x0 - dummy sync flag']
  #allocation36 [shape = 's32[]', space=sflag, size = 0x4, offset = 0, fixed_abs, tag = 'sflag constant byte address 0x0 - dummy sync flag']
  %s0 = inlined_call_operand.hbm [shape: f32[8,32], index: 0, kind: input, shape index: {}]
  %s1 = inlined_call_operand.hbm [shape: bf16[32,128], index: 1, kind: input, shape index: {}]
  %s2 = inlined_call_operand.hbm [shape: f32[1,3968], index: 2, kind: input, shape index: {}]
  %s3 = inlined_call_operand.hbm [shape: bf16[128,256], index: 3, kind: input, shape index: {}]
  %s4 = inlined_call_operand.hbm [shape: bf16[256,512], index: 4, kind: input, shape index: {}]
  %s5 = inlined_call_operand.hbm [shape: bf16[4,512,256], index: 5, kind: input, shape index: {}]
  %s6 = inlined_call_operand.hbm [shape: bf16[4,256,256], index: 6, kind: input, shape index: {}]
  %s7 = inlined_call_operand.hbm [shape: f32[8,256], index: 7, kind: output, shape index: {}]
  %s8 = sld [smem:[#allocation0]]
  $region74: #{tpu_custom_call.1} parent=0
    _
  %s10 = ssub.s32 1, %s8
  %s11 = scalar_select 0, %s10, %s8
  $region1: #{tpu_custom_call.1} parent=0
    #allocation8 [shape = 'u8[4096]{0}', space=vmem, size = 0x1000, scoped, tag = 'input window, operand 0, single buffered']
    #allocation9 [shape = 's32[1]{0}', space=sflag, size = 0x4, scoped, tag = 'scoped memory for tpu_custom_call.1']
    #allocation10 [shape = 's32[1]{0}', space=sflag, size = 0x4, scoped, tag = 'scoped memory for tpu_custom_call.1']
    #allocation11 [shape = 'u8[8192]{0}', space=vmem, size = 0x2000, scoped, tag = 'input window, operand 1, single buffered']
    #allocation12 [shape = 's32[1]{0}', space=sflag, size = 0x4, scoped, tag = 'scoped memory for tpu_custom_call.1']
    #allocation13 [shape = 'u8[15872]{0}', space=vmem, size = 0x4000, scoped, tag = 'input window, operand 2, single buffered']
    #allocation14 [shape = 'u8[8192]{0}', space=vmem, size = 0x2000, scoped, tag = 'output window, operand 0, single buffered']
    %12 = vsyncpa [#allocation9], 0
    %13 = vsyncpa [#allocation12], 0
    %14 = vsyncpa [#allocation10], 0
    // Predicated region
    $region2: #{tpu_custom_call.1} parent=1 // pred_check
      _
    $region3: #{tpu_custom_call.1} parent=1 // pred_check_branch
      %16 = sbr.rel (0) target = $region5
    $region4: #{tpu_custom_call.1} parent=1 // pred_region
      %18 = vsyncadd [#allocation9], 0
      %s20 = sshll.u32 %s0, 4
      %s21 = int_to_ptr.hbm [resolvable:$true] %s20
      %s22 = sshll.u32 [#allocation8], 4
      %s23 = int_to_ptr.vmem [resolvable:$true] %s22
      %25 = dma.hbm_to_vmem [thread:$0]  %s21, 128, %s23, [#allocation9]
    $region5: #{tpu_custom_call.1} parent=1 // pred_fallthru
      _
    // Predicated region
    $region6: #{tpu_custom_call.1} parent=1 // pred_check
      _
    $region7: #{tpu_custom_call.1} parent=1 // pred_check_branch
      %27 = sbr.rel (0) target = $region9
    $region8: #{tpu_custom_call.1} parent=1 // pred_region
      %29 = vsyncadd [#allocation12], 0
      %s30 = sshll.u32 %s1, 4
      %s31 = int_to_ptr.hbm [resolvable:$true] %s30
      %s32 = sshll.u32 [#allocation11], 4
      %s33 = int_to_ptr.vmem [resolvable:$true] %s32
      %38 = dma.hbm_to_vmem [thread:$0]  %s31, 256, %s33, [#allocation12], 64, 64, 4
    $region9: #{tpu_custom_call.1} parent=1 // pred_fallthru
      _
    // Predicated region
    $region10: #{tpu_custom_call.1} parent=1 // pred_check
      _
    $region11: #{tpu_custom_call.1} parent=1 // pred_check_branch
      %40 = sbr.rel (0) target = $region13
    $region12: #{tpu_custom_call.1} parent=1 // pred_region
      %42 = vsyncadd [#allocation12], 0
      %s44 = sshll.u32 %s2, 4
      %s45 = int_to_ptr.hbm [resolvable:$true] %s44
      %s46 = sshll.u32 [#allocation13], 4
      %s47 = int_to_ptr.vmem [resolvable:$true] %s46
      %49 = dma.hbm_to_vmem [thread:$0]  %s45, 496, %s47, [#allocation12]
    $region13: #{tpu_custom_call.1} parent=1 // pred_fallthru
      _
    // Predicated region
    $region14: #{tpu_custom_call.1} parent=1 // pred_check
      _
    $region15: #{tpu_custom_call.1} parent=1 // pred_check_branch
      %51 = sbr.rel (0) target = $region17
    $region16: #{tpu_custom_call.1} parent=1 // pred_region
      %53 = dma.done [#allocation9], 128
    $region17: #{tpu_custom_call.1} parent=1 // pred_fallthru
      _
    // Predicated region
    $region18: #{tpu_custom_call.1} parent=1 // pred_check
      _
    $region19: #{tpu_custom_call.1} parent=1 // pred_check_branch
      %55 = sbr.rel (0) target = $region21
    $region20: #{tpu_custom_call.1} parent=1 // pred_region
      %57 = dma.done [#allocation12], 256
    $region21: #{tpu_custom_call.1} parent=1 // pred_fallthru
      _
    // Predicated region
    $region22: #{tpu_custom_call.1} parent=1 // pred_check
      _
    $region23: #{tpu_custom_call.1} parent=1 // pred_check_branch
      %59 = sbr.rel (0) target = $region25
    $region24: #{tpu_custom_call.1} parent=1 // pred_region
      %61 = dma.done [#allocation12], 496
    $region25: #{tpu_custom_call.1} parent=1 // pred_fallthru
      _
    // Predicated region
    $region26: #{tpu_custom_call.1} parent=1 // pred_check
      _
    $region27: #{tpu_custom_call.1} parent=1 // pred_check_branch
      %64 = sbr.rel target = $region29
    $region28: #{tpu_custom_call.1} parent=1 // pred_region
      %65 = sst [smem:[#allocation17]] [#allocation16]
      %66 = sst [smem:[#allocation18]] [#allocation15]
    $region29: #{tpu_custom_call.1} parent=1 // pred_fallthru
      _
    %68 = shalt.err (0)
    %s70 = sshll.u32 %s3, 4
    %s71 = int_to_ptr.hbm [resolvable:$true] %s70
    %s72 = sshll.u32 [#allocation2], 4
    %s73 = int_to_ptr.vmem [resolvable:$true] %s72
    %75 = dma.hbm_to_vmem [thread:$0]  %s71, 2048, %s73, [#allocation6]
    %s76 = scalar_lea.sflag [#allocation6], 1
    // Predicated region
    $region30: #{tpu_custom_call.1} parent=1 // pred_check
      _
    $region31: #{tpu_custom_call.1} parent=1 // pred_check_branch
      %78 = sbr.rel target = $region33
    $region32: #{tpu_custom_call.1} parent=1 // pred_region
      %79 = sst [smem:[#allocation17]] [#allocation20]
      %80 = sst [smem:[#allocation18]] [#allocation19]
    $region33: #{tpu_custom_call.1} parent=1 // pred_fallthru
      _
    %82 = shalt.err (0)
    %s84 = sshll.u32 %s4, 4
    %s85 = int_to_ptr.hbm [resolvable:$true] %s84
    %s86 = sshll.u32 [#allocation3], 4
    %s87 = int_to_ptr.vmem [resolvable:$true] %s86
    %89 = dma.hbm_to_vmem [thread:$0]  %s85, 8192, %s87, %s76
    // Predicated region
    $region34: #{tpu_custom_call.1} parent=1 // pred_check
      _
    $region35: #{tpu_custom_call.1} parent=1 // pred_check_branch
      %91 = sbr.rel target = $region37
    $region36: #{tpu_custom_call.1} parent=1 // pred_region
      %92 = sst [smem:[#allocation17]] [#allocation22]
      %93 = sst [smem:[#allocation18]] [#allocation21]
    $region37: #{tpu_custom_call.1} parent=1 // pred_fallthru
      _
    %95 = shalt.err (0)
    %s97 = sshll.u32 %s5, 4
    %s98 = int_to_ptr.hbm [resolvable:$true] %s97
    %s99 = sshll.u32 [#allocation4], 4
    %s100 = int_to_ptr.vmem [resolvable:$true] %s99
    %102 = dma.hbm_to_vmem [thread:$0]  %s98, 8192, %s100, [#allocation7]
    %s103 = scalar_lea.sflag [#allocation7], 4
    // Predicated region
    $region38: #{tpu_custom_call.1} parent=1 // pred_check
      _
    $region39: #{tpu_custom_call.1} parent=1 // pred_check_branch
      %105 = sbr.rel target = $region41
    $region40: #{tpu_custom_call.1} parent=1 // pred_region
      %106 = sst [smem:[#allocation17]] [#allocation24]
      %107 = sst [smem:[#allocation18]] [#allocation23]
    $region41: #{tpu_custom_call.1} parent=1 // pred_fallthru
      _
    %109 = shalt.err (0)
    %s111 = sshll.u32 %s6, 4
    %s112 = int_to_ptr.hbm [resolvable:$true] %s111
    %s113 = sshll.u32 [#allocation5], 4
    %s114 = int_to_ptr.vmem [resolvable:$true] %s113
    %116 = dma.hbm_to_vmem [thread:$0]  %s112, 4096, %s114, %s103
    %s117 = scalar_lea.hbm %s5, 512
    %s118 = scalar_lea.vmem [#allocation4], 512
    %s119 = scalar_lea.sflag [#allocation7], 1
    // Predicated region
    $region42: #{tpu_custom_call.1} parent=1 // pred_check
      _
    $region43: #{tpu_custom_call.1} parent=1 // pred_check_branch
      %121 = sbr.rel target = $region45
    $region44: #{tpu_custom_call.1} parent=1 // pred_region
      %122 = sst [smem:[#allocation17]] [#allocation26]
      %123 = sst [smem:[#allocation18]] [#allocation25]
    $region45: #{tpu_custom_call.1} parent=1 // pred_fallthru
      _
    %125 = shalt.err (0)
    %s127 = sshll.u32 %s117, 4
    %s128 = int_to_ptr.hbm [resolvable:$true] %s127
    %s129 = sshll.u32 %s118, 4
    %s130 = int_to_ptr.vmem [resolvable:$true] %s129
    %132 = dma.hbm_to_vmem [thread:$0]  %s128, 8192, %s130, %s119
    %s133 = scalar_lea.hbm %s6, 256
    %s134 = scalar_lea.vmem [#allocation5], 256
    %s135 = scalar_lea.sflag [#allocation7], 5
    // Predicated region
    $region46: #{tpu_custom_call.1} parent=1 // pred_check
      _
    $region47: #{tpu_custom_call.1} parent=1 // pred_check_branch
      %137 = sbr.rel target = $region49
    $region48: #{tpu_custom_call.1} parent=1 // pred_region
      %138 = sst [smem:[#allocation17]] [#allocation28]
      %139 = sst [smem:[#allocation18]] [#allocation27]
    $region49: #{tpu_custom_call.1} parent=1 // pred_fallthru
      _
    %141 = shalt.err (0)
    %s143 = sshll.u32 %s133, 4
    %s144 = int_to_ptr.hbm [resolvable:$true] %s143
    %s145 = sshll.u32 %s134, 4
    %s146 = int_to_ptr.vmem [resolvable:$true] %s145
    %148 = dma.hbm_to_vmem [thread:$0]  %s144, 4096, %s146, %s135
    %s149 = scalar_lea.hbm %s5, 1024
    %s150 = scalar_lea.vmem [#allocation4], 1024
    %s151 = scalar_lea.sflag [#allocation7], 2
    // Predicated region
    $region50: #{tpu_custom_call.1} parent=1 // pred_check
      _
    $region51: #{tpu_custom_call.1} parent=1 // pred_check_branch
      %153 = sbr.rel target = $region53
    $region52: #{tpu_custom_call.1} parent=1 // pred_region
      %154 = sst [smem:[#allocation17]] [#allocation30]
      %155 = sst [smem:[#allocation18]] [#allocation29]
    $region53: #{tpu_custom_call.1} parent=1 // pred_fallthru
      _
    %157 = shalt.err (0)
    %s159 = sshll.u32 %s149, 4
    %s160 = int_to_ptr.hbm [resolvable:$true] %s159
    %s161 = sshll.u32 %s150, 4
    %s162 = int_to_ptr.vmem [resolvable:$true] %s161
    %164 = dma.hbm_to_vmem [thread:$0]  %s160, 8192, %s162, %s151
    %s165 = scalar_lea.hbm %s6, 512
    %s166 = scalar_lea.vmem [#allocation5], 512
    %s167 = scalar_lea.sflag [#allocation7], 6
    // Predicated region
    $region54: #{tpu_custom_call.1} parent=1 // pred_check
      _
    $region55: #{tpu_custom_call.1} parent=1 // pred_check_branch
      %169 = sbr.rel target = $region57
    $region56: #{tpu_custom_call.1} parent=1 // pred_region
      %170 = sst [smem:[#allocation17]] [#allocation32]
      %171 = sst [smem:[#allocation18]] [#allocation31]
    $region57: #{tpu_custom_call.1} parent=1 // pred_fallthru
      _
    %173 = shalt.err (0)
    %s175 = sshll.u32 %s165, 4
    %s176 = int_to_ptr.hbm [resolvable:$true] %s175
    %s177 = sshll.u32 %s166, 4
    %s178 = int_to_ptr.vmem [resolvable:$true] %s177
    %180 = dma.hbm_to_vmem [thread:$0]  %s176, 4096, %s178, %s167
    %s181 = scalar_lea.hbm %s5, 1536
    %s182 = scalar_lea.vmem [#allocation4], 1536
    %s183 = scalar_lea.sflag [#allocation7], 3
    // Predicated region
    $region58: #{tpu_custom_call.1} parent=1 // pred_check
      _
    $region59: #{tpu_custom_call.1} parent=1 // pred_check_branch
      %185 = sbr.rel target = $region61
    $region60: #{tpu_custom_call.1} parent=1 // pred_region
      %186 = sst [smem:[#allocation17]] [#allocation34]
      %187 = sst [smem:[#allocation18]] [#allocation33]
    $region61: #{tpu_custom_call.1} parent=1 // pred_fallthru
      _
    %189 = shalt.err (0)
    %s191 = sshll.u32 %s181, 4
    %s192 = int_to_ptr.hbm [resolvable:$true] %s191
    %s193 = sshll.u32 %s182, 4
    %s194 = int_to_ptr.vmem [resolvable:$true] %s193
    %196 = dma.hbm_to_vmem [thread:$0]  %s192, 8192, %s194, %s183
    %s197 = scalar_lea.hbm %s6, 768
    %s198 = scalar_lea.vmem [#allocation5], 768
    %s199 = scalar_lea.sflag [#allocation7], 7
    // Predicated region
    $region62: #{tpu_custom_call.1} parent=1 // pred_check
      _
    $region63: #{tpu_custom_call.1} parent=1 // pred_check_branch
      %201 = sbr.rel target = $region65
    $region64: #{tpu_custom_call.1} parent=1 // pred_region
      %202 = sst [smem:[#allocation17]] [#allocation36]
      %203 = sst [smem:[#allocation18]] [#allocation35]
    $region65: #{tpu_custom_call.1} parent=1 // pred_fallthru
      _
    %205 = shalt.err (0)
    %s207 = sshll.u32 %s197, 4
    %s208 = int_to_ptr.hbm [resolvable:$true] %s207
    %s209 = sshll.u32 %s198, 4
    %s210 = int_to_ptr.vmem [resolvable:$true] %s209
    %212 = dma.hbm_to_vmem [thread:$0]  %s208, 4096, %s210, %s199
    %v213 = vld [vmem:[#allocation8] sm:$0xff]
    %v214 = vpack.c.bf16 %v213, %v213
    %v215 = vld [vmem:[#allocation11] sm:$0xf]
    %v216 = vld [vmem:[#allocation11 + $0x4] sm:$0xf]
    %v217 = vld [vmem:[#allocation11 + $0x8] sm:$0xf]
    %v218 = vld [vmem:[#allocation11 + $0xc] sm:$0xf]
    %v219 = vld [vmem:[#allocation13] sm:$0x1]
    %v221 = vperm.slane %v219, 0
    %v227 = vunpack.c.l.b16 %v215
    %v228 = vunpack.c.l.b16 %v216
    %v229 = vunpack.c.l.b16 %v217
    %v230 = vunpack.c.l.b16 %v218
    %v231 = vpack.c.b16 %v228, %v227
    %v232 = vpack.c.b16 %v230, %v229
    %vm235 = vcmask 261120
    %v237 = vsel %vm235, %v214, 0
    %239 = vmatpush.bf16.msra.mxu0 0
    %240 = vmatpush.bf16.msra.mxu0 0
    %241 = vmatpush.bf16.msra.mxu0 0
    %242 = vmatpush.bf16.msra.mxu0 0
    %243 = vmatpush.bf16.msra.mxu0 0
    %244 = vmatpush.bf16.msra.mxu0 0
    %245 = vmatpush.bf16.msra.mxu0 %v232
    %246 = vmatpush.bf16.msra.mxu0 %v231
    %247 = vmatmul.bf16.gmra.mxu0 %v237
    %v248 = vpop.f32.mrf.mxu0
    %v249 = vadd.f32 %v221, %v248
    %v250 = vpop.f32.mrf.mxu0
    %251 = vdwg.mxu0
    %v252 = vmul.f32 %v249, 0.2
    %v253 = vmax.f32 %v249, %v252
    %s254 = smul.u32 4, 16
    %s255 = smul.u32 %s254, 2
    %s256 = sshll.u32 %s255, 4
    %257 = dma.done [#allocation6], %s256
    %v258 = vpack.c.bf16 %v253, %v253
    %v259 = vld [vmem:[#allocation2] sm:$0xff]
    %v260 = vld [vmem:[#allocation2 + $0x8] sm:$0xff]
    %v261 = vld [vmem:[#allocation2 + $0x10] sm:$0xff]
    %v262 = vld [vmem:[#allocation2 + $0x18] sm:$0xff]
    %v263 = vld [vmem:[#allocation2 + $0x20] sm:$0xff]
    %v264 = vld [vmem:[#allocation2 + $0x28] sm:$0xff]
    %v265 = vld [vmem:[#allocation2 + $0x30] sm:$0xff]
    %v266 = vld [vmem:[#allocation2 + $0x38] sm:$0xff]
    %v267 = vld [vmem:[#allocation2 + $0x40] sm:$0xff]
    %v268 = vld [vmem:[#allocation2 + $0x48] sm:$0xff]
    %v269 = vld [vmem:[#allocation2 + $0x50] sm:$0xff]
    %v270 = vld [vmem:[#allocation2 + $0x58] sm:$0xff]
    %v271 = vld [vmem:[#allocation2 + $0x60] sm:$0xff]
    %v272 = vld [vmem:[#allocation2 + $0x68] sm:$0xff]
    %v273 = vld [vmem:[#allocation2 + $0x70] sm:$0xff]
    %v274 = vld [vmem:[#allocation2 + $0x78] sm:$0xff]
    %v291 = vunpack.c.l.b16 %v259
    %v292 = vunpack.c.h.b16 %v259
    %v293 = vunpack.c.l.b16 %v260
    %v294 = vunpack.c.h.b16 %v260
    %v295 = vunpack.c.l.b16 %v261
    %v296 = vunpack.c.h.b16 %v261
    %v297 = vunpack.c.l.b16 %v262
    %v298 = vunpack.c.h.b16 %v262
    %v299 = vunpack.c.l.b16 %v263
    %v300 = vunpack.c.h.b16 %v263
    %v301 = vunpack.c.l.b16 %v264
    %v302 = vunpack.c.h.b16 %v264
    %v303 = vunpack.c.l.b16 %v265
    %v304 = vunpack.c.h.b16 %v265
    %v305 = vunpack.c.l.b16 %v266
    %v306 = vunpack.c.h.b16 %v266
    %v307 = vunpack.c.l.b16 %v267
    %v308 = vunpack.c.h.b16 %v267
    %v309 = vunpack.c.l.b16 %v268
    %v310 = vunpack.c.h.b16 %v268
    %v311 = vunpack.c.l.b16 %v269
    %v312 = vunpack.c.h.b16 %v269
    %v313 = vunpack.c.l.b16 %v270
    %v314 = vunpack.c.h.b16 %v270
    %v315 = vunpack.c.l.b16 %v271
    %v316 = vunpack.c.h.b16 %v271
    %v317 = vunpack.c.l.b16 %v272
    %v318 = vunpack.c.h.b16 %v272
    %v319 = vunpack.c.l.b16 %v273
    %v320 = vunpack.c.h.b16 %v273
    %v321 = vunpack.c.l.b16 %v274
    %v322 = vunpack.c.h.b16 %v274
    %v323 = vpack.c.b16 %v293, %v291
    %v324 = vpack.c.b16 %v294, %v292
    %v325 = vpack.c.b16 %v297, %v295
    %v326 = vpack.c.b16 %v298, %v296
    %v327 = vpack.c.b16 %v301, %v299
    %v328 = vpack.c.b16 %v302, %v300
    %v329 = vpack.c.b16 %v305, %v303
    %v330 = vpack.c.b16 %v306, %v304
    %v331 = vpack.c.b16 %v309, %v307
    %v332 = vpack.c.b16 %v310, %v308
    %v333 = vpack.c.b16 %v313, %v311
    %v334 = vpack.c.b16 %v314, %v312
    %v335 = vpack.c.b16 %v317, %v315
    %v336 = vpack.c.b16 %v318, %v316
    %v337 = vpack.c.b16 %v321, %v319
    %v338 = vpack.c.b16 %v322, %v320
    %355 = vmatpush.bf16.msra.mxu0 %v337
    %356 = vmatpush.bf16.msra.mxu0 %v335
    %357 = vmatpush.bf16.msra.mxu0 %v333
    %358 = vmatpush.bf16.msra.mxu0 %v331
    %359 = vmatpush.bf16.msra.mxu0 %v329
    %360 = vmatpush.bf16.msra.mxu0 %v327
    %361 = vmatpush.bf16.msra.mxu0 %v325
    %362 = vmatpush.bf16.msra.mxu0 %v323
    %363 = vmatmul.bf16.gmra.mxu0 %v258
    %v364 = vpop.f32.mrf.mxu0
    %v365 = vadd.f32 0.0, %v364
    %v366 = vpop.f32.mrf.mxu0
    %367 = vdwg.mxu0
    %368 = vmatpush.bf16.msra.mxu0 %v338
    %369 = vmatpush.bf16.msra.mxu0 %v336
    %370 = vmatpush.bf16.msra.mxu0 %v334
    %371 = vmatpush.bf16.msra.mxu0 %v332
    %372 = vmatpush.bf16.msra.mxu0 %v330
    %373 = vmatpush.bf16.msra.mxu0 %v328
    %374 = vmatpush.bf16.msra.mxu0 %v326
    %375 = vmatpush.bf16.msra.mxu0 %v324
    %376 = vmatmul.bf16.gmra.mxu0 %v258
    %v377 = vpop.f32.mrf.mxu0
    %v378 = vadd.f32 0.0, %v377
    %v379 = vpop.f32.mrf.mxu0
    %380 = vdwg.mxu0
    %v381 = vld [vmem:[#allocation13 + $0x1] sm:$0x3]
    %v382 = vld [vmem:[#allocation13 + $0x3] sm:$0x3]
    %v383 = vrot.slane %v365, 4
    %v384 = vadd.f32 %v365, %v383
    %v385 = vrot.slane %v384, 2
    %v386 = vadd.f32 %v384, %v385
    %v387 = vrot.slane %v386, 1
    %v388 = vadd.f32 %v386, %v387
    %v389 = vrot.slane %v378, 4
    %v390 = vadd.f32 %v378, %v389
    %v391 = vrot.slane %v390, 2
    %v392 = vadd.f32 %v390, %v391
    %v393 = vrot.slane %v392, 1
    %v394 = vadd.f32 %v392, %v393
    %v395 = vmul.f32 %v365, %v365
    %v396 = vmul.f32 %v378, %v378
    %v397 = vrot.slane %v395, 4
    %v398 = vadd.f32 %v395, %v397
    %v399 = vrot.slane %v398, 2
    %v400 = vadd.f32 %v398, %v399
    %v401 = vrot.slane %v400, 1
    %v402 = vadd.f32 %v400, %v401
    %v403 = vrot.slane %v396, 4
    %v404 = vadd.f32 %v396, %v403
    %v405 = vrot.slane %v404, 2
    %v406 = vadd.f32 %v404, %v405
    %v407 = vrot.slane %v406, 1
    %v408 = vadd.f32 %v406, %v407
    %v409 = vmul.f32 %v388, 0.125
    %v410 = vmul.f32 %v394, 0.125
    %v411 = vmul.f32 %v402, 0.125
    %v412 = vmul.f32 %v408, 0.125
    %v413 = vmul.f32 %v409, %v409
    %v414 = vmul.f32 %v410, %v410
    %v415 = vsub.f32 %v411, %v413
    %v416 = vsub.f32 %v412, %v414
    %v417 = vsub.f32 %v365, %v409
    %v418 = vsub.f32 %v378, %v410
    %v419 = vadd.f32 %v415, 0.8
    %v420 = vadd.f32 %v416, 0.8
    %v421 = vrsqrt.pop %v419
    %v422 = vmul.f32 %v421, %v419
    %v423 = vmul.f32 %v422, %v421
    %v424 = vmul.f32 0.5, %v423
    %v425 = vsub.f32 1.5, %v424
    %v426 = vmul.f32 %v421, %v425
    %vm427 = vweird.f32 %v419
    %vm428 = vweird.f32 %v421
    %vm429 = vmor %vm427, %vm428
    %v430 = vsel %vm429, %v421, %v426
    %v431 = vrsqrt.pop %v420
    %v432 = vmul.f32 %v431, %v420
    %v433 = vmul.f32 %v432, %v431
    %v434 = vmul.f32 0.5, %v433
    %v435 = vsub.f32 1.5, %v434
    %v436 = vmul.f32 %v431, %v435
    %vm437 = vweird.f32 %v420
    %vm438 = vweird.f32 %v431
    %vm439 = vmor %vm437, %vm438
    %v440 = vsel %vm439, %v431, %v436
    %v441 = vmul.f32 %v417, %v430
    %v442 = vmul.f32 %v418, %v440
    %v444 = vperm.slane %v381, 0
    %v445 = vperm.slane %v381, 1
    %v448 = vmul.f32 %v441, %v444
    %v449 = vmul.f32 %v442, %v445
    %v451 = vperm.slane %v382, 0
    %v452 = vperm.slane %v382, 1
    %v455 = vadd.f32 %v448, %v451
    %v456 = vadd.f32 %v449, %v452
    %v457 = vmul.f32 %v455, 0.2
    %v458 = vmul.f32 %v456, 0.2
    %v459 = vmax.f32 %v455, %v457
    %v460 = vmax.f32 %v456, %v458
    %s461 = smul.u32 4, 32
    %s462 = smul.u32 %s461, 4
    %s463 = sshll.u32 %s462, 4
    %464 = dma.done %s76, %s463
    %v465 = vpack.c.bf16 %v459, %v459
    %v466 = vpack.c.bf16 %v460, %v460
    %v467 = vld [vmem:[#allocation3] sm:$0xff]
    %v468 = vld [vmem:[#allocation3 + $0x8] sm:$0xff]
    %v469 = vld [vmem:[#allocation3 + $0x10] sm:$0xff]
    %v470 = vld [vmem:[#allocation3 + $0x18] sm:$0xff]
    %v471 = vld [vmem:[#allocation3 + $0x20] sm:$0xff]
    %v472 = vld [vmem:[#allocation3 + $0x28] sm:$0xff]
    %v473 = vld [vmem:[#allocation3 + $0x30] sm:$0xff]
    %v474 = vld [vmem:[#allocation3 + $0x38] sm:$0xff]
    %v475 = vld [vmem:[#allocation3 + $0x40] sm:$0xff]
    %v476 = vld [vmem:[#allocation3 + $0x48] sm:$0xff]
    %v477 = vld [vmem:[#allocation3 + $0x50] sm:$0xff]
    %v478 = vld [vmem:[#allocation3 + $0x58] sm:$0xff]
    %v479 = vld [vmem:[#allocation3 + $0x60] sm:$0xff]
    %v480 = vld [vmem:[#allocation3 + $0x68] sm:$0xff]
    %v481 = vld [vmem:[#allocation3 + $0x70] sm:$0xff]
    %v482 = vld [vmem:[#allocation3 + $0x78] sm:$0xff]
    %v483 = vld [vmem:[#allocation3 + $0x80] sm:$0xff]
    %v484 = vld [vmem:[#allocation3 + $0x88] sm:$0xff]
    %v485 = vld [vmem:[#allocation3 + $0x90] sm:$0xff]
    %v486 = vld [vmem:[#allocation3 + $0x98] sm:$0xff]
    %v487 = vld [vmem:[#allocation3 + $0xa0] sm:$0xff]
    %v488 = vld [vmem:[#allocation3 + $0xa8] sm:$0xff]
    %v489 = vld [vmem:[#allocation3 + $0xb0] sm:$0xff]
    %v490 = vld [vmem:[#allocation3 + $0xb8] sm:$0xff]
    %v491 = vld [vmem:[#allocation3 + $0xc0] sm:$0xff]
    %v492 = vld [vmem:[#allocation3 + $0xc8] sm:$0xff]
    %v493 = vld [vmem:[#allocation3 + $0xd0] sm:$0xff]
    %v494 = vld [vmem:[#allocation3 + $0xd8] sm:$0xff]
    %v495 = vld [vmem:[#allocation3 + $0xe0] sm:$0xff]
    %v496 = vld [vmem:[#allocation3 + $0xe8] sm:$0xff]
    %v497 = vld [vmem:[#allocation3 + $0xf0] sm:$0xff]
    %v498 = vld [vmem:[#allocation3 + $0xf8] sm:$0xff]
    %v499 = vld [vmem:[#allocation3 + $0x100] sm:$0xff]
    %v500 = vld [vmem:[#allocation3 + $0x108] sm:$0xff]
    %v501 = vld [vmem:[#allocation3 + $0x110] sm:$0xff]
    %v502 = vld [vmem:[#allocation3 + $0x118] sm:$0xff]
    %v503 = vld [vmem:[#allocation3 + $0x120] sm:$0xff]
    %v504 = vld [vmem:[#allocation3 + $0x128] sm:$0xff]
    %v505 = vld [vmem:[#allocation3 + $0x130] sm:$0xff]
    %v506 = vld [vmem:[#allocation3 + $0x138] sm:$0xff]
    %v507 = vld [vmem:[#allocation3 + $0x140] sm:$0xff]
    %v508 = vld [vmem:[#allocation3 + $0x148] sm:$0xff]
    %v509 = vld [vmem:[#allocation3 + $0x150] sm:$0xff]
    %v510 = vld [vmem:[#allocation3 + $0x158] sm:$0xff]
    %v511 = vld [vmem:[#allocation3 + $0x160] sm:$0xff]
    %v512 = vld [vmem:[#allocation3 + $0x168] sm:$0xff]
    %v513 = vld [vmem:[#allocation3 + $0x170] sm:$0xff]
    %v514 = vld [vmem:[#allocation3 + $0x178] sm:$0xff]
    %v515 = vld [vmem:[#allocation3 + $0x180] sm:$0xff]
    %v516 = vld [vmem:[#allocation3 + $0x188] sm:$0xff]
    %v517 = vld [vmem:[#allocation3 + $0x190] sm:$0xff]
    %v518 = vld [vmem:[#allocation3 + $0x198] sm:$0xff]
    %v519 = vld [vmem:[#allocation3 + $0x1a0] sm:$0xff]
    %v520 = vld [vmem:[#allocation3 + $0x1a8] sm:$0xff]
    %v521 = vld [vmem:[#allocation3 + $0x1b0] sm:$0xff]
    %v522 = vld [vmem:[#allocation3 + $0x1b8] sm:$0xff]
    %v523 = vld [vmem:[#allocation3 + $0x1c0] sm:$0xff]
    %v524 = vld [vmem:[#allocation3 + $0x1c8] sm:$0xff]
    %v525 = vld [vmem:[#allocation3 + $0x1d0] sm:$0xff]
    %v526 = vld [vmem:[#allocation3 + $0x1d8] sm:$0xff]
    %v527 = vld [vmem:[#allocation3 + $0x1e0] sm:$0xff]
    %v528 = vld [vmem:[#allocation3 + $0x1e8] sm:$0xff]
    %v529 = vld [vmem:[#allocation3 + $0x1f0] sm:$0xff]
    %v530 = vld [vmem:[#allocation3 + $0x1f8] sm:$0xff]
    %v595 = vunpack.c.l.b16 %v467
    %v596 = vunpack.c.h.b16 %v467
    %v597 = vunpack.c.l.b16 %v468
    %v598 = vunpack.c.h.b16 %v468
    %v599 = vunpack.c.l.b16 %v469
    %v600 = vunpack.c.h.b16 %v469
    %v601 = vunpack.c.l.b16 %v470
    %v602 = vunpack.c.h.b16 %v470
    %v603 = vunpack.c.l.b16 %v471
    %v604 = vunpack.c.h.b16 %v471
    %v605 = vunpack.c.l.b16 %v472
    %v606 = vunpack.c.h.b16 %v472
    %v607 = vunpack.c.l.b16 %v473
    %v608 = vunpack.c.h.b16 %v473
    %v609 = vunpack.c.l.b16 %v474
    %v610 = vunpack.c.h.b16 %v474
    %v611 = vunpack.c.l.b16 %v475
    %v612 = vunpack.c.h.b16 %v475
    %v613 = vunpack.c.l.b16 %v476
    %v614 = vunpack.c.h.b16 %v476
    %v615 = vunpack.c.l.b16 %v477
    %v616 = vunpack.c.h.b16 %v477
    %v617 = vunpack.c.l.b16 %v478
    %v618 = vunpack.c.h.b16 %v478
    %v619 = vunpack.c.l.b16 %v479
    %v620 = vunpack.c.h.b16 %v479
    %v621 = vunpack.c.l.b16 %v480
    %v622 = vunpack.c.h.b16 %v480
    %v623 = vunpack.c.l.b16 %v481
    %v624 = vunpack.c.h.b16 %v481
    %v625 = vunpack.c.l.b16 %v482
    %v626 = vunpack.c.h.b16 %v482
    %v627 = vunpack.c.l.b16 %v483
    %v628 = vunpack.c.h.b16 %v483
    %v629 = vunpack.c.l.b16 %v484
    %v630 = vunpack.c.h.b16 %v484
    %v631 = vunpack.c.l.b16 %v485
    %v632 = vunpack.c.h.b16 %v485
    %v633 = vunpack.c.l.b16 %v486
    %v634 = vunpack.c.h.b16 %v486
    %v635 = vunpack.c.l.b16 %v487
    %v636 = vunpack.c.h.b16 %v487
    %v637 = vunpack.c.l.b16 %v488
    %v638 = vunpack.c.h.b16 %v488
    %v639 = vunpack.c.l.b16 %v489
    %v640 = vunpack.c.h.b16 %v489
    %v641 = vunpack.c.l.b16 %v490
    %v642 = vunpack.c.h.b16 %v490
    %v643 = vunpack.c.l.b16 %v491
    %v644 = vunpack.c.h.b16 %v491
    %v645 = vunpack.c.l.b16 %v492
    %v646 = vunpack.c.h.b16 %v492
    %v647 = vunpack.c.l.b16 %v493
    %v648 = vunpack.c.h.b16 %v493
    %v649 = vunpack.c.l.b16 %v494
    %v650 = vunpack.c.h.b16 %v494
    %v651 = vunpack.c.l.b16 %v495
    %v652 = vunpack.c.h.b16 %v495
    %v653 = vunpack.c.l.b16 %v496
    %v654 = vunpack.c.h.b16 %v496
    %v655 = vunpack.c.l.b16 %v497
    %v656 = vunpack.c.h.b16 %v497
    %v657 = vunpack.c.l.b16 %v498
    %v658 = vunpack.c.h.b16 %v498
    %v659 = vunpack.c.l.b16 %v499
    %v660 = vunpack.c.h.b16 %v499
    %v661 = vunpack.c.l.b16 %v500
    %v662 = vunpack.c.h.b16 %v500
    %v663 = vunpack.c.l.b16 %v501
    %v664 = vunpack.c.h.b16 %v501
    %v665 = vunpack.c.l.b16 %v502
    %v666 = vunpack.c.h.b16 %v502
    %v667 = vunpack.c.l.b16 %v503
    %v668 = vunpack.c.h.b16 %v503
    %v669 = vunpack.c.l.b16 %v504
    %v670 = vunpack.c.h.b16 %v504
    %v671 = vunpack.c.l.b16 %v505
    %v672 = vunpack.c.h.b16 %v505
    %v673 = vunpack.c.l.b16 %v506
    %v674 = vunpack.c.h.b16 %v506
    %v675 = vunpack.c.l.b16 %v507
    %v676 = vunpack.c.h.b16 %v507
    %v677 = vunpack.c.l.b16 %v508
    %v678 = vunpack.c.h.b16 %v508
    %v679 = vunpack.c.l.b16 %v509
    %v680 = vunpack.c.h.b16 %v509
    %v681 = vunpack.c.l.b16 %v510
    %v682 = vunpack.c.h.b16 %v510
    %v683 = vunpack.c.l.b16 %v511
    %v684 = vunpack.c.h.b16 %v511
    %v685 = vunpack.c.l.b16 %v512
    %v686 = vunpack.c.h.b16 %v512
    %v687 = vunpack.c.l.b16 %v513
    %v688 = vunpack.c.h.b16 %v513
    %v689 = vunpack.c.l.b16 %v514
    %v690 = vunpack.c.h.b16 %v514
    %v691 = vunpack.c.l.b16 %v515
    %v692 = vunpack.c.h.b16 %v515
    %v693 = vunpack.c.l.b16 %v516
    %v694 = vunpack.c.h.b16 %v516
    %v695 = vunpack.c.l.b16 %v517
    %v696 = vunpack.c.h.b16 %v517
    %v697 = vunpack.c.l.b16 %v518
    %v698 = vunpack.c.h.b16 %v518
    %v699 = vunpack.c.l.b16 %v519
    %v700 = vunpack.c.h.b16 %v519
    %v701 = vunpack.c.l.b16 %v520
    %v702 = vunpack.c.h.b16 %v520
    %v703 = vunpack.c.l.b16 %v521
    %v704 = vunpack.c.h.b16 %v521
    %v705 = vunpack.c.l.b16 %v522
    %v706 = vunpack.c.h.b16 %v522
    %v707 = vunpack.c.l.b16 %v523
    %v708 = vunpack.c.h.b16 %v523
    %v709 = vunpack.c.l.b16 %v524
    %v710 = vunpack.c.h.b16 %v524
    %v711 = vunpack.c.l.b16 %v525
    %v712 = vunpack.c.h.b16 %v525
    %v713 = vunpack.c.l.b16 %v526
    %v714 = vunpack.c.h.b16 %v526
    %v715 = vunpack.c.l.b16 %v527
    %v716 = vunpack.c.h.b16 %v527
    %v717 = vunpack.c.l.b16 %v528
    %v718 = vunpack.c.h.b16 %v528
    %v719 = vunpack.c.l.b16 %v529
    %v720 = vunpack.c.h.b16 %v529
    %v721 = vunpack.c.l.b16 %v530
    %v722 = vunpack.c.h.b16 %v530
    %v723 = vpack.c.b16 %v599, %v595
    %v724 = vpack.c.b16 %v600, %v596
    %v725 = vpack.c.b16 %v601, %v597
    %v726 = vpack.c.b16 %v602, %v598
    %v727 = vpack.c.b16 %v607, %v603
    %v728 = vpack.c.b16 %v608, %v604
    %v729 = vpack.c.b16 %v609, %v605
    %v730 = vpack.c.b16 %v610, %v606
    %v731 = vpack.c.b16 %v615, %v611
    %v732 = vpack.c.b16 %v616, %v612
    %v733 = vpack.c.b16 %v617, %v613
    %v734 = vpack.c.b16 %v618, %v614
    %v735 = vpack.c.b16 %v623, %v619
    %v736 = vpack.c.b16 %v624, %v620
    %v737 = vpack.c.b16 %v625, %v621
    %v738 = vpack.c.b16 %v626, %v622
    %v739 = vpack.c.b16 %v631, %v627
    %v740 = vpack.c.b16 %v632, %v628
    %v741 = vpack.c.b16 %v633, %v629
    %v742 = vpack.c.b16 %v634, %v630
    %v743 = vpack.c.b16 %v639, %v635
    %v744 = vpack.c.b16 %v640, %v636
    %v745 = vpack.c.b16 %v641, %v637
    %v746 = vpack.c.b16 %v642, %v638
    %v747 = vpack.c.b16 %v647, %v643
    %v748 = vpack.c.b16 %v648, %v644
    %v749 = vpack.c.b16 %v649, %v645
    %v750 = vpack.c.b16 %v650, %v646
    %v751 = vpack.c.b16 %v655, %v651
    %v752 = vpack.c.b16 %v656, %v652
    %v753 = vpack.c.b16 %v657, %v653
    %v754 = vpack.c.b16 %v658, %v654
    %v755 = vpack.c.b16 %v663, %v659
    %v756 = vpack.c.b16 %v664, %v660
    %v757 = vpack.c.b16 %v665, %v661
    %v758 = vpack.c.b16 %v666, %v662
    %v759 = vpack.c.b16 %v671, %v667
    %v760 = vpack.c.b16 %v672, %v668
    %v761 = vpack.c.b16 %v673, %v669
    %v762 = vpack.c.b16 %v674, %v670
    %v763 = vpack.c.b16 %v679, %v675
    %v764 = vpack.c.b16 %v680, %v676
    %v765 = vpack.c.b16 %v681, %v677
    %v766 = vpack.c.b16 %v682, %v678
    %v767 = vpack.c.b16 %v687, %v683
    %v768 = vpack.c.b16 %v688, %v684
    %v769 = vpack.c.b16 %v689, %v685
    %v770 = vpack.c.b16 %v690, %v686
    %v771 = vpack.c.b16 %v695, %v691
    %v772 = vpack.c.b16 %v696, %v692
    %v773 = vpack.c.b16 %v697, %v693
    %v774 = vpack.c.b16 %v698, %v694
    %v775 = vpack.c.b16 %v703, %v699
    %v776 = vpack.c.b16 %v704, %v700
    %v777 = vpack.c.b16 %v705, %v701
    %v778 = vpack.c.b16 %v706, %v702
    %v779 = vpack.c.b16 %v711, %v707
    %v780 = vpack.c.b16 %v712, %v708
    %v781 = vpack.c.b16 %v713, %v709
    %v782 = vpack.c.b16 %v714, %v710
    %v783 = vpack.c.b16 %v719, %v715
    %v784 = vpack.c.b16 %v720, %v716
    %v785 = vpack.c.b16 %v721, %v717
    %v786 = vpack.c.b16 %v722, %v718
    %851 = vmatpush.bf16.msra.mxu0 %v751
    %852 = vmatpush.bf16.msra.mxu0 %v747
    %853 = vmatpush.bf16.msra.mxu0 %v743
    %854 = vmatpush.bf16.msra.mxu0 %v739
    %855 = vmatpush.bf16.msra.mxu0 %v735
    %856 = vmatpush.bf16.msra.mxu0 %v731
    %857 = vmatpush.bf16.msra.mxu0 %v727
    %858 = vmatpush.bf16.msra.mxu0 %v723
    %859 = vmatmul.bf16.gmra.mxu0 %v465
    %v860 = vpop.f32.mrf.mxu0
    %v861 = vadd.f32 0.0, %v860
    %v862 = vpop.f32.mrf.mxu0
    %863 = vdwg.mxu0
    %864 = vmatpush.bf16.msra.mxu0 %v783
    %865 = vmatpush.bf16.msra.mxu0 %v779
    %866 = vmatpush.bf16.msra.mxu0 %v775
    %867 = vmatpush.bf16.msra.mxu0 %v771
    %868 = vmatpush.bf16.msra.mxu0 %v767
    %869 = vmatpush.bf16.msra.mxu0 %v763
    %870 = vmatpush.bf16.msra.mxu0 %v759
    %871 = vmatpush.bf16.msra.mxu0 %v755
    %872 = vmatmul.bf16.gmra.mxu0 %v466
    %v873 = vpop.f32.mrf.mxu0
    %v874 = vadd.f32 %v861, %v873
    %v875 = vpop.f32.mrf.mxu0
    %876 = vdwg.mxu0
    %877 = vmatpush.bf16.msra.mxu0 %v752
    %878 = vmatpush.bf16.msra.mxu0 %v748
    %879 = vmatpush.bf16.msra.mxu0 %v744
    %880 = vmatpush.bf16.msra.mxu0 %v740
    %881 = vmatpush.bf16.msra.mxu0 %v736
    %882 = vmatpush.bf16.msra.mxu0 %v732
    %883 = vmatpush.bf16.msra.mxu0 %v728
    %884 = vmatpush.bf16.msra.mxu0 %v724
    %885 = vmatmul.bf16.gmra.mxu0 %v465
    %v886 = vpop.f32.mrf.mxu0
    %v887 = vadd.f32 0.0, %v886
    %v888 = vpop.f32.mrf.mxu0
    %889 = vdwg.mxu0
    %890 = vmatpush.bf16.msra.mxu0 %v784
    %891 = vmatpush.bf16.msra.mxu0 %v780
    %892 = vmatpush.bf16.msra.mxu0 %v776
    %893 = vmatpush.bf16.msra.mxu0 %v772
    %894 = vmatpush.bf16.msra.mxu0 %v768
    %895 = vmatpush.bf16.msra.mxu0 %v764
    %896 = vmatpush.bf16.msra.mxu0 %v760
    %897 = vmatpush.bf16.msra.mxu0 %v756
    %898 = vmatmul.bf16.gmra.mxu0 %v466
    %v899 = vpop.f32.mrf.mxu0
    %v900 = vadd.f32 %v887, %v899
    %v901 = vpop.f32.mrf.mxu0
    %902 = vdwg.mxu0
    %903 = vmatpush.bf16.msra.mxu0 %v753
    %904 = vmatpush.bf16.msra.mxu0 %v749
    %905 = vmatpush.bf16.msra.mxu0 %v745
    %906 = vmatpush.bf16.msra.mxu0 %v741
    %907 = vmatpush.bf16.msra.mxu0 %v737
    %908 = vmatpush.bf16.msra.mxu0 %v733
    %909 = vmatpush.bf16.msra.mxu0 %v729
    %910 = vmatpush.bf16.msra.mxu0 %v725
    %911 = vmatmul.bf16.gmra.mxu0 %v465
    %v912 = vpop.f32.mrf.mxu0
    %v913 = vadd.f32 0.0, %v912
    %v914 = vpop.f32.mrf.mxu0
    %915 = vdwg.mxu0
    %916 = vmatpush.bf16.msra.mxu0 %v785
    %917 = vmatpush.bf16.msra.mxu0 %v781
    %918 = vmatpush.bf16.msra.mxu0 %v777
    %919 = vmatpush.bf16.msra.mxu0 %v773
    %920 = vmatpush.bf16.msra.mxu0 %v769
    %921 = vmatpush.bf16.msra.mxu0 %v765
    %922 = vmatpush.bf16.msra.mxu0 %v761
    %923 = vmatpush.bf16.msra.mxu0 %v757
    %924 = vmatmul.bf16.gmra.mxu0 %v466
    %v925 = vpop.f32.mrf.mxu0
    %v926 = vadd.f32 %v913, %v925
    %v927 = vpop.f32.mrf.mxu0
    %928 = vdwg.mxu0
    %929 = vmatpush.bf16.msra.mxu0 %v754
    %930 = vmatpush.bf16.msra.mxu0 %v750
    %931 = vmatpush.bf16.msra.mxu0 %v746
    %932 = vmatpush.bf16.msra.mxu0 %v742
    %933 = vmatpush.bf16.msra.mxu0 %v738
    %934 = vmatpush.bf16.msra.mxu0 %v734
    %935 = vmatpush.bf16.msra.mxu0 %v730
    %936 = vmatpush.bf16.msra.mxu0 %v726
    %937 = vmatmul.bf16.gmra.mxu0 %v465
    %v938 = vpop.f32.mrf.mxu0
    %v939 = vadd.f32 0.0, %v938
    %v940 = vpop.f32.mrf.mxu0
    %941 = vdwg.mxu0
    %942 = vmatpush.bf16.msra.mxu0 %v786
    %943 = vmatpush.bf16.msra.mxu0 %v782
    %944 = vmatpush.bf16.msra.mxu0 %v778
    %945 = vmatpush.bf16.msra.mxu0 %v774
    %946 = vmatpush.bf16.msra.mxu0 %v770
    %947 = vmatpush.bf16.msra.mxu0 %v766
    %948 = vmatpush.bf16.msra.mxu0 %v762
    %949 = vmatpush.bf16.msra.mxu0 %v758
    %950 = vmatmul.bf16.gmra.mxu0 %v466
    %v951 = vpop.f32.mrf.mxu0
    %v952 = vadd.f32 %v939, %v951
    %v953 = vpop.f32.mrf.mxu0
    %954 = vdwg.mxu0
    %v955 = vld [vmem:[#allocation13 + $0x5] sm:$0xf]
    %v956 = vld [vmem:[#allocation13 + $0x9] sm:$0xf]
    %v957 = vrot.slane %v874, 4
    %v958 = vadd.f32 %v874, %v957
    %v959 = vrot.slane %v958, 2
    %v960 = vadd.f32 %v958, %v959
    %v961 = vrot.slane %v960, 1
    %v962 = vadd.f32 %v960, %v961
    %v963 = vrot.slane %v900, 4
    %v964 = vadd.f32 %v900, %v963
    %v965 = vrot.slane %v964, 2
    %v966 = vadd.f32 %v964, %v965
    %v967 = vrot.slane %v966, 1
    %v968 = vadd.f32 %v966, %v967
    %v969 = vrot.slane %v926, 4
    %v970 = vadd.f32 %v926, %v969
    %v971 = vrot.slane %v970, 2
    %v972 = vadd.f32 %v970, %v971
    %v973 = vrot.slane %v972, 1
    %v974 = vadd.f32 %v972, %v973
    %v975 = vrot.slane %v952, 4
    %v976 = vadd.f32 %v952, %v975
    %v977 = vrot.slane %v976, 2
    %v978 = vadd.f32 %v976, %v977
    %v979 = vrot.slane %v978, 1
    %v980 = vadd.f32 %v978, %v979
    %v981 = vmul.f32 %v874, %v874
    %v982 = vmul.f32 %v900, %v900
    %v983 = vmul.f32 %v926, %v926
    %v984 = vmul.f32 %v952, %v952
    %v985 = vrot.slane %v981, 4
    %v986 = vadd.f32 %v981, %v985
    %v987 = vrot.slane %v986, 2
    %v988 = vadd.f32 %v986, %v987
    %v989 = vrot.slane %v988, 1
    %v990 = vadd.f32 %v988, %v989
    %v991 = vrot.slane %v982, 4
    %v992 = vadd.f32 %v982, %v991
    %v993 = vrot.slane %v992, 2
    %v994 = vadd.f32 %v992, %v993
    %v995 = vrot.slane %v994, 1
    %v996 = vadd.f32 %v994, %v995
    %v997 = vrot.slane %v983, 4
    %v998 = vadd.f32 %v983, %v997
    %v999 = vrot.slane %v998, 2
    %v1000 = vadd.f32 %v998, %v999
    %v1001 = vrot.slane %v1000, 1
    %v1002 = vadd.f32 %v1000, %v1001
    %v1003 = vrot.slane %v984, 4
    %v1004 = vadd.f32 %v984, %v1003
    %v1005 = vrot.slane %v1004, 2
    %v1006 = vadd.f32 %v1004, %v1005
    %v1007 = vrot.slane %v1006, 1
    %v1008 = vadd.f32 %v1006, %v1007
    %v1009 = vmul.f32 %v962, 0.125
    %v1010 = vmul.f32 %v968, 0.125
    %v1011 = vmul.f32 %v974, 0.125
    %v1012 = vmul.f32 %v980, 0.125
    %v1013 = vmul.f32 %v990, 0.125
    %v1014 = vmul.f32 %v996, 0.125
    %v1015 = vmul.f32 %v1002, 0.125
    %v1016 = vmul.f32 %v1008, 0.125
    %v1017 = vmul.f32 %v1009, %v1009
    %v1018 = vmul.f32 %v1010, %v1010
    %v1019 = vmul.f32 %v1011, %v1011
    %v1020 = vmul.f32 %v1012, %v1012
    %v1021 = vsub.f32 %v1013, %v1017
    %v1022 = vsub.f32 %v1014, %v1018
    %v1023 = vsub.f32 %v1015, %v1019
    %v1024 = vsub.f32 %v1016, %v1020
    %v1025 = vsub.f32 %v874, %v1009
    %v1026 = vsub.f32 %v900, %v1010
    %v1027 = vsub.f32 %v926, %v1011
    %v1028 = vsub.f32 %v952, %v1012
    %v1029 = vadd.f32 %v1021, 0.8
    %v1030 = vadd.f32 %v1022, 0.8
    %v1031 = vadd.f32 %v1023, 0.8
    %v1032 = vadd.f32 %v1024, 0.8
    %v1033 = vrsqrt.pop %v1029
    %v1034 = vmul.f32 %v1033, %v1029
    %v1035 = vmul.f32 %v1034, %v1033
    %v1036 = vmul.f32 0.5, %v1035
    %v1037 = vsub.f32 1.5, %v1036
    %v1038 = vmul.f32 %v1033, %v1037
    %vm1039 = vweird.f32 %v1029
    %vm1040 = vweird.f32 %v1033
    %vm1041 = vmor %vm1039, %vm1040
    %v1042 = vsel %vm1041, %v1033, %v1038
    %v1043 = vrsqrt.pop %v1030
    %v1044 = vmul.f32 %v1043, %v1030
    %v1045 = vmul.f32 %v1044, %v1043
    %v1046 = vmul.f32 0.5, %v1045
    %v1047 = vsub.f32 1.5, %v1046
    %v1048 = vmul.f32 %v1043, %v1047
    %vm1049 = vweird.f32 %v1030
    %vm1050 = vweird.f32 %v1043
    %vm1051 = vmor %vm1049, %vm1050
    %v1052 = vsel %vm1051, %v1043, %v1048
    %v1053 = vrsqrt.pop %v1031
    %v1054 = vmul.f32 %v1053, %v1031
    %v1055 = vmul.f32 %v1054, %v1053
    %v1056 = vmul.f32 0.5, %v1055
    %v1057 = vsub.f32 1.5, %v1056
    %v1058 = vmul.f32 %v1053, %v1057
    %vm1059 = vweird.f32 %v1031
    %vm1060 = vweird.f32 %v1053
    %vm1061 = vmor %vm1059, %vm1060
    %v1062 = vsel %vm1061, %v1053, %v1058
    %v1063 = vrsqrt.pop %v1032
    %v1064 = vmul.f32 %v1063, %v1032
    %v1065 = vmul.f32 %v1064, %v1063
    %v1066 = vmul.f32 0.5, %v1065
    %v1067 = vsub.f32 1.5, %v1066
    %v1068 = vmul.f32 %v1063, %v1067
    %vm1069 = vweird.f32 %v1032
    %vm1070 = vweird.f32 %v1063
    %vm1071 = vmor %vm1069, %vm1070
    %v1072 = vsel %vm1071, %v1063, %v1068
    %v1073 = vmul.f32 %v1025, %v1042
    %v1074 = vmul.f32 %v1026, %v1052
    %v1075 = vmul.f32 %v1027, %v1062
    %v1076 = vmul.f32 %v1028, %v1072
    %v1078 = vperm.slane %v955, 0
    %v1079 = vperm.slane %v955, 1
    %v1080 = vperm.slane %v955, 2
    %v1081 = vperm.slane %v955, 3
    %v1086 = vmul.f32 %v1073, %v1078
    %v1087 = vmul.f32 %v1074, %v1079
    %v1088 = vmul.f32 %v1075, %v1080
    %v1089 = vmul.f32 %v1076, %v1081
    %v1091 = vperm.slane %v956, 0
    %v1092 = vperm.slane %v956, 1
    %v1093 = vperm.slane %v956, 2
    %v1094 = vperm.slane %v956, 3
    %v1099 = vadd.f32 %v1086, %v1091
    %v1100 = vadd.f32 %v1087, %v1092
    %v1101 = vadd.f32 %v1088, %v1093
    %v1102 = vadd.f32 %v1089, %v1094
    %v1103 = vmul.f32 %v1099, 0.2
    %v1104 = vmul.f32 %v1100, 0.2
    %v1105 = vmul.f32 %v1101, 0.2
    %v1106 = vmul.f32 %v1102, 0.2
    %v1107 = vmax.f32 %v1099, %v1103
    %v1108 = vmax.f32 %v1100, %v1104
    %v1109 = vmax.f32 %v1101, %v1105
    %v1110 = vmax.f32 %v1102, %v1106
    %v1111 = vpack.c.bf16 %v1107, %v1107
    %v1112 = vpack.c.bf16 %v1108, %v1108
    %v1113 = vpack.c.bf16 %v1109, %v1109
    %v1114 = vpack.c.bf16 %v1110, %v1110
    %s1115 = smul.u32 4, 64
    %s1116 = smul.u32 %s1115, 2
    %s1117 = sshll.u32 %s1116, 4
    %1118 = dma.done [#allocation7], %s1117
    %v1119 = vld [vmem:[#allocation4] sm:$0xff]
    %v1120 = vld [vmem:[#allocation4 + $0x8] sm:$0xff]
    %v1121 = vld [vmem:[#allocation4 + $0x10] sm:$0xff]
    %v1122 = vld [vmem:[#allocation4 + $0x18] sm:$0xff]
    %v1123 = vld [vmem:[#allocation4 + $0x20] sm:$0xff]
    %v1124 = vld [vmem:[#allocation4 + $0x28] sm:$0xff]
    %v1125 = vld [vmem:[#allocation4 + $0x30] sm:$0xff]
    %v1126 = vld [vmem:[#allocation4 + $0x38] sm:$0xff]
    %v1127 = vld [vmem:[#allocation4 + $0x40] sm:$0xff]
    %v1128 = vld [vmem:[#allocation4 + $0x48] sm:$0xff]
    %v1129 = vld [vmem:[#allocation4 + $0x50] sm:$0xff]
    %v1130 = vld [vmem:[#allocation4 + $0x58] sm:$0xff]
    %v1131 = vld [vmem:[#allocation4 + $0x60] sm:$0xff]
    %v1132 = vld [vmem:[#allocation4 + $0x68] sm:$0xff]
    %v1133 = vld [vmem:[#allocation4 + $0x70] sm:$0xff]
    %v1134 = vld [vmem:[#allocation4 + $0x78] sm:$0xff]
    %v1135 = vld [vmem:[#allocation4 + $0x80] sm:$0xff]
    %v1136 = vld [vmem:[#allocation4 + $0x88] sm:$0xff]
    %v1137 = vld [vmem:[#allocation4 + $0x90] sm:$0xff]
    %v1138 = vld [vmem:[#allocation4 + $0x98] sm:$0xff]
    %v1139 = vld [vmem:[#allocation4 + $0xa0] sm:$0xff]
    %v1140 = vld [vmem:[#allocation4 + $0xa8] sm:$0xff]
    %v1141 = vld [vmem:[#allocation4 + $0xb0] sm:$0xff]
    %v1142 = vld [vmem:[#allocation4 + $0xb8] sm:$0xff]
    %v1143 = vld [vmem:[#allocation4 + $0xc0] sm:$0xff]
    %v1144 = vld [vmem:[#allocation4 + $0xc8] sm:$0xff]
    %v1145 = vld [vmem:[#allocation4 + $0xd0] sm:$0xff]
    %v1146 = vld [vmem:[#allocation4 + $0xd8] sm:$0xff]
    %v1147 = vld [vmem:[#allocation4 + $0xe0] sm:$0xff]
    %v1148 = vld [vmem:[#allocation4 + $0xe8] sm:$0xff]
    %v1149 = vld [vmem:[#allocation4 + $0xf0] sm:$0xff]
    %v1150 = vld [vmem:[#allocation4 + $0xf8] sm:$0xff]
    %v1151 = vld [vmem:[#allocation4 + $0x100] sm:$0xff]
    %v1152 = vld [vmem:[#allocation4 + $0x108] sm:$0xff]
    %v1153 = vld [vmem:[#allocation4 + $0x110] sm:$0xff]
    %v1154 = vld [vmem:[#allocation4 + $0x118] sm:$0xff]
    %v1155 = vld [vmem:[#allocation4 + $0x120] sm:$0xff]
    %v1156 = vld [vmem:[#allocation4 + $0x128] sm:$0xff]
    %v1157 = vld [vmem:[#allocation4 + $0x130] sm:$0xff]
    %v1158 = vld [vmem:[#allocation4 + $0x138] sm:$0xff]
    %v1159 = vld [vmem:[#allocation4 + $0x140] sm:$0xff]
    %v1160 = vld [vmem:[#allocation4 + $0x148] sm:$0xff]
    %v1161 = vld [vmem:[#allocation4 + $0x150] sm:$0xff]
    %v1162 = vld [vmem:[#allocation4 + $0x158] sm:$0xff]
    %v1163 = vld [vmem:[#allocation4 + $0x160] sm:$0xff]
    %v1164 = vld [vmem:[#allocation4 + $0x168] sm:$0xff]
    %v1165 = vld [vmem:[#allocation4 + $0x170] sm:$0xff]
    %v1166 = vld [vmem:[#allocation4 + $0x178] sm:$0xff]
    %v1167 = vld [vmem:[#allocation4 + $0x180] sm:$0xff]
    %v1168 = vld [vmem:[#allocation4 + $0x188] sm:$0xff]
    %v1169 = vld [vmem:[#allocation4 + $0x190] sm:$0xff]
    %v1170 = vld [vmem:[#allocation4 + $0x198] sm:$0xff]
    %v1171 = vld [vmem:[#allocation4 + $0x1a0] sm:$0xff]
    %v1172 = vld [vmem:[#allocation4 + $0x1a8] sm:$0xff]
    %v1173 = vld [vmem:[#allocation4 + $0x1b0] sm:$0xff]
    %v1174 = vld [vmem:[#allocation4 + $0x1b8] sm:$0xff]
    %v1175 = vld [vmem:[#allocation4 + $0x1c0] sm:$0xff]
    %v1176 = vld [vmem:[#allocation4 + $0x1c8] sm:$0xff]
    %v1177 = vld [vmem:[#allocation4 + $0x1d0] sm:$0xff]
    %v1178 = vld [vmem:[#allocation4 + $0x1d8] sm:$0xff]
    %v1179 = vld [vmem:[#allocation4 + $0x1e0] sm:$0xff]
    %v1180 = vld [vmem:[#allocation4 + $0x1e8] sm:$0xff]
    %v1181 = vld [vmem:[#allocation4 + $0x1f0] sm:$0xff]
    %v1182 = vld [vmem:[#allocation4 + $0x1f8] sm:$0xff]
    %v1247 = vunpack.c.l.b16 %v1119
    %v1248 = vunpack.c.h.b16 %v1119
    %v1249 = vunpack.c.l.b16 %v1120
    %v1250 = vunpack.c.h.b16 %v1120
    %v1251 = vunpack.c.l.b16 %v1121
    %v1252 = vunpack.c.h.b16 %v1121
    %v1253 = vunpack.c.l.b16 %v1122
    %v1254 = vunpack.c.h.b16 %v1122
    %v1255 = vunpack.c.l.b16 %v1123
    %v1256 = vunpack.c.h.b16 %v1123
    %v1257 = vunpack.c.l.b16 %v1124
    %v1258 = vunpack.c.h.b16 %v1124
    %v1259 = vunpack.c.l.b16 %v1125
    %v1260 = vunpack.c.h.b16 %v1125
    %v1261 = vunpack.c.l.b16 %v1126
    %v1262 = vunpack.c.h.b16 %v1126
    %v1263 = vunpack.c.l.b16 %v1127
    %v1264 = vunpack.c.h.b16 %v1127
    %v1265 = vunpack.c.l.b16 %v1128
    %v1266 = vunpack.c.h.b16 %v1128
    %v1267 = vunpack.c.l.b16 %v1129
    %v1268 = vunpack.c.h.b16 %v1129
    %v1269 = vunpack.c.l.b16 %v1130
    %v1270 = vunpack.c.h.b16 %v1130
    %v1271 = vunpack.c.l.b16 %v1131
    %v1272 = vunpack.c.h.b16 %v1131
    %v1273 = vunpack.c.l.b16 %v1132
    %v1274 = vunpack.c.h.b16 %v1132
    %v1275 = vunpack.c.l.b16 %v1133
    %v1276 = vunpack.c.h.b16 %v1133
    %v1277 = vunpack.c.l.b16 %v1134
    %v1278 = vunpack.c.h.b16 %v1134
    %v1279 = vunpack.c.l.b16 %v1135
    %v1280 = vunpack.c.h.b16 %v1135
    %v1281 = vunpack.c.l.b16 %v1136
    %v1282 = vunpack.c.h.b16 %v1136
    %v1283 = vunpack.c.l.b16 %v1137
    %v1284 = vunpack.c.h.b16 %v1137
    %v1285 = vunpack.c.l.b16 %v1138
    %v1286 = vunpack.c.h.b16 %v1138
    %v1287 = vunpack.c.l.b16 %v1139
    %v1288 = vunpack.c.h.b16 %v1139
    %v1289 = vunpack.c.l.b16 %v1140
    %v1290 = vunpack.c.h.b16 %v1140
    %v1291 = vunpack.c.l.b16 %v1141
    %v1292 = vunpack.c.h.b16 %v1141
    %v1293 = vunpack.c.l.b16 %v1142
    %v1294 = vunpack.c.h.b16 %v1142
    %v1295 = vunpack.c.l.b16 %v1143
    %v1296 = vunpack.c.h.b16 %v1143
    %v1297 = vunpack.c.l.b16 %v1144
    %v1298 = vunpack.c.h.b16 %v1144
    %v1299 = vunpack.c.l.b16 %v1145
    %v1300 = vunpack.c.h.b16 %v1145
    %v1301 = vunpack.c.l.b16 %v1146
    %v1302 = vunpack.c.h.b16 %v1146
    %v1303 = vunpack.c.l.b16 %v1147
    %v1304 = vunpack.c.h.b16 %v1147
    %v1305 = vunpack.c.l.b16 %v1148
    %v1306 = vunpack.c.h.b16 %v1148
    %v1307 = vunpack.c.l.b16 %v1149
    %v1308 = vunpack.c.h.b16 %v1149
    %v1309 = vunpack.c.l.b16 %v1150
    %v1310 = vunpack.c.h.b16 %v1150
    %v1311 = vunpack.c.l.b16 %v1151
    %v1312 = vunpack.c.h.b16 %v1151
    %v1313 = vunpack.c.l.b16 %v1152
    %v1314 = vunpack.c.h.b16 %v1152
    %v1315 = vunpack.c.l.b16 %v1153
    %v1316 = vunpack.c.h.b16 %v1153
    %v1317 = vunpack.c.l.b16 %v1154
    %v1318 = vunpack.c.h.b16 %v1154
    %v1319 = vunpack.c.l.b16 %v1155
    %v1320 = vunpack.c.h.b16 %v1155
    %v1321 = vunpack.c.l.b16 %v1156
    %v1322 = vunpack.c.h.b16 %v1156
    %v1323 = vunpack.c.l.b16 %v1157
    %v1324 = vunpack.c.h.b16 %v1157
    %v1325 = vunpack.c.l.b16 %v1158
    %v1326 = vunpack.c.h.b16 %v1158
    %v1327 = vunpack.c.l.b16 %v1159
    %v1328 = vunpack.c.h.b16 %v1159
    %v1329 = vunpack.c.l.b16 %v1160
    %v1330 = vunpack.c.h.b16 %v1160
    %v1331 = vunpack.c.l.b16 %v1161
    %v1332 = vunpack.c.h.b16 %v1161
    %v1333 = vunpack.c.l.b16 %v1162
    %v1334 = vunpack.c.h.b16 %v1162
    %v1335 = vunpack.c.l.b16 %v1163
    %v1336 = vunpack.c.h.b16 %v1163
    %v1337 = vunpack.c.l.b16 %v1164
    %v1338 = vunpack.c.h.b16 %v1164
    %v1339 = vunpack.c.l.b16 %v1165
    %v1340 = vunpack.c.h.b16 %v1165
    %v1341 = vunpack.c.l.b16 %v1166
    %v1342 = vunpack.c.h.b16 %v1166
    %v1343 = vunpack.c.l.b16 %v1167
    %v1344 = vunpack.c.h.b16 %v1167
    %v1345 = vunpack.c.l.b16 %v1168
    %v1346 = vunpack.c.h.b16 %v1168
    %v1347 = vunpack.c.l.b16 %v1169
    %v1348 = vunpack.c.h.b16 %v1169
    %v1349 = vunpack.c.l.b16 %v1170
    %v1350 = vunpack.c.h.b16 %v1170
    %v1351 = vunpack.c.l.b16 %v1171
    %v1352 = vunpack.c.h.b16 %v1171
    %v1353 = vunpack.c.l.b16 %v1172
    %v1354 = vunpack.c.h.b16 %v1172
    %v1355 = vunpack.c.l.b16 %v1173
    %v1356 = vunpack.c.h.b16 %v1173
    %v1357 = vunpack.c.l.b16 %v1174
    %v1358 = vunpack.c.h.b16 %v1174
    %v1359 = vunpack.c.l.b16 %v1175
    %v1360 = vunpack.c.h.b16 %v1175
    %v1361 = vunpack.c.l.b16 %v1176
    %v1362 = vunpack.c.h.b16 %v1176
    %v1363 = vunpack.c.l.b16 %v1177
    %v1364 = vunpack.c.h.b16 %v1177
    %v1365 = vunpack.c.l.b16 %v1178
    %v1366 = vunpack.c.h.b16 %v1178
    %v1367 = vunpack.c.l.b16 %v1179
    %v1368 = vunpack.c.h.b16 %v1179
    %v1369 = vunpack.c.l.b16 %v1180
    %v1370 = vunpack.c.h.b16 %v1180
    %v1371 = vunpack.c.l.b16 %v1181
    %v1372 = vunpack.c.h.b16 %v1181
    %v1373 = vunpack.c.l.b16 %v1182
    %v1374 = vunpack.c.h.b16 %v1182
    %v1375 = vpack.c.b16 %v1249, %v1247
    %v1376 = vpack.c.b16 %v1250, %v1248
    %v1377 = vpack.c.b16 %v1253, %v1251
    %v1378 = vpack.c.b16 %v1254, %v1252
    %v1379 = vpack.c.b16 %v1257, %v1255
    %v1380 = vpack.c.b16 %v1258, %v1256
    %v1381 = vpack.c.b16 %v1261, %v1259
    %v1382 = vpack.c.b16 %v1262, %v1260
    %v1383 = vpack.c.b16 %v1265, %v1263
    %v1384 = vpack.c.b16 %v1266, %v1264
    %v1385 = vpack.c.b16 %v1269, %v1267
    %v1386 = vpack.c.b16 %v1270, %v1268
    %v1387 = vpack.c.b16 %v1273, %v1271
    %v1388 = vpack.c.b16 %v1274, %v1272
    %v1389 = vpack.c.b16 %v1277, %v1275
    %v1390 = vpack.c.b16 %v1278, %v1276
    %v1391 = vpack.c.b16 %v1281, %v1279
    %v1392 = vpack.c.b16 %v1282, %v1280
    %v1393 = vpack.c.b16 %v1285, %v1283
    %v1394 = vpack.c.b16 %v1286, %v1284
    %v1395 = vpack.c.b16 %v1289, %v1287
    %v1396 = vpack.c.b16 %v1290, %v1288
    %v1397 = vpack.c.b16 %v1293, %v1291
    %v1398 = vpack.c.b16 %v1294, %v1292
    %v1399 = vpack.c.b16 %v1297, %v1295
    %v1400 = vpack.c.b16 %v1298, %v1296
    %v1401 = vpack.c.b16 %v1301, %v1299
    %v1402 = vpack.c.b16 %v1302, %v1300
    %v1403 = vpack.c.b16 %v1305, %v1303
    %v1404 = vpack.c.b16 %v1306, %v1304
    %v1405 = vpack.c.b16 %v1309, %v1307
    %v1406 = vpack.c.b16 %v1310, %v1308
    %v1407 = vpack.c.b16 %v1313, %v1311
    %v1408 = vpack.c.b16 %v1314, %v1312
    %v1409 = vpack.c.b16 %v1317, %v1315
    %v1410 = vpack.c.b16 %v1318, %v1316
    %v1411 = vpack.c.b16 %v1321, %v1319
    %v1412 = vpack.c.b16 %v1322, %v1320
    %v1413 = vpack.c.b16 %v1325, %v1323
    %v1414 = vpack.c.b16 %v1326, %v1324
    %v1415 = vpack.c.b16 %v1329, %v1327
    %v1416 = vpack.c.b16 %v1330, %v1328
    %v1417 = vpack.c.b16 %v1333, %v1331
    %v1418 = vpack.c.b16 %v1334, %v1332
    %v1419 = vpack.c.b16 %v1337, %v1335
    %v1420 = vpack.c.b16 %v1338, %v1336
    %v1421 = vpack.c.b16 %v1341, %v1339
    %v1422 = vpack.c.b16 %v1342, %v1340
    %v1423 = vpack.c.b16 %v1345, %v1343
    %v1424 = vpack.c.b16 %v1346, %v1344
    %v1425 = vpack.c.b16 %v1349, %v1347
    %v1426 = vpack.c.b16 %v1350, %v1348
    %v1427 = vpack.c.b16 %v1353, %v1351
    %v1428 = vpack.c.b16 %v1354, %v1352
    %v1429 = vpack.c.b16 %v1357, %v1355
    %v1430 = vpack.c.b16 %v1358, %v1356
    %v1431 = vpack.c.b16 %v1361, %v1359
    %v1432 = vpack.c.b16 %v1362, %v1360
    %v1433 = vpack.c.b16 %v1365, %v1363
    %v1434 = vpack.c.b16 %v1366, %v1364
    %v1435 = vpack.c.b16 %v1369, %v1367
    %v1436 = vpack.c.b16 %v1370, %v1368
    %v1437 = vpack.c.b16 %v1373, %v1371
    %v1438 = vpack.c.b16 %v1374, %v1372
    %1503 = vmatpush.bf16.msra.mxu0 %v1389
    %1504 = vmatpush.bf16.msra.mxu0 %v1387
    %1505 = vmatpush.bf16.msra.mxu0 %v1385
    %1506 = vmatpush.bf16.msra.mxu0 %v1383
    %1507 = vmatpush.bf16.msra.mxu0 %v1381
    %1508 = vmatpush.bf16.msra.mxu0 %v1379
    %1509 = vmatpush.bf16.msra.mxu0 %v1377
    %1510 = vmatpush.bf16.msra.mxu0 %v1375
    %1511 = vmatmul.bf16.gmra.mxu0 %v1111
    %v1512 = vpop.f32.mrf.mxu0
    %v1513 = vadd.f32 0.0, %v1512
    %v1514 = vpop.f32.mrf.mxu0
    %1515 = vdwg.mxu0
    %1516 = vmatpush.bf16.msra.mxu0 %v1405
    %1517 = vmatpush.bf16.msra.mxu0 %v1403
    %1518 = vmatpush.bf16.msra.mxu0 %v1401
    %1519 = vmatpush.bf16.msra.mxu0 %v1399
    %1520 = vmatpush.bf16.msra.mxu0 %v1397
    %1521 = vmatpush.bf16.msra.mxu0 %v1395
    %1522 = vmatpush.bf16.msra.mxu0 %v1393
    %1523 = vmatpush.bf16.msra.mxu0 %v1391
    %1524 = vmatmul.bf16.gmra.mxu0 %v1112
    %v1525 = vpop.f32.mrf.mxu0
    %v1526 = vadd.f32 %v1513, %v1525
    %v1527 = vpop.f32.mrf.mxu0
    %1528 = vdwg.mxu0
    %1529 = vmatpush.bf16.msra.mxu0 %v1421
    %1530 = vmatpush.bf16.msra.mxu0 %v1419
    %1531 = vmatpush.bf16.msra.mxu0 %v1417
    %1532 = vmatpush.bf16.msra.mxu0 %v1415
    %1533 = vmatpush.bf16.msra.mxu0 %v1413
    %1534 = vmatpush.bf16.msra.mxu0 %v1411
    %1535 = vmatpush.bf16.msra.mxu0 %v1409
    %1536 = vmatpush.bf16.msra.mxu0 %v1407
    %1537 = vmatmul.bf16.gmra.mxu0 %v1113
    %v1538 = vpop.f32.mrf.mxu0
    %v1539 = vadd.f32 %v1526, %v1538
    %v1540 = vpop.f32.mrf.mxu0
    %1541 = vdwg.mxu0
    %1542 = vmatpush.bf16.msra.mxu0 %v1437
    %1543 = vmatpush.bf16.msra.mxu0 %v1435
    %1544 = vmatpush.bf16.msra.mxu0 %v1433
    %1545 = vmatpush.bf16.msra.mxu0 %v1431
    %1546 = vmatpush.bf16.msra.mxu0 %v1429
    %1547 = vmatpush.bf16.msra.mxu0 %v1427
    %1548 = vmatpush.bf16.msra.mxu0 %v1425
    %1549 = vmatpush.bf16.msra.mxu0 %v1423
    %1550 = vmatmul.bf16.gmra.mxu0 %v1114
    %v1551 = vpop.f32.mrf.mxu0
    %v1552 = vadd.f32 %v1539, %v1551
    %v1553 = vpop.f32.mrf.mxu0
    %1554 = vdwg.mxu0
    %1555 = vmatpush.bf16.msra.mxu0 %v1390
    %1556 = vmatpush.bf16.msra.mxu0 %v1388
    %1557 = vmatpush.bf16.msra.mxu0 %v1386
    %1558 = vmatpush.bf16.msra.mxu0 %v1384
    %1559 = vmatpush.bf16.msra.mxu0 %v1382
    %1560 = vmatpush.bf16.msra.mxu0 %v1380
    %1561 = vmatpush.bf16.msra.mxu0 %v1378
    %1562 = vmatpush.bf16.msra.mxu0 %v1376
    %1563 = vmatmul.bf16.gmra.mxu0 %v1111
    %v1564 = vpop.f32.mrf.mxu0
    %v1565 = vadd.f32 0.0, %v1564
    %v1566 = vpop.f32.mrf.mxu0
    %1567 = vdwg.mxu0
    %1568 = vmatpush.bf16.msra.mxu0 %v1406
    %1569 = vmatpush.bf16.msra.mxu0 %v1404
    %1570 = vmatpush.bf16.msra.mxu0 %v1402
    %1571 = vmatpush.bf16.msra.mxu0 %v1400
    %1572 = vmatpush.bf16.msra.mxu0 %v1398
    %1573 = vmatpush.bf16.msra.mxu0 %v1396
    %1574 = vmatpush.bf16.msra.mxu0 %v1394
    %1575 = vmatpush.bf16.msra.mxu0 %v1392
    %1576 = vmatmul.bf16.gmra.mxu0 %v1112
    %v1577 = vpop.f32.mrf.mxu0
    %v1578 = vadd.f32 %v1565, %v1577
    %v1579 = vpop.f32.mrf.mxu0
    %1580 = vdwg.mxu0
    %1581 = vmatpush.bf16.msra.mxu0 %v1422
    %1582 = vmatpush.bf16.msra.mxu0 %v1420
    %1583 = vmatpush.bf16.msra.mxu0 %v1418
    %1584 = vmatpush.bf16.msra.mxu0 %v1416
    %1585 = vmatpush.bf16.msra.mxu0 %v1414
    %1586 = vmatpush.bf16.msra.mxu0 %v1412
    %1587 = vmatpush.bf16.msra.mxu0 %v1410
    %1588 = vmatpush.bf16.msra.mxu0 %v1408
    %1589 = vmatmul.bf16.gmra.mxu0 %v1113
    %v1590 = vpop.f32.mrf.mxu0
    %v1591 = vadd.f32 %v1578, %v1590
    %v1592 = vpop.f32.mrf.mxu0
    %1593 = vdwg.mxu0
    %1594 = vmatpush.bf16.msra.mxu0 %v1438
    %1595 = vmatpush.bf16.msra.mxu0 %v1436
    %1596 = vmatpush.bf16.msra.mxu0 %v1434
    %1597 = vmatpush.bf16.msra.mxu0 %v1432
    %1598 = vmatpush.bf16.msra.mxu0 %v1430
    %1599 = vmatpush.bf16.msra.mxu0 %v1428
    %1600 = vmatpush.bf16.msra.mxu0 %v1426
    %1601 = vmatpush.bf16.msra.mxu0 %v1424
    %1602 = vmatmul.bf16.gmra.mxu0 %v1114
    %v1603 = vpop.f32.mrf.mxu0
    %v1604 = vadd.f32 %v1591, %v1603
    %v1605 = vpop.f32.mrf.mxu0
    %1606 = vdwg.mxu0
    %v1607 = vld [vmem:[#allocation13 + $0xd] sm:$0x3]
    %v1608 = vld [vmem:[#allocation13 + $0x15] sm:$0x3]
    %v1609 = vrot.slane %v1552, 4
    %v1610 = vadd.f32 %v1552, %v1609
    %v1611 = vrot.slane %v1610, 2
    %v1612 = vadd.f32 %v1610, %v1611
    %v1613 = vrot.slane %v1612, 1
    %v1614 = vadd.f32 %v1612, %v1613
    %v1615 = vrot.slane %v1604, 4
    %v1616 = vadd.f32 %v1604, %v1615
    %v1617 = vrot.slane %v1616, 2
    %v1618 = vadd.f32 %v1616, %v1617
    %v1619 = vrot.slane %v1618, 1
    %v1620 = vadd.f32 %v1618, %v1619
    %v1621 = vmul.f32 %v1552, %v1552
    %v1622 = vmul.f32 %v1604, %v1604
    %v1623 = vrot.slane %v1621, 4
    %v1624 = vadd.f32 %v1621, %v1623
    %v1625 = vrot.slane %v1624, 2
    %v1626 = vadd.f32 %v1624, %v1625
    %v1627 = vrot.slane %v1626, 1
    %v1628 = vadd.f32 %v1626, %v1627
    %v1629 = vrot.slane %v1622, 4
    %v1630 = vadd.f32 %v1622, %v1629
    %v1631 = vrot.slane %v1630, 2
    %v1632 = vadd.f32 %v1630, %v1631
    %v1633 = vrot.slane %v1632, 1
    %v1634 = vadd.f32 %v1632, %v1633
    %v1635 = vmul.f32 %v1614, 0.125
    %v1636 = vmul.f32 %v1620, 0.125
    %v1637 = vmul.f32 %v1628, 0.125
    %v1638 = vmul.f32 %v1634, 0.125
    %v1639 = vmul.f32 %v1635, %v1635
    %v1640 = vmul.f32 %v1636, %v1636
    %v1641 = vsub.f32 %v1637, %v1639
    %v1642 = vsub.f32 %v1638, %v1640
    %v1643 = vsub.f32 %v1552, %v1635
    %v1644 = vsub.f32 %v1604, %v1636
    %v1645 = vadd.f32 %v1641, 0.8
    %v1646 = vadd.f32 %v1642, 0.8
    %v1647 = vrsqrt.pop %v1645
    %v1648 = vmul.f32 %v1647, %v1645
    %v1649 = vmul.f32 %v1648, %v1647
    %v1650 = vmul.f32 0.5, %v1649
    %v1651 = vsub.f32 1.5, %v1650
    %v1652 = vmul.f32 %v1647, %v1651
    %vm1653 = vweird.f32 %v1645
    %vm1654 = vweird.f32 %v1647
    %vm1655 = vmor %vm1653, %vm1654
    %v1656 = vsel %vm1655, %v1647, %v1652
    %v1657 = vrsqrt.pop %v1646
    %v1658 = vmul.f32 %v1657, %v1646
    %v1659 = vmul.f32 %v1658, %v1657
    %v1660 = vmul.f32 0.5, %v1659
    %v1661 = vsub.f32 1.5, %v1660
    %v1662 = vmul.f32 %v1657, %v1661
    %vm1663 = vweird.f32 %v1646
    %vm1664 = vweird.f32 %v1657
    %vm1665 = vmor %vm1663, %vm1664
    %v1666 = vsel %vm1665, %v1657, %v1662
    %v1667 = vmul.f32 %v1643, %v1656
    %v1668 = vmul.f32 %v1644, %v1666
    %v1670 = vperm.slane %v1607, 0
    %v1671 = vperm.slane %v1607, 1
    %v1674 = vmul.f32 %v1667, %v1670
    %v1675 = vmul.f32 %v1668, %v1671
    %v1677 = vperm.slane %v1608, 0
    %v1678 = vperm.slane %v1608, 1
    %v1681 = vadd.f32 %v1674, %v1677
    %v1682 = vadd.f32 %v1675, %v1678
    %v1683 = vmul.f32 %v1681, 0.2
    %v1684 = vmul.f32 %v1682, 0.2
    %v1685 = vmax.f32 %v1681, %v1683
    %v1686 = vmax.f32 %v1682, %v1684
    %v1687 = vpack.c.bf16 %v1685, %v1685
    %v1688 = vpack.c.bf16 %v1686, %v1686
    %s1689 = smul.u32 %s461, 2
    %s1690 = sshll.u32 %s1689, 4
    %1691 = dma.done %s103, %s1690
    %v1692 = vld [vmem:[#allocation5] sm:$0xff]
    %v1693 = vld [vmem:[#allocation5 + $0x8] sm:$0xff]
    %v1694 = vld [vmem:[#allocation5 + $0x10] sm:$0xff]
    %v1695 = vld [vmem:[#allocation5 + $0x18] sm:$0xff]
    %v1696 = vld [vmem:[#allocation5 + $0x20] sm:$0xff]
    %v1697 = vld [vmem:[#allocation5 + $0x28] sm:$0xff]
    %v1698 = vld [vmem:[#allocation5 + $0x30] sm:$0xff]
    %v1699 = vld [vmem:[#allocation5 + $0x38] sm:$0xff]
    %v1700 = vld [vmem:[#allocation5 + $0x40] sm:$0xff]
    %v1701 = vld [vmem:[#allocation5 + $0x48] sm:$0xff]
    %v1702 = vld [vmem:[#allocation5 + $0x50] sm:$0xff]
    %v1703 = vld [vmem:[#allocation5 + $0x58] sm:$0xff]
    %v1704 = vld [vmem:[#allocation5 + $0x60] sm:$0xff]
    %v1705 = vld [vmem:[#allocation5 + $0x68] sm:$0xff]
    %v1706 = vld [vmem:[#allocation5 + $0x70] sm:$0xff]
    %v1707 = vld [vmem:[#allocation5 + $0x78] sm:$0xff]
    %v1708 = vld [vmem:[#allocation5 + $0x80] sm:$0xff]
    %v1709 = vld [vmem:[#allocation5 + $0x88] sm:$0xff]
    %v1710 = vld [vmem:[#allocation5 + $0x90] sm:$0xff]
    %v1711 = vld [vmem:[#allocation5 + $0x98] sm:$0xff]
    %v1712 = vld [vmem:[#allocation5 + $0xa0] sm:$0xff]
    %v1713 = vld [vmem:[#allocation5 + $0xa8] sm:$0xff]
    %v1714 = vld [vmem:[#allocation5 + $0xb0] sm:$0xff]
    %v1715 = vld [vmem:[#allocation5 + $0xb8] sm:$0xff]
    %v1716 = vld [vmem:[#allocation5 + $0xc0] sm:$0xff]
    %v1717 = vld [vmem:[#allocation5 + $0xc8] sm:$0xff]
    %v1718 = vld [vmem:[#allocation5 + $0xd0] sm:$0xff]
    %v1719 = vld [vmem:[#allocation5 + $0xd8] sm:$0xff]
    %v1720 = vld [vmem:[#allocation5 + $0xe0] sm:$0xff]
    %v1721 = vld [vmem:[#allocation5 + $0xe8] sm:$0xff]
    %v1722 = vld [vmem:[#allocation5 + $0xf0] sm:$0xff]
    %v1723 = vld [vmem:[#allocation5 + $0xf8] sm:$0xff]
    %s1724 = sshll.u32 %s1116, 4
    %1725 = dma.done %s119, %s1724
    %v1726 = vld [vmem:[%s118] sm:$0xff]
    %v1727 = vld [vmem:[%s118 + $0x8] sm:$0xff]
    %v1728 = vld [vmem:[%s118 + $0x10] sm:$0xff]
    %v1729 = vld [vmem:[%s118 + $0x18] sm:$0xff]
    %v1730 = vld [vmem:[%s118 + $0x20] sm:$0xff]
    %v1731 = vld [vmem:[%s118 + $0x28] sm:$0xff]
    %v1732 = vld [vmem:[%s118 + $0x30] sm:$0xff]
    %v1733 = vld [vmem:[%s118 + $0x38] sm:$0xff]
    %v1734 = vld [vmem:[%s118 + $0x40] sm:$0xff]
    %v1735 = vld [vmem:[%s118 + $0x48] sm:$0xff]
    %v1736 = vld [vmem:[%s118 + $0x50] sm:$0xff]
    %v1737 = vld [vmem:[%s118 + $0x58] sm:$0xff]
    %v1738 = vld [vmem:[%s118 + $0x60] sm:$0xff]
    %v1739 = vld [vmem:[%s118 + $0x68] sm:$0xff]
    %v1740 = vld [vmem:[%s118 + $0x70] sm:$0xff]
    %v1741 = vld [vmem:[%s118 + $0x78] sm:$0xff]
    %v1742 = vld [vmem:[%s118 + $0x80] sm:$0xff]
    %v1743 = vld [vmem:[%s118 + $0x88] sm:$0xff]
    %v1744 = vld [vmem:[%s118 + $0x90] sm:$0xff]
    %v1745 = vld [vmem:[%s118 + $0x98] sm:$0xff]
    %v1746 = vld [vmem:[%s118 + $0xa0] sm:$0xff]
    %v1747 = vld [vmem:[%s118 + $0xa8] sm:$0xff]
    %v1748 = vld [vmem:[%s118 + $0xb0] sm:$0xff]
    %v1749 = vld [vmem:[%s118 + $0xb8] sm:$0xff]
    %v1750 = vld [vmem:[%s118 + $0xc0] sm:$0xff]
    %v1751 = vld [vmem:[%s118 + $0xc8] sm:$0xff]
    %v1752 = vld [vmem:[%s118 + $0xd0] sm:$0xff]
    %v1753 = vld [vmem:[%s118 + $0xd8] sm:$0xff]
    %v1754 = vld [vmem:[%s118 + $0xe0] sm:$0xff]
    %v1755 = vld [vmem:[%s118 + $0xe8] sm:$0xff]
    %v1756 = vld [vmem:[%s118 + $0xf0] sm:$0xff]
    %v1757 = vld [vmem:[%s118 + $0xf8] sm:$0xff]
    %v1758 = vld [vmem:[%s118 + $0x100] sm:$0xff]
    %v1759 = vld [vmem:[%s118 + $0x108] sm:$0xff]
    %v1760 = vld [vmem:[%s118 + $0x110] sm:$0xff]
    %v1761 = vld [vmem:[%s118 + $0x118] sm:$0xff]
    %v1762 = vld [vmem:[%s118 + $0x120] sm:$0xff]
    %v1763 = vld [vmem:[%s118 + $0x128] sm:$0xff]
    %v1764 = vld [vmem:[%s118 + $0x130] sm:$0xff]
    %v1765 = vld [vmem:[%s118 + $0x138] sm:$0xff]
    %v1766 = vld [vmem:[%s118 + $0x140] sm:$0xff]
    %v1767 = vld [vmem:[%s118 + $0x148] sm:$0xff]
    %v1768 = vld [vmem:[%s118 + $0x150] sm:$0xff]
    %v1769 = vld [vmem:[%s118 + $0x158] sm:$0xff]
    %v1770 = vld [vmem:[%s118 + $0x160] sm:$0xff]
    %v1771 = vld [vmem:[%s118 + $0x168] sm:$0xff]
    %v1772 = vld [vmem:[%s118 + $0x170] sm:$0xff]
    %v1773 = vld [vmem:[%s118 + $0x178] sm:$0xff]
    %v1774 = vld [vmem:[%s118 + $0x180] sm:$0xff]
    %v1775 = vld [vmem:[%s118 + $0x188] sm:$0xff]
    %v1776 = vld [vmem:[%s118 + $0x190] sm:$0xff]
    %v1777 = vld [vmem:[%s118 + $0x198] sm:$0xff]
    %v1778 = vld [vmem:[%s118 + $0x1a0] sm:$0xff]
    %v1779 = vld [vmem:[%s118 + $0x1a8] sm:$0xff]
    %v1780 = vld [vmem:[%s118 + $0x1b0] sm:$0xff]
    %v1781 = vld [vmem:[%s118 + $0x1b8] sm:$0xff]
    %v1782 = vld [vmem:[%s118 + $0x1c0] sm:$0xff]
    %v1783 = vld [vmem:[%s118 + $0x1c8] sm:$0xff]
    %v1784 = vld [vmem:[%s118 + $0x1d0] sm:$0xff]
    %v1785 = vld [vmem:[%s118 + $0x1d8] sm:$0xff]
    %v1786 = vld [vmem:[%s118 + $0x1e0] sm:$0xff]
    %v1787 = vld [vmem:[%s118 + $0x1e8] sm:$0xff]
    %v1788 = vld [vmem:[%s118 + $0x1f0] sm:$0xff]
    %v1789 = vld [vmem:[%s118 + $0x1f8] sm:$0xff]
    %v1854 = vunpack.c.l.b16 %v1726
    %v1855 = vunpack.c.h.b16 %v1726
    %v1856 = vunpack.c.l.b16 %v1727
    %v1857 = vunpack.c.h.b16 %v1727
    %v1858 = vunpack.c.l.b16 %v1728
    %v1859 = vunpack.c.h.b16 %v1728
    %v1860 = vunpack.c.l.b16 %v1729
    %v1861 = vunpack.c.h.b16 %v1729
    %v1862 = vunpack.c.l.b16 %v1730
    %v1863 = vunpack.c.h.b16 %v1730
    %v1864 = vunpack.c.l.b16 %v1731
    %v1865 = vunpack.c.h.b16 %v1731
    %v1866 = vunpack.c.l.b16 %v1732
    %v1867 = vunpack.c.h.b16 %v1732
    %v1868 = vunpack.c.l.b16 %v1733
    %v1869 = vunpack.c.h.b16 %v1733
    %v1870 = vunpack.c.l.b16 %v1734
    %v1871 = vunpack.c.h.b16 %v1734
    %v1872 = vunpack.c.l.b16 %v1735
    %v1873 = vunpack.c.h.b16 %v1735
    %v1874 = vunpack.c.l.b16 %v1736
    %v1875 = vunpack.c.h.b16 %v1736
    %v1876 = vunpack.c.l.b16 %v1737
    %v1877 = vunpack.c.h.b16 %v1737
    %v1878 = vunpack.c.l.b16 %v1738
    %v1879 = vunpack.c.h.b16 %v1738
    %v1880 = vunpack.c.l.b16 %v1739
    %v1881 = vunpack.c.h.b16 %v1739
    %v1882 = vunpack.c.l.b16 %v1740
    %v1883 = vunpack.c.h.b16 %v1740
    %v1884 = vunpack.c.l.b16 %v1741
    %v1885 = vunpack.c.h.b16 %v1741
    %v1886 = vunpack.c.l.b16 %v1742
    %v1887 = vunpack.c.h.b16 %v1742
    %v1888 = vunpack.c.l.b16 %v1743
    %v1889 = vunpack.c.h.b16 %v1743
    %v1890 = vunpack.c.l.b16 %v1744
    %v1891 = vunpack.c.h.b16 %v1744
    %v1892 = vunpack.c.l.b16 %v1745
    %v1893 = vunpack.c.h.b16 %v1745
    %v1894 = vunpack.c.l.b16 %v1746
    %v1895 = vunpack.c.h.b16 %v1746
    %v1896 = vunpack.c.l.b16 %v1747
    %v1897 = vunpack.c.h.b16 %v1747
    %v1898 = vunpack.c.l.b16 %v1748
    %v1899 = vunpack.c.h.b16 %v1748
    %v1900 = vunpack.c.l.b16 %v1749
    %v1901 = vunpack.c.h.b16 %v1749
    %v1902 = vunpack.c.l.b16 %v1750
    %v1903 = vunpack.c.h.b16 %v1750
    %v1904 = vunpack.c.l.b16 %v1751
    %v1905 = vunpack.c.h.b16 %v1751
    %v1906 = vunpack.c.l.b16 %v1752
    %v1907 = vunpack.c.h.b16 %v1752
    %v1908 = vunpack.c.l.b16 %v1753
    %v1909 = vunpack.c.h.b16 %v1753
    %v1910 = vunpack.c.l.b16 %v1754
    %v1911 = vunpack.c.h.b16 %v1754
    %v1912 = vunpack.c.l.b16 %v1755
    %v1913 = vunpack.c.h.b16 %v1755
    %v1914 = vunpack.c.l.b16 %v1756
    %v1915 = vunpack.c.h.b16 %v1756
    %v1916 = vunpack.c.l.b16 %v1757
    %v1917 = vunpack.c.h.b16 %v1757
    %v1918 = vunpack.c.l.b16 %v1758
    %v1919 = vunpack.c.h.b16 %v1758
    %v1920 = vunpack.c.l.b16 %v1759
    %v1921 = vunpack.c.h.b16 %v1759
    %v1922 = vunpack.c.l.b16 %v1760
    %v1923 = vunpack.c.h.b16 %v1760
    %v1924 = vunpack.c.l.b16 %v1761
    %v1925 = vunpack.c.h.b16 %v1761
    %v1926 = vunpack.c.l.b16 %v1762
    %v1927 = vunpack.c.h.b16 %v1762
    %v1928 = vunpack.c.l.b16 %v1763
    %v1929 = vunpack.c.h.b16 %v1763
    %v1930 = vunpack.c.l.b16 %v1764
    %v1931 = vunpack.c.h.b16 %v1764
    %v1932 = vunpack.c.l.b16 %v1765
    %v1933 = vunpack.c.h.b16 %v1765
    %v1934 = vunpack.c.l.b16 %v1766
    %v1935 = vunpack.c.h.b16 %v1766
    %v1936 = vunpack.c.l.b16 %v1767
    %v1937 = vunpack.c.h.b16 %v1767
    %v1938 = vunpack.c.l.b16 %v1768
    %v1939 = vunpack.c.h.b16 %v1768
    %v1940 = vunpack.c.l.b16 %v1769
    %v1941 = vunpack.c.h.b16 %v1769
    %v1942 = vunpack.c.l.b16 %v1770
    %v1943 = vunpack.c.h.b16 %v1770
    %v1944 = vunpack.c.l.b16 %v1771
    %v1945 = vunpack.c.h.b16 %v1771
    %v1946 = vunpack.c.l.b16 %v1772
    %v1947 = vunpack.c.h.b16 %v1772
    %v1948 = vunpack.c.l.b16 %v1773
    %v1949 = vunpack.c.h.b16 %v1773
    %v1950 = vunpack.c.l.b16 %v1774
    %v1951 = vunpack.c.h.b16 %v1774
    %v1952 = vunpack.c.l.b16 %v1775
    %v1953 = vunpack.c.h.b16 %v1775
    %v1954 = vunpack.c.l.b16 %v1776
    %v1955 = vunpack.c.h.b16 %v1776
    %v1956 = vunpack.c.l.b16 %v1777
    %v1957 = vunpack.c.h.b16 %v1777
    %v1958 = vunpack.c.l.b16 %v1778
    %v1959 = vunpack.c.h.b16 %v1778
    %v1960 = vunpack.c.l.b16 %v1779
    %v1961 = vunpack.c.h.b16 %v1779
    %v1962 = vunpack.c.l.b16 %v1780
    %v1963 = vunpack.c.h.b16 %v1780
    %v1964 = vunpack.c.l.b16 %v1781
    %v1965 = vunpack.c.h.b16 %v1781
    %v1966 = vunpack.c.l.b16 %v1782
    %v1967 = vunpack.c.h.b16 %v1782
    %v1968 = vunpack.c.l.b16 %v1783
    %v1969 = vunpack.c.h.b16 %v1783
    %v1970 = vunpack.c.l.b16 %v1784
    %v1971 = vunpack.c.h.b16 %v1784
    %v1972 = vunpack.c.l.b16 %v1785
    %v1973 = vunpack.c.h.b16 %v1785
    %v1974 = vunpack.c.l.b16 %v1786
    %v1975 = vunpack.c.h.b16 %v1786
    %v1976 = vunpack.c.l.b16 %v1787
    %v1977 = vunpack.c.h.b16 %v1787
    %v1978 = vunpack.c.l.b16 %v1788
    %v1979 = vunpack.c.h.b16 %v1788
    %v1980 = vunpack.c.l.b16 %v1789
    %v1981 = vunpack.c.h.b16 %v1789
    %v1982 = vpack.c.b16 %v1856, %v1854
    %v1983 = vpack.c.b16 %v1857, %v1855
    %v1984 = vpack.c.b16 %v1860, %v1858
    %v1985 = vpack.c.b16 %v1861, %v1859
    %v1986 = vpack.c.b16 %v1864, %v1862
    %v1987 = vpack.c.b16 %v1865, %v1863
    %v1988 = vpack.c.b16 %v1868, %v1866
    %v1989 = vpack.c.b16 %v1869, %v1867
    %v1990 = vpack.c.b16 %v1872, %v1870
    %v1991 = vpack.c.b16 %v1873, %v1871
    %v1992 = vpack.c.b16 %v1876, %v1874
    %v1993 = vpack.c.b16 %v1877, %v1875
    %v1994 = vpack.c.b16 %v1880, %v1878
    %v1995 = vpack.c.b16 %v1881, %v1879
    %v1996 = vpack.c.b16 %v1884, %v1882
    %v1997 = vpack.c.b16 %v1885, %v1883
    %v1998 = vpack.c.b16 %v1888, %v1886
    %v1999 = vpack.c.b16 %v1889, %v1887
    %v2000 = vpack.c.b16 %v1892, %v1890
    %v2001 = vpack.c.b16 %v1893, %v1891
    %v2002 = vpack.c.b16 %v1896, %v1894
    %v2003 = vpack.c.b16 %v1897, %v1895
    %v2004 = vpack.c.b16 %v1900, %v1898
    %v2005 = vpack.c.b16 %v1901, %v1899
    %v2006 = vpack.c.b16 %v1904, %v1902
    %v2007 = vpack.c.b16 %v1905, %v1903
    %v2008 = vpack.c.b16 %v1908, %v1906
    %v2009 = vpack.c.b16 %v1909, %v1907
    %v2010 = vpack.c.b16 %v1912, %v1910
    %v2011 = vpack.c.b16 %v1913, %v1911
    %v2012 = vpack.c.b16 %v1916, %v1914
    %v2013 = vpack.c.b16 %v1917, %v1915
    %v2014 = vpack.c.b16 %v1920, %v1918
    %v2015 = vpack.c.b16 %v1921, %v1919
    %v2016 = vpack.c.b16 %v1924, %v1922
    %v2017 = vpack.c.b16 %v1925, %v1923
    %v2018 = vpack.c.b16 %v1928, %v1926
    %v2019 = vpack.c.b16 %v1929, %v1927
    %v2020 = vpack.c.b16 %v1932, %v1930
    %v2021 = vpack.c.b16 %v1933, %v1931
    %v2022 = vpack.c.b16 %v1936, %v1934
    %v2023 = vpack.c.b16 %v1937, %v1935
    %v2024 = vpack.c.b16 %v1940, %v1938
    %v2025 = vpack.c.b16 %v1941, %v1939
    %v2026 = vpack.c.b16 %v1944, %v1942
    %v2027 = vpack.c.b16 %v1945, %v1943
    %v2028 = vpack.c.b16 %v1948, %v1946
    %v2029 = vpack.c.b16 %v1949, %v1947
    %v2030 = vpack.c.b16 %v1952, %v1950
    %v2031 = vpack.c.b16 %v1953, %v1951
    %v2032 = vpack.c.b16 %v1956, %v1954
    %v2033 = vpack.c.b16 %v1957, %v1955
    %v2034 = vpack.c.b16 %v1960, %v1958
    %v2035 = vpack.c.b16 %v1961, %v1959
    %v2036 = vpack.c.b16 %v1964, %v1962
    %v2037 = vpack.c.b16 %v1965, %v1963
    %v2038 = vpack.c.b16 %v1968, %v1966
    %v2039 = vpack.c.b16 %v1969, %v1967
    %v2040 = vpack.c.b16 %v1972, %v1970
    %v2041 = vpack.c.b16 %v1973, %v1971
    %v2042 = vpack.c.b16 %v1976, %v1974
    %v2043 = vpack.c.b16 %v1977, %v1975
    %v2044 = vpack.c.b16 %v1980, %v1978
    %v2045 = vpack.c.b16 %v1981, %v1979
    %2110 = vmatpush.bf16.msra.mxu0 %v1996
    %2111 = vmatpush.bf16.msra.mxu0 %v1994
    %2112 = vmatpush.bf16.msra.mxu0 %v1992
    %2113 = vmatpush.bf16.msra.mxu0 %v1990
    %2114 = vmatpush.bf16.msra.mxu0 %v1988
    %2115 = vmatpush.bf16.msra.mxu0 %v1986
    %2116 = vmatpush.bf16.msra.mxu0 %v1984
    %2117 = vmatpush.bf16.msra.mxu0 %v1982
    %2118 = vmatmul.bf16.gmra.mxu0 %v1111
    %v2119 = vpop.f32.mrf.mxu0
    %v2120 = vadd.f32 0.0, %v2119
    %v2121 = vpop.f32.mrf.mxu0
    %2122 = vdwg.mxu0
    %2123 = vmatpush.bf16.msra.mxu0 %v2012
    %2124 = vmatpush.bf16.msra.mxu0 %v2010
    %2125 = vmatpush.bf16.msra.mxu0 %v2008
    %2126 = vmatpush.bf16.msra.mxu0 %v2006
    %2127 = vmatpush.bf16.msra.mxu0 %v2004
    %2128 = vmatpush.bf16.msra.mxu0 %v2002
    %2129 = vmatpush.bf16.msra.mxu0 %v2000
    %2130 = vmatpush.bf16.msra.mxu0 %v1998
    %2131 = vmatmul.bf16.gmra.mxu0 %v1112
    %v2132 = vpop.f32.mrf.mxu0
    %v2133 = vadd.f32 %v2120, %v2132
    %v2134 = vpop.f32.mrf.mxu0
    %2135 = vdwg.mxu0
    %2136 = vmatpush.bf16.msra.mxu0 %v2028
    %2137 = vmatpush.bf16.msra.mxu0 %v2026
    %2138 = vmatpush.bf16.msra.mxu0 %v2024
    %2139 = vmatpush.bf16.msra.mxu0 %v2022
    %2140 = vmatpush.bf16.msra.mxu0 %v2020
    %2141 = vmatpush.bf16.msra.mxu0 %v2018
    %2142 = vmatpush.bf16.msra.mxu0 %v2016
    %2143 = vmatpush.bf16.msra.mxu0 %v2014
    %2144 = vmatmul.bf16.gmra.mxu0 %v1113
    %v2145 = vpop.f32.mrf.mxu0
    %v2146 = vadd.f32 %v2133, %v2145
    %v2147 = vpop.f32.mrf.mxu0
    %2148 = vdwg.mxu0
    %2149 = vmatpush.bf16.msra.mxu0 %v2044
    %2150 = vmatpush.bf16.msra.mxu0 %v2042
    %2151 = vmatpush.bf16.msra.mxu0 %v2040
    %2152 = vmatpush.bf16.msra.mxu0 %v2038
    %2153 = vmatpush.bf16.msra.mxu0 %v2036
    %2154 = vmatpush.bf16.msra.mxu0 %v2034
    %2155 = vmatpush.bf16.msra.mxu0 %v2032
    %2156 = vmatpush.bf16.msra.mxu0 %v2030
    %2157 = vmatmul.bf16.gmra.mxu0 %v1114
    %v2158 = vpop.f32.mrf.mxu0
    %v2159 = vadd.f32 %v2146, %v2158
    %v2160 = vpop.f32.mrf.mxu0
    %2161 = vdwg.mxu0
    %2162 = vmatpush.bf16.msra.mxu0 %v1997
    %2163 = vmatpush.bf16.msra.mxu0 %v1995
    %2164 = vmatpush.bf16.msra.mxu0 %v1993
    %2165 = vmatpush.bf16.msra.mxu0 %v1991
    %2166 = vmatpush.bf16.msra.mxu0 %v1989
    %2167 = vmatpush.bf16.msra.mxu0 %v1987
    %2168 = vmatpush.bf16.msra.mxu0 %v1985
    %2169 = vmatpush.bf16.msra.mxu0 %v1983
    %2170 = vmatmul.bf16.gmra.mxu0 %v1111
    %v2171 = vpop.f32.mrf.mxu0
    %v2172 = vadd.f32 0.0, %v2171
    %v2173 = vpop.f32.mrf.mxu0
    %2174 = vdwg.mxu0
    %2175 = vmatpush.bf16.msra.mxu0 %v2013
    %2176 = vmatpush.bf16.msra.mxu0 %v2011
    %2177 = vmatpush.bf16.msra.mxu0 %v2009
    %2178 = vmatpush.bf16.msra.mxu0 %v2007
    %2179 = vmatpush.bf16.msra.mxu0 %v2005
    %2180 = vmatpush.bf16.msra.mxu0 %v2003
    %2181 = vmatpush.bf16.msra.mxu0 %v2001
    %2182 = vmatpush.bf16.msra.mxu0 %v1999
    %2183 = vmatmul.bf16.gmra.mxu0 %v1112
    %v2184 = vpop.f32.mrf.mxu0
    %v2185 = vadd.f32 %v2172, %v2184
    %v2186 = vpop.f32.mrf.mxu0
    %2187 = vdwg.mxu0
    %2188 = vmatpush.bf16.msra.mxu0 %v2029
    %2189 = vmatpush.bf16.msra.mxu0 %v2027
    %2190 = vmatpush.bf16.msra.mxu0 %v2025
    %2191 = vmatpush.bf16.msra.mxu0 %v2023
    %2192 = vmatpush.bf16.msra.mxu0 %v2021
    %2193 = vmatpush.bf16.msra.mxu0 %v2019
    %2194 = vmatpush.bf16.msra.mxu0 %v2017
    %2195 = vmatpush.bf16.msra.mxu0 %v2015
    %2196 = vmatmul.bf16.gmra.mxu0 %v1113
    %v2197 = vpop.f32.mrf.mxu0
    %v2198 = vadd.f32 %v2185, %v2197
    %v2199 = vpop.f32.mrf.mxu0
    %2200 = vdwg.mxu0
    %2201 = vmatpush.bf16.msra.mxu0 %v2045
    %2202 = vmatpush.bf16.msra.mxu0 %v2043
    %2203 = vmatpush.bf16.msra.mxu0 %v2041
    %2204 = vmatpush.bf16.msra.mxu0 %v2039
    %2205 = vmatpush.bf16.msra.mxu0 %v2037
    %2206 = vmatpush.bf16.msra.mxu0 %v2035
    %2207 = vmatpush.bf16.msra.mxu0 %v2033
    %2208 = vmatpush.bf16.msra.mxu0 %v2031
    %2209 = vmatmul.bf16.gmra.mxu0 %v1114
    %v2210 = vpop.f32.mrf.mxu0
    %v2211 = vadd.f32 %v2198, %v2210
    %v2212 = vpop.f32.mrf.mxu0
    %2213 = vdwg.mxu0
    %v2214 = vld [vmem:[#allocation13 + $0xf] sm:$0x3]
    %v2215 = vld [vmem:[#allocation13 + $0x17] sm:$0x3]
    %v2216 = vrot.slane %v2159, 4
    %v2217 = vadd.f32 %v2159, %v2216
    %v2218 = vrot.slane %v2217, 2
    %v2219 = vadd.f32 %v2217, %v2218
    %v2220 = vrot.slane %v2219, 1
    %v2221 = vadd.f32 %v2219, %v2220
    %v2222 = vrot.slane %v2211, 4
    %v2223 = vadd.f32 %v2211, %v2222
    %v2224 = vrot.slane %v2223, 2
    %v2225 = vadd.f32 %v2223, %v2224
    %v2226 = vrot.slane %v2225, 1
    %v2227 = vadd.f32 %v2225, %v2226
    %v2228 = vmul.f32 %v2159, %v2159
    %v2229 = vmul.f32 %v2211, %v2211
    %v2230 = vrot.slane %v2228, 4
    %v2231 = vadd.f32 %v2228, %v2230
    %v2232 = vrot.slane %v2231, 2
    %v2233 = vadd.f32 %v2231, %v2232
    %v2234 = vrot.slane %v2233, 1
    %v2235 = vadd.f32 %v2233, %v2234
    %v2236 = vrot.slane %v2229, 4
    %v2237 = vadd.f32 %v2229, %v2236
    %v2238 = vrot.slane %v2237, 2
    %v2239 = vadd.f32 %v2237, %v2238
    %v2240 = vrot.slane %v2239, 1
    %v2241 = vadd.f32 %v2239, %v2240
    %v2242 = vmul.f32 %v2221, 0.125
    %v2243 = vmul.f32 %v2227, 0.125
    %v2244 = vmul.f32 %v2235, 0.125
    %v2245 = vmul.f32 %v2241, 0.125
    %v2246 = vmul.f32 %v2242, %v2242
    %v2247 = vmul.f32 %v2243, %v2243
    %v2248 = vsub.f32 %v2244, %v2246
    %v2249 = vsub.f32 %v2245, %v2247
    %v2250 = vsub.f32 %v2159, %v2242
    %v2251 = vsub.f32 %v2211, %v2243
    %v2252 = vadd.f32 %v2248, 0.8
    %v2253 = vadd.f32 %v2249, 0.8
    %v2254 = vrsqrt.pop %v2252
    %v2255 = vmul.f32 %v2254, %v2252
    %v2256 = vmul.f32 %v2255, %v2254
    %v2257 = vmul.f32 0.5, %v2256
    %v2258 = vsub.f32 1.5, %v2257
    %v2259 = vmul.f32 %v2254, %v2258
    %vm2260 = vweird.f32 %v2252
    %vm2261 = vweird.f32 %v2254
    %vm2262 = vmor %vm2260, %vm2261
    %v2263 = vsel %vm2262, %v2254, %v2259
    %v2264 = vrsqrt.pop %v2253
    %v2265 = vmul.f32 %v2264, %v2253
    %v2266 = vmul.f32 %v2265, %v2264
    %v2267 = vmul.f32 0.5, %v2266
    %v2268 = vsub.f32 1.5, %v2267
    %v2269 = vmul.f32 %v2264, %v2268
    %vm2270 = vweird.f32 %v2253
    %vm2271 = vweird.f32 %v2264
    %vm2272 = vmor %vm2270, %vm2271
    %v2273 = vsel %vm2272, %v2264, %v2269
    %v2274 = vmul.f32 %v2250, %v2263
    %v2275 = vmul.f32 %v2251, %v2273
    %v2277 = vperm.slane %v2214, 0
    %v2278 = vperm.slane %v2214, 1
    %v2281 = vmul.f32 %v2274, %v2277
    %v2282 = vmul.f32 %v2275, %v2278
    %v2284 = vperm.slane %v2215, 0
    %v2285 = vperm.slane %v2215, 1
    %v2288 = vadd.f32 %v2281, %v2284
    %v2289 = vadd.f32 %v2282, %v2285
    %v2290 = vmul.f32 %v2288, 0.2
    %v2291 = vmul.f32 %v2289, 0.2
    %v2292 = vmax.f32 %v2288, %v2290
    %v2293 = vmax.f32 %v2289, %v2291
    %v2294 = vpack.c.bf16 %v2292, %v2292
    %v2295 = vpack.c.bf16 %v2293, %v2293
    %s2296 = sshll.u32 %s1689, 4
    %2297 = dma.done %s135, %s2296
    %v2298 = vld [vmem:[%s134] sm:$0xff]
    %v2299 = vld [vmem:[%s134 + $0x8] sm:$0xff]
    %v2300 = vld [vmem:[%s134 + $0x10] sm:$0xff]
    %v2301 = vld [vmem:[%s134 + $0x18] sm:$0xff]
    %v2302 = vld [vmem:[%s134 + $0x20] sm:$0xff]
    %v2303 = vld [vmem:[%s134 + $0x28] sm:$0xff]
    %v2304 = vld [vmem:[%s134 + $0x30] sm:$0xff]
    %v2305 = vld [vmem:[%s134 + $0x38] sm:$0xff]
    %v2306 = vld [vmem:[%s134 + $0x40] sm:$0xff]
    %v2307 = vld [vmem:[%s134 + $0x48] sm:$0xff]
    %v2308 = vld [vmem:[%s134 + $0x50] sm:$0xff]
    %v2309 = vld [vmem:[%s134 + $0x58] sm:$0xff]
    %v2310 = vld [vmem:[%s134 + $0x60] sm:$0xff]
    %v2311 = vld [vmem:[%s134 + $0x68] sm:$0xff]
    %v2312 = vld [vmem:[%s134 + $0x70] sm:$0xff]
    %v2313 = vld [vmem:[%s134 + $0x78] sm:$0xff]
    %v2314 = vld [vmem:[%s134 + $0x80] sm:$0xff]
    %v2315 = vld [vmem:[%s134 + $0x88] sm:$0xff]
    %v2316 = vld [vmem:[%s134 + $0x90] sm:$0xff]
    %v2317 = vld [vmem:[%s134 + $0x98] sm:$0xff]
    %v2318 = vld [vmem:[%s134 + $0xa0] sm:$0xff]
    %v2319 = vld [vmem:[%s134 + $0xa8] sm:$0xff]
    %v2320 = vld [vmem:[%s134 + $0xb0] sm:$0xff]
    %v2321 = vld [vmem:[%s134 + $0xb8] sm:$0xff]
    %v2322 = vld [vmem:[%s134 + $0xc0] sm:$0xff]
    %v2323 = vld [vmem:[%s134 + $0xc8] sm:$0xff]
    %v2324 = vld [vmem:[%s134 + $0xd0] sm:$0xff]
    %v2325 = vld [vmem:[%s134 + $0xd8] sm:$0xff]
    %v2326 = vld [vmem:[%s134 + $0xe0] sm:$0xff]
    %v2327 = vld [vmem:[%s134 + $0xe8] sm:$0xff]
    %v2328 = vld [vmem:[%s134 + $0xf0] sm:$0xff]
    %v2329 = vld [vmem:[%s134 + $0xf8] sm:$0xff]
    %v2362 = vunpack.c.l.b16 %v2298
    %v2363 = vunpack.c.h.b16 %v2298
    %v2364 = vunpack.c.l.b16 %v2299
    %v2365 = vunpack.c.h.b16 %v2299
    %v2366 = vunpack.c.l.b16 %v2300
    %v2367 = vunpack.c.h.b16 %v2300
    %v2368 = vunpack.c.l.b16 %v2301
    %v2369 = vunpack.c.h.b16 %v2301
    %v2370 = vunpack.c.l.b16 %v2302
    %v2371 = vunpack.c.h.b16 %v2302
    %v2372 = vunpack.c.l.b16 %v2303
    %v2373 = vunpack.c.h.b16 %v2303
    %v2374 = vunpack.c.l.b16 %v2304
    %v2375 = vunpack.c.h.b16 %v2304
    %v2376 = vunpack.c.l.b16 %v2305
    %v2377 = vunpack.c.h.b16 %v2305
    %v2378 = vunpack.c.l.b16 %v2306
    %v2379 = vunpack.c.h.b16 %v2306
    %v2380 = vunpack.c.l.b16 %v2307
    %v2381 = vunpack.c.h.b16 %v2307
    %v2382 = vunpack.c.l.b16 %v2308
    %v2383 = vunpack.c.h.b16 %v2308
    %v2384 = vunpack.c.l.b16 %v2309
    %v2385 = vunpack.c.h.b16 %v2309
    %v2386 = vunpack.c.l.b16 %v2310
    %v2387 = vunpack.c.h.b16 %v2310
    %v2388 = vunpack.c.l.b16 %v2311
    %v2389 = vunpack.c.h.b16 %v2311
    %v2390 = vunpack.c.l.b16 %v2312
    %v2391 = vunpack.c.h.b16 %v2312
    %v2392 = vunpack.c.l.b16 %v2313
    %v2393 = vunpack.c.h.b16 %v2313
    %v2394 = vunpack.c.l.b16 %v2314
    %v2395 = vunpack.c.h.b16 %v2314
    %v2396 = vunpack.c.l.b16 %v2315
    %v2397 = vunpack.c.h.b16 %v2315
    %v2398 = vunpack.c.l.b16 %v2316
    %v2399 = vunpack.c.h.b16 %v2316
    %v2400 = vunpack.c.l.b16 %v2317
    %v2401 = vunpack.c.h.b16 %v2317
    %v2402 = vunpack.c.l.b16 %v2318
    %v2403 = vunpack.c.h.b16 %v2318
    %v2404 = vunpack.c.l.b16 %v2319
    %v2405 = vunpack.c.h.b16 %v2319
    %v2406 = vunpack.c.l.b16 %v2320
    %v2407 = vunpack.c.h.b16 %v2320
    %v2408 = vunpack.c.l.b16 %v2321
    %v2409 = vunpack.c.h.b16 %v2321
    %v2410 = vunpack.c.l.b16 %v2322
    %v2411 = vunpack.c.h.b16 %v2322
    %v2412 = vunpack.c.l.b16 %v2323
    %v2413 = vunpack.c.h.b16 %v2323
    %v2414 = vunpack.c.l.b16 %v2324
    %v2415 = vunpack.c.h.b16 %v2324
    %v2416 = vunpack.c.l.b16 %v2325
    %v2417 = vunpack.c.h.b16 %v2325
    %v2418 = vunpack.c.l.b16 %v2326
    %v2419 = vunpack.c.h.b16 %v2326
    %v2420 = vunpack.c.l.b16 %v2327
    %v2421 = vunpack.c.h.b16 %v2327
    %v2422 = vunpack.c.l.b16 %v2328
    %v2423 = vunpack.c.h.b16 %v2328
    %v2424 = vunpack.c.l.b16 %v2329
    %v2425 = vunpack.c.h.b16 %v2329
    %v2426 = vpack.c.b16 %v2364, %v2362
    %v2427 = vpack.c.b16 %v2365, %v2363
    %v2428 = vpack.c.b16 %v2368, %v2366
    %v2429 = vpack.c.b16 %v2369, %v2367
    %v2430 = vpack.c.b16 %v2372, %v2370
    %v2431 = vpack.c.b16 %v2373, %v2371
    %v2432 = vpack.c.b16 %v2376, %v2374
    %v2433 = vpack.c.b16 %v2377, %v2375
    %v2434 = vpack.c.b16 %v2380, %v2378
    %v2435 = vpack.c.b16 %v2381, %v2379
    %v2436 = vpack.c.b16 %v2384, %v2382
    %v2437 = vpack.c.b16 %v2385, %v2383
    %v2438 = vpack.c.b16 %v2388, %v2386
    %v2439 = vpack.c.b16 %v2389, %v2387
    %v2440 = vpack.c.b16 %v2392, %v2390
    %v2441 = vpack.c.b16 %v2393, %v2391
    %v2442 = vpack.c.b16 %v2396, %v2394
    %v2443 = vpack.c.b16 %v2397, %v2395
    %v2444 = vpack.c.b16 %v2400, %v2398
    %v2445 = vpack.c.b16 %v2401, %v2399
    %v2446 = vpack.c.b16 %v2404, %v2402
    %v2447 = vpack.c.b16 %v2405, %v2403
    %v2448 = vpack.c.b16 %v2408, %v2406
    %v2449 = vpack.c.b16 %v2409, %v2407
    %v2450 = vpack.c.b16 %v2412, %v2410
    %v2451 = vpack.c.b16 %v2413, %v2411
    %v2452 = vpack.c.b16 %v2416, %v2414
    %v2453 = vpack.c.b16 %v2417, %v2415
    %v2454 = vpack.c.b16 %v2420, %v2418
    %v2455 = vpack.c.b16 %v2421, %v2419
    %v2456 = vpack.c.b16 %v2424, %v2422
    %v2457 = vpack.c.b16 %v2425, %v2423
    %2490 = vmatpush.bf16.msra.mxu0 %v2440
    %2491 = vmatpush.bf16.msra.mxu0 %v2438
    %2492 = vmatpush.bf16.msra.mxu0 %v2436
    %2493 = vmatpush.bf16.msra.mxu0 %v2434
    %2494 = vmatpush.bf16.msra.mxu0 %v2432
    %2495 = vmatpush.bf16.msra.mxu0 %v2430
    %2496 = vmatpush.bf16.msra.mxu0 %v2428
    %2497 = vmatpush.bf16.msra.mxu0 %v2426
    %2498 = vmatmul.bf16.gmra.mxu0 %v2294
    %v2499 = vpop.f32.mrf.mxu0
    %v2500 = vadd.f32 0.0, %v2499
    %v2501 = vpop.f32.mrf.mxu0
    %2502 = vdwg.mxu0
    %2503 = vmatpush.bf16.msra.mxu0 %v2456
    %2504 = vmatpush.bf16.msra.mxu0 %v2454
    %2505 = vmatpush.bf16.msra.mxu0 %v2452
    %2506 = vmatpush.bf16.msra.mxu0 %v2450
    %2507 = vmatpush.bf16.msra.mxu0 %v2448
    %2508 = vmatpush.bf16.msra.mxu0 %v2446
    %2509 = vmatpush.bf16.msra.mxu0 %v2444
    %2510 = vmatpush.bf16.msra.mxu0 %v2442
    %2511 = vmatmul.bf16.gmra.mxu0 %v2295
    %v2512 = vpop.f32.mrf.mxu0
    %v2513 = vadd.f32 %v2500, %v2512
    %v2514 = vpop.f32.mrf.mxu0
    %2515 = vdwg.mxu0
    %2516 = vmatpush.bf16.msra.mxu0 %v2441
    %2517 = vmatpush.bf16.msra.mxu0 %v2439
    %2518 = vmatpush.bf16.msra.mxu0 %v2437
    %2519 = vmatpush.bf16.msra.mxu0 %v2435
    %2520 = vmatpush.bf16.msra.mxu0 %v2433
    %2521 = vmatpush.bf16.msra.mxu0 %v2431
    %2522 = vmatpush.bf16.msra.mxu0 %v2429
    %2523 = vmatpush.bf16.msra.mxu0 %v2427
    %2524 = vmatmul.bf16.gmra.mxu0 %v2294
    %v2525 = vpop.f32.mrf.mxu0
    %v2526 = vadd.f32 0.0, %v2525
    %v2527 = vpop.f32.mrf.mxu0
    %2528 = vdwg.mxu0
    %2529 = vmatpush.bf16.msra.mxu0 %v2457
    %2530 = vmatpush.bf16.msra.mxu0 %v2455
    %2531 = vmatpush.bf16.msra.mxu0 %v2453
    %2532 = vmatpush.bf16.msra.mxu0 %v2451
    %2533 = vmatpush.bf16.msra.mxu0 %v2449
    %2534 = vmatpush.bf16.msra.mxu0 %v2447
    %2535 = vmatpush.bf16.msra.mxu0 %v2445
    %2536 = vmatpush.bf16.msra.mxu0 %v2443
    %2537 = vmatmul.bf16.gmra.mxu0 %v2295
    %v2538 = vpop.f32.mrf.mxu0
    %v2539 = vadd.f32 %v2526, %v2538
    %v2540 = vpop.f32.mrf.mxu0
    %2541 = vdwg.mxu0
    %v2574 = vunpack.c.l.b16 %v1692
    %v2575 = vunpack.c.h.b16 %v1692
    %v2576 = vunpack.c.l.b16 %v1693
    %v2577 = vunpack.c.h.b16 %v1693
    %v2578 = vunpack.c.l.b16 %v1694
    %v2579 = vunpack.c.h.b16 %v1694
    %v2580 = vunpack.c.l.b16 %v1695
    %v2581 = vunpack.c.h.b16 %v1695
    %v2582 = vunpack.c.l.b16 %v1696
    %v2583 = vunpack.c.h.b16 %v1696
    %v2584 = vunpack.c.l.b16 %v1697
    %v2585 = vunpack.c.h.b16 %v1697
    %v2586 = vunpack.c.l.b16 %v1698
    %v2587 = vunpack.c.h.b16 %v1698
    %v2588 = vunpack.c.l.b16 %v1699
    %v2589 = vunpack.c.h.b16 %v1699
    %v2590 = vunpack.c.l.b16 %v1700
    %v2591 = vunpack.c.h.b16 %v1700
    %v2592 = vunpack.c.l.b16 %v1701
    %v2593 = vunpack.c.h.b16 %v1701
    %v2594 = vunpack.c.l.b16 %v1702
    %v2595 = vunpack.c.h.b16 %v1702
    %v2596 = vunpack.c.l.b16 %v1703
    %v2597 = vunpack.c.h.b16 %v1703
    %v2598 = vunpack.c.l.b16 %v1704
    %v2599 = vunpack.c.h.b16 %v1704
    %v2600 = vunpack.c.l.b16 %v1705
    %v2601 = vunpack.c.h.b16 %v1705
    %v2602 = vunpack.c.l.b16 %v1706
    %v2603 = vunpack.c.h.b16 %v1706
    %v2604 = vunpack.c.l.b16 %v1707
    %v2605 = vunpack.c.h.b16 %v1707
    %v2606 = vunpack.c.l.b16 %v1708
    %v2607 = vunpack.c.h.b16 %v1708
    %v2608 = vunpack.c.l.b16 %v1709
    %v2609 = vunpack.c.h.b16 %v1709
    %v2610 = vunpack.c.l.b16 %v1710
    %v2611 = vunpack.c.h.b16 %v1710
    %v2612 = vunpack.c.l.b16 %v1711
    %v2613 = vunpack.c.h.b16 %v1711
    %v2614 = vunpack.c.l.b16 %v1712
    %v2615 = vunpack.c.h.b16 %v1712
    %v2616 = vunpack.c.l.b16 %v1713
    %v2617 = vunpack.c.h.b16 %v1713
    %v2618 = vunpack.c.l.b16 %v1714
    %v2619 = vunpack.c.h.b16 %v1714
    %v2620 = vunpack.c.l.b16 %v1715
    %v2621 = vunpack.c.h.b16 %v1715
    %v2622 = vunpack.c.l.b16 %v1716
    %v2623 = vunpack.c.h.b16 %v1716
    %v2624 = vunpack.c.l.b16 %v1717
    %v2625 = vunpack.c.h.b16 %v1717
    %v2626 = vunpack.c.l.b16 %v1718
    %v2627 = vunpack.c.h.b16 %v1718
    %v2628 = vunpack.c.l.b16 %v1719
    %v2629 = vunpack.c.h.b16 %v1719
    %v2630 = vunpack.c.l.b16 %v1720
    %v2631 = vunpack.c.h.b16 %v1720
    %v2632 = vunpack.c.l.b16 %v1721
    %v2633 = vunpack.c.h.b16 %v1721
    %v2634 = vunpack.c.l.b16 %v1722
    %v2635 = vunpack.c.h.b16 %v1722
    %v2636 = vunpack.c.l.b16 %v1723
    %v2637 = vunpack.c.h.b16 %v1723
    %v2638 = vpack.c.b16 %v2576, %v2574
    %v2639 = vpack.c.b16 %v2577, %v2575
    %v2640 = vpack.c.b16 %v2580, %v2578
    %v2641 = vpack.c.b16 %v2581, %v2579
    %v2642 = vpack.c.b16 %v2584, %v2582
    %v2643 = vpack.c.b16 %v2585, %v2583
    %v2644 = vpack.c.b16 %v2588, %v2586
    %v2645 = vpack.c.b16 %v2589, %v2587
    %v2646 = vpack.c.b16 %v2592, %v2590
    %v2647 = vpack.c.b16 %v2593, %v2591
    %v2648 = vpack.c.b16 %v2596, %v2594
    %v2649 = vpack.c.b16 %v2597, %v2595
    %v2650 = vpack.c.b16 %v2600, %v2598
    %v2651 = vpack.c.b16 %v2601, %v2599
    %v2652 = vpack.c.b16 %v2604, %v2602
    %v2653 = vpack.c.b16 %v2605, %v2603
    %v2654 = vpack.c.b16 %v2608, %v2606
    %v2655 = vpack.c.b16 %v2609, %v2607
    %v2656 = vpack.c.b16 %v2612, %v2610
    %v2657 = vpack.c.b16 %v2613, %v2611
    %v2658 = vpack.c.b16 %v2616, %v2614
    %v2659 = vpack.c.b16 %v2617, %v2615
    %v2660 = vpack.c.b16 %v2620, %v2618
    %v2661 = vpack.c.b16 %v2621, %v2619
    %v2662 = vpack.c.b16 %v2624, %v2622
    %v2663 = vpack.c.b16 %v2625, %v2623
    %v2664 = vpack.c.b16 %v2628, %v2626
    %v2665 = vpack.c.b16 %v2629, %v2627
    %v2666 = vpack.c.b16 %v2632, %v2630
    %v2667 = vpack.c.b16 %v2633, %v2631
    %v2668 = vpack.c.b16 %v2636, %v2634
    %v2669 = vpack.c.b16 %v2637, %v2635
    %2702 = vmatpush.bf16.msra.mxu0 %v2652
    %2703 = vmatpush.bf16.msra.mxu0 %v2650
    %2704 = vmatpush.bf16.msra.mxu0 %v2648
    %2705 = vmatpush.bf16.msra.mxu0 %v2646
    %2706 = vmatpush.bf16.msra.mxu0 %v2644
    %2707 = vmatpush.bf16.msra.mxu0 %v2642
    %2708 = vmatpush.bf16.msra.mxu0 %v2640
    %2709 = vmatpush.bf16.msra.mxu0 %v2638
    %2710 = vmatmul.bf16.gmra.mxu0 %v1687
    %v2711 = vpop.f32.mrf.mxu0
    %v2712 = vadd.f32 %v2513, %v2711
    %v2713 = vpop.f32.mrf.mxu0
    %2714 = vdwg.mxu0
    %2715 = vmatpush.bf16.msra.mxu0 %v2668
    %2716 = vmatpush.bf16.msra.mxu0 %v2666
    %2717 = vmatpush.bf16.msra.mxu0 %v2664
    %2718 = vmatpush.bf16.msra.mxu0 %v2662
    %2719 = vmatpush.bf16.msra.mxu0 %v2660
    %2720 = vmatpush.bf16.msra.mxu0 %v2658
    %2721 = vmatpush.bf16.msra.mxu0 %v2656
    %2722 = vmatpush.bf16.msra.mxu0 %v2654
    %2723 = vmatmul.bf16.gmra.mxu0 %v1688
    %v2724 = vpop.f32.mrf.mxu0
    %v2725 = vadd.f32 %v2712, %v2724
    %v2726 = vpop.f32.mrf.mxu0
    %2727 = vdwg.mxu0
    %2728 = vmatpush.bf16.msra.mxu0 %v2653
    %2729 = vmatpush.bf16.msra.mxu0 %v2651
    %2730 = vmatpush.bf16.msra.mxu0 %v2649
    %2731 = vmatpush.bf16.msra.mxu0 %v2647
    %2732 = vmatpush.bf16.msra.mxu0 %v2645
    %2733 = vmatpush.bf16.msra.mxu0 %v2643
    %2734 = vmatpush.bf16.msra.mxu0 %v2641
    %2735 = vmatpush.bf16.msra.mxu0 %v2639
    %2736 = vmatmul.bf16.gmra.mxu0 %v1687
    %v2737 = vpop.f32.mrf.mxu0
    %v2738 = vadd.f32 %v2539, %v2737
    %v2739 = vpop.f32.mrf.mxu0
    %2740 = vdwg.mxu0
    %2741 = vmatpush.bf16.msra.mxu0 %v2669
    %2742 = vmatpush.bf16.msra.mxu0 %v2667
    %2743 = vmatpush.bf16.msra.mxu0 %v2665
    %2744 = vmatpush.bf16.msra.mxu0 %v2663
    %2745 = vmatpush.bf16.msra.mxu0 %v2661
    %2746 = vmatpush.bf16.msra.mxu0 %v2659
    %2747 = vmatpush.bf16.msra.mxu0 %v2657
    %2748 = vmatpush.bf16.msra.mxu0 %v2655
    %2749 = vmatmul.bf16.gmra.mxu0 %v1688
    %v2750 = vpop.f32.mrf.mxu0
    %v2751 = vadd.f32 %v2738, %v2750
    %v2752 = vpop.f32.mrf.mxu0
    %2753 = vdwg.mxu0
    %s2754 = sshll.u32 %s1116, 4
    %2755 = dma.done %s151, %s2754
    %v2756 = vld [vmem:[%s150] sm:$0xff]
    %v2757 = vld [vmem:[%s150 + $0x8] sm:$0xff]
    %v2758 = vld [vmem:[%s150 + $0x10] sm:$0xff]
    %v2759 = vld [vmem:[%s150 + $0x18] sm:$0xff]
    %v2760 = vld [vmem:[%s150 + $0x20] sm:$0xff]
    %v2761 = vld [vmem:[%s150 + $0x28] sm:$0xff]
    %v2762 = vld [vmem:[%s150 + $0x30] sm:$0xff]
    %v2763 = vld [vmem:[%s150 + $0x38] sm:$0xff]
    %v2764 = vld [vmem:[%s150 + $0x40] sm:$0xff]
    %v2765 = vld [vmem:[%s150 + $0x48] sm:$0xff]
    %v2766 = vld [vmem:[%s150 + $0x50] sm:$0xff]
    %v2767 = vld [vmem:[%s150 + $0x58] sm:$0xff]
    %v2768 = vld [vmem:[%s150 + $0x60] sm:$0xff]
    %v2769 = vld [vmem:[%s150 + $0x68] sm:$0xff]
    %v2770 = vld [vmem:[%s150 + $0x70] sm:$0xff]
    %v2771 = vld [vmem:[%s150 + $0x78] sm:$0xff]
    %v2772 = vld [vmem:[%s150 + $0x80] sm:$0xff]
    %v2773 = vld [vmem:[%s150 + $0x88] sm:$0xff]
    %v2774 = vld [vmem:[%s150 + $0x90] sm:$0xff]
    %v2775 = vld [vmem:[%s150 + $0x98] sm:$0xff]
    %v2776 = vld [vmem:[%s150 + $0xa0] sm:$0xff]
    %v2777 = vld [vmem:[%s150 + $0xa8] sm:$0xff]
    %v2778 = vld [vmem:[%s150 + $0xb0] sm:$0xff]
    %v2779 = vld [vmem:[%s150 + $0xb8] sm:$0xff]
    %v2780 = vld [vmem:[%s150 + $0xc0] sm:$0xff]
    %v2781 = vld [vmem:[%s150 + $0xc8] sm:$0xff]
    %v2782 = vld [vmem:[%s150 + $0xd0] sm:$0xff]
    %v2783 = vld [vmem:[%s150 + $0xd8] sm:$0xff]
    %v2784 = vld [vmem:[%s150 + $0xe0] sm:$0xff]
    %v2785 = vld [vmem:[%s150 + $0xe8] sm:$0xff]
    %v2786 = vld [vmem:[%s150 + $0xf0] sm:$0xff]
    %v2787 = vld [vmem:[%s150 + $0xf8] sm:$0xff]
    %v2788 = vld [vmem:[%s150 + $0x100] sm:$0xff]
    %v2789 = vld [vmem:[%s150 + $0x108] sm:$0xff]
    %v2790 = vld [vmem:[%s150 + $0x110] sm:$0xff]
    %v2791 = vld [vmem:[%s150 + $0x118] sm:$0xff]
    %v2792 = vld [vmem:[%s150 + $0x120] sm:$0xff]
    %v2793 = vld [vmem:[%s150 + $0x128] sm:$0xff]
    %v2794 = vld [vmem:[%s150 + $0x130] sm:$0xff]
    %v2795 = vld [vmem:[%s150 + $0x138] sm:$0xff]
    %v2796 = vld [vmem:[%s150 + $0x140] sm:$0xff]
    %v2797 = vld [vmem:[%s150 + $0x148] sm:$0xff]
    %v2798 = vld [vmem:[%s150 + $0x150] sm:$0xff]
    %v2799 = vld [vmem:[%s150 + $0x158] sm:$0xff]
    %v2800 = vld [vmem:[%s150 + $0x160] sm:$0xff]
    %v2801 = vld [vmem:[%s150 + $0x168] sm:$0xff]
    %v2802 = vld [vmem:[%s150 + $0x170] sm:$0xff]
    %v2803 = vld [vmem:[%s150 + $0x178] sm:$0xff]
    %v2804 = vld [vmem:[%s150 + $0x180] sm:$0xff]
    %v2805 = vld [vmem:[%s150 + $0x188] sm:$0xff]
    %v2806 = vld [vmem:[%s150 + $0x190] sm:$0xff]
    %v2807 = vld [vmem:[%s150 + $0x198] sm:$0xff]
    %v2808 = vld [vmem:[%s150 + $0x1a0] sm:$0xff]
    %v2809 = vld [vmem:[%s150 + $0x1a8] sm:$0xff]
    %v2810 = vld [vmem:[%s150 + $0x1b0] sm:$0xff]
    %v2811 = vld [vmem:[%s150 + $0x1b8] sm:$0xff]
    %v2812 = vld [vmem:[%s150 + $0x1c0] sm:$0xff]
    %v2813 = vld [vmem:[%s150 + $0x1c8] sm:$0xff]
    %v2814 = vld [vmem:[%s150 + $0x1d0] sm:$0xff]
    %v2815 = vld [vmem:[%s150 + $0x1d8] sm:$0xff]
    %v2816 = vld [vmem:[%s150 + $0x1e0] sm:$0xff]
    %v2817 = vld [vmem:[%s150 + $0x1e8] sm:$0xff]
    %v2818 = vld [vmem:[%s150 + $0x1f0] sm:$0xff]
    %v2819 = vld [vmem:[%s150 + $0x1f8] sm:$0xff]
    %v2884 = vunpack.c.l.b16 %v2756
    %v2885 = vunpack.c.h.b16 %v2756
    %v2886 = vunpack.c.l.b16 %v2757
    %v2887 = vunpack.c.h.b16 %v2757
    %v2888 = vunpack.c.l.b16 %v2758
    %v2889 = vunpack.c.h.b16 %v2758
    %v2890 = vunpack.c.l.b16 %v2759
    %v2891 = vunpack.c.h.b16 %v2759
    %v2892 = vunpack.c.l.b16 %v2760
    %v2893 = vunpack.c.h.b16 %v2760
    %v2894 = vunpack.c.l.b16 %v2761
    %v2895 = vunpack.c.h.b16 %v2761
    %v2896 = vunpack.c.l.b16 %v2762
    %v2897 = vunpack.c.h.b16 %v2762
    %v2898 = vunpack.c.l.b16 %v2763
    %v2899 = vunpack.c.h.b16 %v2763
    %v2900 = vunpack.c.l.b16 %v2764
    %v2901 = vunpack.c.h.b16 %v2764
    %v2902 = vunpack.c.l.b16 %v2765
    %v2903 = vunpack.c.h.b16 %v2765
    %v2904 = vunpack.c.l.b16 %v2766
    %v2905 = vunpack.c.h.b16 %v2766
    %v2906 = vunpack.c.l.b16 %v2767
    %v2907 = vunpack.c.h.b16 %v2767
    %v2908 = vunpack.c.l.b16 %v2768
    %v2909 = vunpack.c.h.b16 %v2768
    %v2910 = vunpack.c.l.b16 %v2769
    %v2911 = vunpack.c.h.b16 %v2769
    %v2912 = vunpack.c.l.b16 %v2770
    %v2913 = vunpack.c.h.b16 %v2770
    %v2914 = vunpack.c.l.b16 %v2771
    %v2915 = vunpack.c.h.b16 %v2771
    %v2916 = vunpack.c.l.b16 %v2772
    %v2917 = vunpack.c.h.b16 %v2772
    %v2918 = vunpack.c.l.b16 %v2773
    %v2919 = vunpack.c.h.b16 %v2773
    %v2920 = vunpack.c.l.b16 %v2774
    %v2921 = vunpack.c.h.b16 %v2774
    %v2922 = vunpack.c.l.b16 %v2775
    %v2923 = vunpack.c.h.b16 %v2775
    %v2924 = vunpack.c.l.b16 %v2776
    %v2925 = vunpack.c.h.b16 %v2776
    %v2926 = vunpack.c.l.b16 %v2777
    %v2927 = vunpack.c.h.b16 %v2777
    %v2928 = vunpack.c.l.b16 %v2778
    %v2929 = vunpack.c.h.b16 %v2778
    %v2930 = vunpack.c.l.b16 %v2779
    %v2931 = vunpack.c.h.b16 %v2779
    %v2932 = vunpack.c.l.b16 %v2780
    %v2933 = vunpack.c.h.b16 %v2780
    %v2934 = vunpack.c.l.b16 %v2781
    %v2935 = vunpack.c.h.b16 %v2781
    %v2936 = vunpack.c.l.b16 %v2782
    %v2937 = vunpack.c.h.b16 %v2782
    %v2938 = vunpack.c.l.b16 %v2783
    %v2939 = vunpack.c.h.b16 %v2783
    %v2940 = vunpack.c.l.b16 %v2784
    %v2941 = vunpack.c.h.b16 %v2784
    %v2942 = vunpack.c.l.b16 %v2785
    %v2943 = vunpack.c.h.b16 %v2785
    %v2944 = vunpack.c.l.b16 %v2786
    %v2945 = vunpack.c.h.b16 %v2786
    %v2946 = vunpack.c.l.b16 %v2787
    %v2947 = vunpack.c.h.b16 %v2787
    %v2948 = vunpack.c.l.b16 %v2788
    %v2949 = vunpack.c.h.b16 %v2788
    %v2950 = vunpack.c.l.b16 %v2789
    %v2951 = vunpack.c.h.b16 %v2789
    %v2952 = vunpack.c.l.b16 %v2790
    %v2953 = vunpack.c.h.b16 %v2790
    %v2954 = vunpack.c.l.b16 %v2791
    %v2955 = vunpack.c.h.b16 %v2791
    %v2956 = vunpack.c.l.b16 %v2792
    %v2957 = vunpack.c.h.b16 %v2792
    %v2958 = vunpack.c.l.b16 %v2793
    %v2959 = vunpack.c.h.b16 %v2793
    %v2960 = vunpack.c.l.b16 %v2794
    %v2961 = vunpack.c.h.b16 %v2794
    %v2962 = vunpack.c.l.b16 %v2795
    %v2963 = vunpack.c.h.b16 %v2795
    %v2964 = vunpack.c.l.b16 %v2796
    %v2965 = vunpack.c.h.b16 %v2796
    %v2966 = vunpack.c.l.b16 %v2797
    %v2967 = vunpack.c.h.b16 %v2797
    %v2968 = vunpack.c.l.b16 %v2798
    %v2969 = vunpack.c.h.b16 %v2798
    %v2970 = vunpack.c.l.b16 %v2799
    %v2971 = vunpack.c.h.b16 %v2799
    %v2972 = vunpack.c.l.b16 %v2800
    %v2973 = vunpack.c.h.b16 %v2800
    %v2974 = vunpack.c.l.b16 %v2801
    %v2975 = vunpack.c.h.b16 %v2801
    %v2976 = vunpack.c.l.b16 %v2802
    %v2977 = vunpack.c.h.b16 %v2802
    %v2978 = vunpack.c.l.b16 %v2803
    %v2979 = vunpack.c.h.b16 %v2803
    %v2980 = vunpack.c.l.b16 %v2804
    %v2981 = vunpack.c.h.b16 %v2804
    %v2982 = vunpack.c.l.b16 %v2805
    %v2983 = vunpack.c.h.b16 %v2805
    %v2984 = vunpack.c.l.b16 %v2806
    %v2985 = vunpack.c.h.b16 %v2806
    %v2986 = vunpack.c.l.b16 %v2807
    %v2987 = vunpack.c.h.b16 %v2807
    %v2988 = vunpack.c.l.b16 %v2808
    %v2989 = vunpack.c.h.b16 %v2808
    %v2990 = vunpack.c.l.b16 %v2809
    %v2991 = vunpack.c.h.b16 %v2809
    %v2992 = vunpack.c.l.b16 %v2810
    %v2993 = vunpack.c.h.b16 %v2810
    %v2994 = vunpack.c.l.b16 %v2811
    %v2995 = vunpack.c.h.b16 %v2811
    %v2996 = vunpack.c.l.b16 %v2812
    %v2997 = vunpack.c.h.b16 %v2812
    %v2998 = vunpack.c.l.b16 %v2813
    %v2999 = vunpack.c.h.b16 %v2813
    %v3000 = vunpack.c.l.b16 %v2814
    %v3001 = vunpack.c.h.b16 %v2814
    %v3002 = vunpack.c.l.b16 %v2815
    %v3003 = vunpack.c.h.b16 %v2815
    %v3004 = vunpack.c.l.b16 %v2816
    %v3005 = vunpack.c.h.b16 %v2816
    %v3006 = vunpack.c.l.b16 %v2817
    %v3007 = vunpack.c.h.b16 %v2817
    %v3008 = vunpack.c.l.b16 %v2818
    %v3009 = vunpack.c.h.b16 %v2818
    %v3010 = vunpack.c.l.b16 %v2819
    %v3011 = vunpack.c.h.b16 %v2819
    %v3012 = vpack.c.b16 %v2886, %v2884
    %v3013 = vpack.c.b16 %v2887, %v2885
    %v3014 = vpack.c.b16 %v2890, %v2888
    %v3015 = vpack.c.b16 %v2891, %v2889
    %v3016 = vpack.c.b16 %v2894, %v2892
    %v3017 = vpack.c.b16 %v2895, %v2893
    %v3018 = vpack.c.b16 %v2898, %v2896
    %v3019 = vpack.c.b16 %v2899, %v2897
    %v3020 = vpack.c.b16 %v2902, %v2900
    %v3021 = vpack.c.b16 %v2903, %v2901
    %v3022 = vpack.c.b16 %v2906, %v2904
    %v3023 = vpack.c.b16 %v2907, %v2905
    %v3024 = vpack.c.b16 %v2910, %v2908
    %v3025 = vpack.c.b16 %v2911, %v2909
    %v3026 = vpack.c.b16 %v2914, %v2912
    %v3027 = vpack.c.b16 %v2915, %v2913
    %v3028 = vpack.c.b16 %v2918, %v2916
    %v3029 = vpack.c.b16 %v2919, %v2917
    %v3030 = vpack.c.b16 %v2922, %v2920
    %v3031 = vpack.c.b16 %v2923, %v2921
    %v3032 = vpack.c.b16 %v2926, %v2924
    %v3033 = vpack.c.b16 %v2927, %v2925
    %v3034 = vpack.c.b16 %v2930, %v2928
    %v3035 = vpack.c.b16 %v2931, %v2929
    %v3036 = vpack.c.b16 %v2934, %v2932
    %v3037 = vpack.c.b16 %v2935, %v2933
    %v3038 = vpack.c.b16 %v2938, %v2936
    %v3039 = vpack.c.b16 %v2939, %v2937
    %v3040 = vpack.c.b16 %v2942, %v2940
    %v3041 = vpack.c.b16 %v2943, %v2941
    %v3042 = vpack.c.b16 %v2946, %v2944
    %v3043 = vpack.c.b16 %v2947, %v2945
    %v3044 = vpack.c.b16 %v2950, %v2948
    %v3045 = vpack.c.b16 %v2951, %v2949
    %v3046 = vpack.c.b16 %v2954, %v2952
    %v3047 = vpack.c.b16 %v2955, %v2953
    %v3048 = vpack.c.b16 %v2958, %v2956
    %v3049 = vpack.c.b16 %v2959, %v2957
    %v3050 = vpack.c.b16 %v2962, %v2960
    %v3051 = vpack.c.b16 %v2963, %v2961
    %v3052 = vpack.c.b16 %v2966, %v2964
    %v3053 = vpack.c.b16 %v2967, %v2965
    %v3054 = vpack.c.b16 %v2970, %v2968
    %v3055 = vpack.c.b16 %v2971, %v2969
    %v3056 = vpack.c.b16 %v2974, %v2972
    %v3057 = vpack.c.b16 %v2975, %v2973
    %v3058 = vpack.c.b16 %v2978, %v2976
    %v3059 = vpack.c.b16 %v2979, %v2977
    %v3060 = vpack.c.b16 %v2982, %v2980
    %v3061 = vpack.c.b16 %v2983, %v2981
    %v3062 = vpack.c.b16 %v2986, %v2984
    %v3063 = vpack.c.b16 %v2987, %v2985
    %v3064 = vpack.c.b16 %v2990, %v2988
    %v3065 = vpack.c.b16 %v2991, %v2989
    %v3066 = vpack.c.b16 %v2994, %v2992
    %v3067 = vpack.c.b16 %v2995, %v2993
    %v3068 = vpack.c.b16 %v2998, %v2996
    %v3069 = vpack.c.b16 %v2999, %v2997
    %v3070 = vpack.c.b16 %v3002, %v3000
    %v3071 = vpack.c.b16 %v3003, %v3001
    %v3072 = vpack.c.b16 %v3006, %v3004
    %v3073 = vpack.c.b16 %v3007, %v3005
    %v3074 = vpack.c.b16 %v3010, %v3008
    %v3075 = vpack.c.b16 %v3011, %v3009
    %3140 = vmatpush.bf16.msra.mxu0 %v3026
    %3141 = vmatpush.bf16.msra.mxu0 %v3024
    %3142 = vmatpush.bf16.msra.mxu0 %v3022
    %3143 = vmatpush.bf16.msra.mxu0 %v3020
    %3144 = vmatpush.bf16.msra.mxu0 %v3018
    %3145 = vmatpush.bf16.msra.mxu0 %v3016
    %3146 = vmatpush.bf16.msra.mxu0 %v3014
    %3147 = vmatpush.bf16.msra.mxu0 %v3012
    %3148 = vmatmul.bf16.gmra.mxu0 %v1111
    %v3149 = vpop.f32.mrf.mxu0
    %v3150 = vadd.f32 0.0, %v3149
    %v3151 = vpop.f32.mrf.mxu0
    %3152 = vdwg.mxu0
    %3153 = vmatpush.bf16.msra.mxu0 %v3042
    %3154 = vmatpush.bf16.msra.mxu0 %v3040
    %3155 = vmatpush.bf16.msra.mxu0 %v3038
    %3156 = vmatpush.bf16.msra.mxu0 %v3036
    %3157 = vmatpush.bf16.msra.mxu0 %v3034
    %3158 = vmatpush.bf16.msra.mxu0 %v3032
    %3159 = vmatpush.bf16.msra.mxu0 %v3030
    %3160 = vmatpush.bf16.msra.mxu0 %v3028
    %3161 = vmatmul.bf16.gmra.mxu0 %v1112
    %v3162 = vpop.f32.mrf.mxu0
    %v3163 = vadd.f32 %v3150, %v3162
    %v3164 = vpop.f32.mrf.mxu0
    %3165 = vdwg.mxu0
    %3166 = vmatpush.bf16.msra.mxu0 %v3058
    %3167 = vmatpush.bf16.msra.mxu0 %v3056
    %3168 = vmatpush.bf16.msra.mxu0 %v3054
    %3169 = vmatpush.bf16.msra.mxu0 %v3052
    %3170 = vmatpush.bf16.msra.mxu0 %v3050
    %3171 = vmatpush.bf16.msra.mxu0 %v3048
    %3172 = vmatpush.bf16.msra.mxu0 %v3046
    %3173 = vmatpush.bf16.msra.mxu0 %v3044
    %3174 = vmatmul.bf16.gmra.mxu0 %v1113
    %v3175 = vpop.f32.mrf.mxu0
    %v3176 = vadd.f32 %v3163, %v3175
    %v3177 = vpop.f32.mrf.mxu0
    %3178 = vdwg.mxu0
    %3179 = vmatpush.bf16.msra.mxu0 %v3074
    %3180 = vmatpush.bf16.msra.mxu0 %v3072
    %3181 = vmatpush.bf16.msra.mxu0 %v3070
    %3182 = vmatpush.bf16.msra.mxu0 %v3068
    %3183 = vmatpush.bf16.msra.mxu0 %v3066
    %3184 = vmatpush.bf16.msra.mxu0 %v3064
    %3185 = vmatpush.bf16.msra.mxu0 %v3062
    %3186 = vmatpush.bf16.msra.mxu0 %v3060
    %3187 = vmatmul.bf16.gmra.mxu0 %v1114
    %v3188 = vpop.f32.mrf.mxu0
    %v3189 = vadd.f32 %v3176, %v3188
    %v3190 = vpop.f32.mrf.mxu0
    %3191 = vdwg.mxu0
    %3192 = vmatpush.bf16.msra.mxu0 %v3027
    %3193 = vmatpush.bf16.msra.mxu0 %v3025
    %3194 = vmatpush.bf16.msra.mxu0 %v3023
    %3195 = vmatpush.bf16.msra.mxu0 %v3021
    %3196 = vmatpush.bf16.msra.mxu0 %v3019
    %3197 = vmatpush.bf16.msra.mxu0 %v3017
    %3198 = vmatpush.bf16.msra.mxu0 %v3015
    %3199 = vmatpush.bf16.msra.mxu0 %v3013
    %3200 = vmatmul.bf16.gmra.mxu0 %v1111
    %v3201 = vpop.f32.mrf.mxu0
    %v3202 = vadd.f32 0.0, %v3201
    %v3203 = vpop.f32.mrf.mxu0
    %3204 = vdwg.mxu0
    %3205 = vmatpush.bf16.msra.mxu0 %v3043
    %3206 = vmatpush.bf16.msra.mxu0 %v3041
    %3207 = vmatpush.bf16.msra.mxu0 %v3039
    %3208 = vmatpush.bf16.msra.mxu0 %v3037
    %3209 = vmatpush.bf16.msra.mxu0 %v3035
    %3210 = vmatpush.bf16.msra.mxu0 %v3033
    %3211 = vmatpush.bf16.msra.mxu0 %v3031
    %3212 = vmatpush.bf16.msra.mxu0 %v3029
    %3213 = vmatmul.bf16.gmra.mxu0 %v1112
    %v3214 = vpop.f32.mrf.mxu0
    %v3215 = vadd.f32 %v3202, %v3214
    %v3216 = vpop.f32.mrf.mxu0
    %3217 = vdwg.mxu0
    %3218 = vmatpush.bf16.msra.mxu0 %v3059
    %3219 = vmatpush.bf16.msra.mxu0 %v3057
    %3220 = vmatpush.bf16.msra.mxu0 %v3055
    %3221 = vmatpush.bf16.msra.mxu0 %v3053
    %3222 = vmatpush.bf16.msra.mxu0 %v3051
    %3223 = vmatpush.bf16.msra.mxu0 %v3049
    %3224 = vmatpush.bf16.msra.mxu0 %v3047
    %3225 = vmatpush.bf16.msra.mxu0 %v3045
    %3226 = vmatmul.bf16.gmra.mxu0 %v1113
    %v3227 = vpop.f32.mrf.mxu0
    %v3228 = vadd.f32 %v3215, %v3227
    %v3229 = vpop.f32.mrf.mxu0
    %3230 = vdwg.mxu0
    %3231 = vmatpush.bf16.msra.mxu0 %v3075
    %3232 = vmatpush.bf16.msra.mxu0 %v3073
    %3233 = vmatpush.bf16.msra.mxu0 %v3071
    %3234 = vmatpush.bf16.msra.mxu0 %v3069
    %3235 = vmatpush.bf16.msra.mxu0 %v3067
    %3236 = vmatpush.bf16.msra.mxu0 %v3065
    %3237 = vmatpush.bf16.msra.mxu0 %v3063
    %3238 = vmatpush.bf16.msra.mxu0 %v3061
    %3239 = vmatmul.bf16.gmra.mxu0 %v1114
    %v3240 = vpop.f32.mrf.mxu0
    %v3241 = vadd.f32 %v3228, %v3240
    %v3242 = vpop.f32.mrf.mxu0
    %3243 = vdwg.mxu0
    %v3244 = vld [vmem:[#allocation13 + $0x11] sm:$0x3]
    %v3245 = vld [vmem:[#allocation13 + $0x19] sm:$0x3]
    %v3246 = vrot.slane %v3189, 4
    %v3247 = vadd.f32 %v3189, %v3246
    %v3248 = vrot.slane %v3247, 2
    %v3249 = vadd.f32 %v3247, %v3248
    %v3250 = vrot.slane %v3249, 1
    %v3251 = vadd.f32 %v3249, %v3250
    %v3252 = vrot.slane %v3241, 4
    %v3253 = vadd.f32 %v3241, %v3252
    %v3254 = vrot.slane %v3253, 2
    %v3255 = vadd.f32 %v3253, %v3254
    %v3256 = vrot.slane %v3255, 1
    %v3257 = vadd.f32 %v3255, %v3256
    %v3258 = vmul.f32 %v3189, %v3189
    %v3259 = vmul.f32 %v3241, %v3241
    %v3260 = vrot.slane %v3258, 4
    %v3261 = vadd.f32 %v3258, %v3260
    %v3262 = vrot.slane %v3261, 2
    %v3263 = vadd.f32 %v3261, %v3262
    %v3264 = vrot.slane %v3263, 1
    %v3265 = vadd.f32 %v3263, %v3264
    %v3266 = vrot.slane %v3259, 4
    %v3267 = vadd.f32 %v3259, %v3266
    %v3268 = vrot.slane %v3267, 2
    %v3269 = vadd.f32 %v3267, %v3268
    %v3270 = vrot.slane %v3269, 1
    %v3271 = vadd.f32 %v3269, %v3270
    %v3272 = vmul.f32 %v3251, 0.125
    %v3273 = vmul.f32 %v3257, 0.125
    %v3274 = vmul.f32 %v3265, 0.125
    %v3275 = vmul.f32 %v3271, 0.125
    %v3276 = vmul.f32 %v3272, %v3272
    %v3277 = vmul.f32 %v3273, %v3273
    %v3278 = vsub.f32 %v3274, %v3276
    %v3279 = vsub.f32 %v3275, %v3277
    %v3280 = vsub.f32 %v3189, %v3272
    %v3281 = vsub.f32 %v3241, %v3273
    %v3282 = vadd.f32 %v3278, 0.8
    %v3283 = vadd.f32 %v3279, 0.8
    %v3284 = vrsqrt.pop %v3282
    %v3285 = vmul.f32 %v3284, %v3282
    %v3286 = vmul.f32 %v3285, %v3284
    %v3287 = vmul.f32 0.5, %v3286
    %v3288 = vsub.f32 1.5, %v3287
    %v3289 = vmul.f32 %v3284, %v3288
    %vm3290 = vweird.f32 %v3282
    %vm3291 = vweird.f32 %v3284
    %vm3292 = vmor %vm3290, %vm3291
    %v3293 = vsel %vm3292, %v3284, %v3289
    %v3294 = vrsqrt.pop %v3283
    %v3295 = vmul.f32 %v3294, %v3283
    %v3296 = vmul.f32 %v3295, %v3294
    %v3297 = vmul.f32 0.5, %v3296
    %v3298 = vsub.f32 1.5, %v3297
    %v3299 = vmul.f32 %v3294, %v3298
    %vm3300 = vweird.f32 %v3283
    %vm3301 = vweird.f32 %v3294
    %vm3302 = vmor %vm3300, %vm3301
    %v3303 = vsel %vm3302, %v3294, %v3299
    %v3304 = vmul.f32 %v3280, %v3293
    %v3305 = vmul.f32 %v3281, %v3303
    %v3307 = vperm.slane %v3244, 0
    %v3308 = vperm.slane %v3244, 1
    %v3311 = vmul.f32 %v3304, %v3307
    %v3312 = vmul.f32 %v3305, %v3308
    %v3314 = vperm.slane %v3245, 0
    %v3315 = vperm.slane %v3245, 1
    %v3318 = vadd.f32 %v3311, %v3314
    %v3319 = vadd.f32 %v3312, %v3315
    %v3320 = vmul.f32 %v3318, 0.2
    %v3321 = vmul.f32 %v3319, 0.2
    %v3322 = vmax.f32 %v3318, %v3320
    %v3323 = vmax.f32 %v3319, %v3321
    %v3324 = vpack.c.bf16 %v3322, %v3322
    %v3325 = vpack.c.bf16 %v3323, %v3323
    %s3326 = sshll.u32 %s1689, 4
    %3327 = dma.done %s167, %s3326
    %v3328 = vld [vmem:[%s166] sm:$0xff]
    %v3329 = vld [vmem:[%s166 + $0x8] sm:$0xff]
    %v3330 = vld [vmem:[%s166 + $0x10] sm:$0xff]
    %v3331 = vld [vmem:[%s166 + $0x18] sm:$0xff]
    %v3332 = vld [vmem:[%s166 + $0x20] sm:$0xff]
    %v3333 = vld [vmem:[%s166 + $0x28] sm:$0xff]
    %v3334 = vld [vmem:[%s166 + $0x30] sm:$0xff]
    %v3335 = vld [vmem:[%s166 + $0x38] sm:$0xff]
    %v3336 = vld [vmem:[%s166 + $0x40] sm:$0xff]
    %v3337 = vld [vmem:[%s166 + $0x48] sm:$0xff]
    %v3338 = vld [vmem:[%s166 + $0x50] sm:$0xff]
    %v3339 = vld [vmem:[%s166 + $0x58] sm:$0xff]
    %v3340 = vld [vmem:[%s166 + $0x60] sm:$0xff]
    %v3341 = vld [vmem:[%s166 + $0x68] sm:$0xff]
    %v3342 = vld [vmem:[%s166 + $0x70] sm:$0xff]
    %v3343 = vld [vmem:[%s166 + $0x78] sm:$0xff]
    %v3344 = vld [vmem:[%s166 + $0x80] sm:$0xff]
    %v3345 = vld [vmem:[%s166 + $0x88] sm:$0xff]
    %v3346 = vld [vmem:[%s166 + $0x90] sm:$0xff]
    %v3347 = vld [vmem:[%s166 + $0x98] sm:$0xff]
    %v3348 = vld [vmem:[%s166 + $0xa0] sm:$0xff]
    %v3349 = vld [vmem:[%s166 + $0xa8] sm:$0xff]
    %v3350 = vld [vmem:[%s166 + $0xb0] sm:$0xff]
    %v3351 = vld [vmem:[%s166 + $0xb8] sm:$0xff]
    %v3352 = vld [vmem:[%s166 + $0xc0] sm:$0xff]
    %v3353 = vld [vmem:[%s166 + $0xc8] sm:$0xff]
    %v3354 = vld [vmem:[%s166 + $0xd0] sm:$0xff]
    %v3355 = vld [vmem:[%s166 + $0xd8] sm:$0xff]
    %v3356 = vld [vmem:[%s166 + $0xe0] sm:$0xff]
    %v3357 = vld [vmem:[%s166 + $0xe8] sm:$0xff]
    %v3358 = vld [vmem:[%s166 + $0xf0] sm:$0xff]
    %v3359 = vld [vmem:[%s166 + $0xf8] sm:$0xff]
    %v3392 = vunpack.c.l.b16 %v3328
    %v3393 = vunpack.c.h.b16 %v3328
    %v3394 = vunpack.c.l.b16 %v3329
    %v3395 = vunpack.c.h.b16 %v3329
    %v3396 = vunpack.c.l.b16 %v3330
    %v3397 = vunpack.c.h.b16 %v3330
    %v3398 = vunpack.c.l.b16 %v3331
    %v3399 = vunpack.c.h.b16 %v3331
    %v3400 = vunpack.c.l.b16 %v3332
    %v3401 = vunpack.c.h.b16 %v3332
    %v3402 = vunpack.c.l.b16 %v3333
    %v3403 = vunpack.c.h.b16 %v3333
    %v3404 = vunpack.c.l.b16 %v3334
    %v3405 = vunpack.c.h.b16 %v3334
    %v3406 = vunpack.c.l.b16 %v3335
    %v3407 = vunpack.c.h.b16 %v3335
    %v3408 = vunpack.c.l.b16 %v3336
    %v3409 = vunpack.c.h.b16 %v3336
    %v3410 = vunpack.c.l.b16 %v3337
    %v3411 = vunpack.c.h.b16 %v3337
    %v3412 = vunpack.c.l.b16 %v3338
    %v3413 = vunpack.c.h.b16 %v3338
    %v3414 = vunpack.c.l.b16 %v3339
    %v3415 = vunpack.c.h.b16 %v3339
    %v3416 = vunpack.c.l.b16 %v3340
    %v3417 = vunpack.c.h.b16 %v3340
    %v3418 = vunpack.c.l.b16 %v3341
    %v3419 = vunpack.c.h.b16 %v3341
    %v3420 = vunpack.c.l.b16 %v3342
    %v3421 = vunpack.c.h.b16 %v3342
    %v3422 = vunpack.c.l.b16 %v3343
    %v3423 = vunpack.c.h.b16 %v3343
    %v3424 = vunpack.c.l.b16 %v3344
    %v3425 = vunpack.c.h.b16 %v3344
    %v3426 = vunpack.c.l.b16 %v3345
    %v3427 = vunpack.c.h.b16 %v3345
    %v3428 = vunpack.c.l.b16 %v3346
    %v3429 = vunpack.c.h.b16 %v3346
    %v3430 = vunpack.c.l.b16 %v3347
    %v3431 = vunpack.c.h.b16 %v3347
    %v3432 = vunpack.c.l.b16 %v3348
    %v3433 = vunpack.c.h.b16 %v3348
    %v3434 = vunpack.c.l.b16 %v3349
    %v3435 = vunpack.c.h.b16 %v3349
    %v3436 = vunpack.c.l.b16 %v3350
    %v3437 = vunpack.c.h.b16 %v3350
    %v3438 = vunpack.c.l.b16 %v3351
    %v3439 = vunpack.c.h.b16 %v3351
    %v3440 = vunpack.c.l.b16 %v3352
    %v3441 = vunpack.c.h.b16 %v3352
    %v3442 = vunpack.c.l.b16 %v3353
    %v3443 = vunpack.c.h.b16 %v3353
    %v3444 = vunpack.c.l.b16 %v3354
    %v3445 = vunpack.c.h.b16 %v3354
    %v3446 = vunpack.c.l.b16 %v3355
    %v3447 = vunpack.c.h.b16 %v3355
    %v3448 = vunpack.c.l.b16 %v3356
    %v3449 = vunpack.c.h.b16 %v3356
    %v3450 = vunpack.c.l.b16 %v3357
    %v3451 = vunpack.c.h.b16 %v3357
    %v3452 = vunpack.c.l.b16 %v3358
    %v3453 = vunpack.c.h.b16 %v3358
    %v3454 = vunpack.c.l.b16 %v3359
    %v3455 = vunpack.c.h.b16 %v3359
    %v3456 = vpack.c.b16 %v3394, %v3392
    %v3457 = vpack.c.b16 %v3395, %v3393
    %v3458 = vpack.c.b16 %v3398, %v3396
    %v3459 = vpack.c.b16 %v3399, %v3397
    %v3460 = vpack.c.b16 %v3402, %v3400
    %v3461 = vpack.c.b16 %v3403, %v3401
    %v3462 = vpack.c.b16 %v3406, %v3404
    %v3463 = vpack.c.b16 %v3407, %v3405
    %v3464 = vpack.c.b16 %v3410, %v3408
    %v3465 = vpack.c.b16 %v3411, %v3409
    %v3466 = vpack.c.b16 %v3414, %v3412
    %v3467 = vpack.c.b16 %v3415, %v3413
    %v3468 = vpack.c.b16 %v3418, %v3416
    %v3469 = vpack.c.b16 %v3419, %v3417
    %v3470 = vpack.c.b16 %v3422, %v3420
    %v3471 = vpack.c.b16 %v3423, %v3421
    %v3472 = vpack.c.b16 %v3426, %v3424
    %v3473 = vpack.c.b16 %v3427, %v3425
    %v3474 = vpack.c.b16 %v3430, %v3428
    %v3475 = vpack.c.b16 %v3431, %v3429
    %v3476 = vpack.c.b16 %v3434, %v3432
    %v3477 = vpack.c.b16 %v3435, %v3433
    %v3478 = vpack.c.b16 %v3438, %v3436
    %v3479 = vpack.c.b16 %v3439, %v3437
    %v3480 = vpack.c.b16 %v3442, %v3440
    %v3481 = vpack.c.b16 %v3443, %v3441
    %v3482 = vpack.c.b16 %v3446, %v3444
    %v3483 = vpack.c.b16 %v3447, %v3445
    %v3484 = vpack.c.b16 %v3450, %v3448
    %v3485 = vpack.c.b16 %v3451, %v3449
    %v3486 = vpack.c.b16 %v3454, %v3452
    %v3487 = vpack.c.b16 %v3455, %v3453
    %3520 = vmatpush.bf16.msra.mxu0 %v3470
    %3521 = vmatpush.bf16.msra.mxu0 %v3468
    %3522 = vmatpush.bf16.msra.mxu0 %v3466
    %3523 = vmatpush.bf16.msra.mxu0 %v3464
    %3524 = vmatpush.bf16.msra.mxu0 %v3462
    %3525 = vmatpush.bf16.msra.mxu0 %v3460
    %3526 = vmatpush.bf16.msra.mxu0 %v3458
    %3527 = vmatpush.bf16.msra.mxu0 %v3456
    %3528 = vmatmul.bf16.gmra.mxu0 %v3324
    %v3529 = vpop.f32.mrf.mxu0
    %v3530 = vadd.f32 0.0, %v3529
    %v3531 = vpop.f32.mrf.mxu0
    %3532 = vdwg.mxu0
    %3533 = vmatpush.bf16.msra.mxu0 %v3486
    %3534 = vmatpush.bf16.msra.mxu0 %v3484
    %3535 = vmatpush.bf16.msra.mxu0 %v3482
    %3536 = vmatpush.bf16.msra.mxu0 %v3480
    %3537 = vmatpush.bf16.msra.mxu0 %v3478
    %3538 = vmatpush.bf16.msra.mxu0 %v3476
    %3539 = vmatpush.bf16.msra.mxu0 %v3474
    %3540 = vmatpush.bf16.msra.mxu0 %v3472
    %3541 = vmatmul.bf16.gmra.mxu0 %v3325
    %v3542 = vpop.f32.mrf.mxu0
    %v3543 = vadd.f32 %v3530, %v3542
    %v3544 = vpop.f32.mrf.mxu0
    %3545 = vdwg.mxu0
    %3546 = vmatpush.bf16.msra.mxu0 %v3471
    %3547 = vmatpush.bf16.msra.mxu0 %v3469
    %3548 = vmatpush.bf16.msra.mxu0 %v3467
    %3549 = vmatpush.bf16.msra.mxu0 %v3465
    %3550 = vmatpush.bf16.msra.mxu0 %v3463
    %3551 = vmatpush.bf16.msra.mxu0 %v3461
    %3552 = vmatpush.bf16.msra.mxu0 %v3459
    %3553 = vmatpush.bf16.msra.mxu0 %v3457
    %3554 = vmatmul.bf16.gmra.mxu0 %v3324
    %v3555 = vpop.f32.mrf.mxu0
    %v3556 = vadd.f32 0.0, %v3555
    %v3557 = vpop.f32.mrf.mxu0
    %3558 = vdwg.mxu0
    %3559 = vmatpush.bf16.msra.mxu0 %v3487
    %3560 = vmatpush.bf16.msra.mxu0 %v3485
    %3561 = vmatpush.bf16.msra.mxu0 %v3483
    %3562 = vmatpush.bf16.msra.mxu0 %v3481
    %3563 = vmatpush.bf16.msra.mxu0 %v3479
    %3564 = vmatpush.bf16.msra.mxu0 %v3477
    %3565 = vmatpush.bf16.msra.mxu0 %v3475
    %3566 = vmatpush.bf16.msra.mxu0 %v3473
    %3567 = vmatmul.bf16.gmra.mxu0 %v3325
    %v3568 = vpop.f32.mrf.mxu0
    %v3569 = vadd.f32 %v3556, %v3568
    %v3570 = vpop.f32.mrf.mxu0
    %3571 = vdwg.mxu0
    %v3572 = vadd.f32 %v2725, %v3543
    %v3573 = vadd.f32 %v2751, %v3569
    %s3574 = sshll.u32 %s1116, 4
    %3575 = dma.done %s183, %s3574
    %v3576 = vld [vmem:[%s182] sm:$0xff]
    %v3577 = vld [vmem:[%s182 + $0x8] sm:$0xff]
    %v3578 = vld [vmem:[%s182 + $0x10] sm:$0xff]
    %v3579 = vld [vmem:[%s182 + $0x18] sm:$0xff]
    %v3580 = vld [vmem:[%s182 + $0x20] sm:$0xff]
    %v3581 = vld [vmem:[%s182 + $0x28] sm:$0xff]
    %v3582 = vld [vmem:[%s182 + $0x30] sm:$0xff]
    %v3583 = vld [vmem:[%s182 + $0x38] sm:$0xff]
    %v3584 = vld [vmem:[%s182 + $0x40] sm:$0xff]
    %v3585 = vld [vmem:[%s182 + $0x48] sm:$0xff]
    %v3586 = vld [vmem:[%s182 + $0x50] sm:$0xff]
    %v3587 = vld [vmem:[%s182 + $0x58] sm:$0xff]
    %v3588 = vld [vmem:[%s182 + $0x60] sm:$0xff]
    %v3589 = vld [vmem:[%s182 + $0x68] sm:$0xff]
    %v3590 = vld [vmem:[%s182 + $0x70] sm:$0xff]
    %v3591 = vld [vmem:[%s182 + $0x78] sm:$0xff]
    %v3592 = vld [vmem:[%s182 + $0x80] sm:$0xff]
    %v3593 = vld [vmem:[%s182 + $0x88] sm:$0xff]
    %v3594 = vld [vmem:[%s182 + $0x90] sm:$0xff]
    %v3595 = vld [vmem:[%s182 + $0x98] sm:$0xff]
    %v3596 = vld [vmem:[%s182 + $0xa0] sm:$0xff]
    %v3597 = vld [vmem:[%s182 + $0xa8] sm:$0xff]
    %v3598 = vld [vmem:[%s182 + $0xb0] sm:$0xff]
    %v3599 = vld [vmem:[%s182 + $0xb8] sm:$0xff]
    %v3600 = vld [vmem:[%s182 + $0xc0] sm:$0xff]
    %v3601 = vld [vmem:[%s182 + $0xc8] sm:$0xff]
    %v3602 = vld [vmem:[%s182 + $0xd0] sm:$0xff]
    %v3603 = vld [vmem:[%s182 + $0xd8] sm:$0xff]
    %v3604 = vld [vmem:[%s182 + $0xe0] sm:$0xff]
    %v3605 = vld [vmem:[%s182 + $0xe8] sm:$0xff]
    %v3606 = vld [vmem:[%s182 + $0xf0] sm:$0xff]
    %v3607 = vld [vmem:[%s182 + $0xf8] sm:$0xff]
    %v3608 = vld [vmem:[%s182 + $0x100] sm:$0xff]
    %v3609 = vld [vmem:[%s182 + $0x108] sm:$0xff]
    %v3610 = vld [vmem:[%s182 + $0x110] sm:$0xff]
    %v3611 = vld [vmem:[%s182 + $0x118] sm:$0xff]
    %v3612 = vld [vmem:[%s182 + $0x120] sm:$0xff]
    %v3613 = vld [vmem:[%s182 + $0x128] sm:$0xff]
    %v3614 = vld [vmem:[%s182 + $0x130] sm:$0xff]
    %v3615 = vld [vmem:[%s182 + $0x138] sm:$0xff]
    %v3616 = vld [vmem:[%s182 + $0x140] sm:$0xff]
    %v3617 = vld [vmem:[%s182 + $0x148] sm:$0xff]
    %v3618 = vld [vmem:[%s182 + $0x150] sm:$0xff]
    %v3619 = vld [vmem:[%s182 + $0x158] sm:$0xff]
    %v3620 = vld [vmem:[%s182 + $0x160] sm:$0xff]
    %v3621 = vld [vmem:[%s182 + $0x168] sm:$0xff]
    %v3622 = vld [vmem:[%s182 + $0x170] sm:$0xff]
    %v3623 = vld [vmem:[%s182 + $0x178] sm:$0xff]
    %v3624 = vld [vmem:[%s182 + $0x180] sm:$0xff]
    %v3625 = vld [vmem:[%s182 + $0x188] sm:$0xff]
    %v3626 = vld [vmem:[%s182 + $0x190] sm:$0xff]
    %v3627 = vld [vmem:[%s182 + $0x198] sm:$0xff]
    %v3628 = vld [vmem:[%s182 + $0x1a0] sm:$0xff]
    %v3629 = vld [vmem:[%s182 + $0x1a8] sm:$0xff]
    %v3630 = vld [vmem:[%s182 + $0x1b0] sm:$0xff]
    %v3631 = vld [vmem:[%s182 + $0x1b8] sm:$0xff]
    %v3632 = vld [vmem:[%s182 + $0x1c0] sm:$0xff]
    %v3633 = vld [vmem:[%s182 + $0x1c8] sm:$0xff]
    %v3634 = vld [vmem:[%s182 + $0x1d0] sm:$0xff]
    %v3635 = vld [vmem:[%s182 + $0x1d8] sm:$0xff]
    %v3636 = vld [vmem:[%s182 + $0x1e0] sm:$0xff]
    %v3637 = vld [vmem:[%s182 + $0x1e8] sm:$0xff]
    %v3638 = vld [vmem:[%s182 + $0x1f0] sm:$0xff]
    %v3639 = vld [vmem:[%s182 + $0x1f8] sm:$0xff]
    %v3704 = vunpack.c.l.b16 %v3576
    %v3705 = vunpack.c.h.b16 %v3576
    %v3706 = vunpack.c.l.b16 %v3577
    %v3707 = vunpack.c.h.b16 %v3577
    %v3708 = vunpack.c.l.b16 %v3578
    %v3709 = vunpack.c.h.b16 %v3578
    %v3710 = vunpack.c.l.b16 %v3579
    %v3711 = vunpack.c.h.b16 %v3579
    %v3712 = vunpack.c.l.b16 %v3580
    %v3713 = vunpack.c.h.b16 %v3580
    %v3714 = vunpack.c.l.b16 %v3581
    %v3715 = vunpack.c.h.b16 %v3581
    %v3716 = vunpack.c.l.b16 %v3582
    %v3717 = vunpack.c.h.b16 %v3582
    %v3718 = vunpack.c.l.b16 %v3583
    %v3719 = vunpack.c.h.b16 %v3583
    %v3720 = vunpack.c.l.b16 %v3584
    %v3721 = vunpack.c.h.b16 %v3584
    %v3722 = vunpack.c.l.b16 %v3585
    %v3723 = vunpack.c.h.b16 %v3585
    %v3724 = vunpack.c.l.b16 %v3586
    %v3725 = vunpack.c.h.b16 %v3586
    %v3726 = vunpack.c.l.b16 %v3587
    %v3727 = vunpack.c.h.b16 %v3587
    %v3728 = vunpack.c.l.b16 %v3588
    %v3729 = vunpack.c.h.b16 %v3588
    %v3730 = vunpack.c.l.b16 %v3589
    %v3731 = vunpack.c.h.b16 %v3589
    %v3732 = vunpack.c.l.b16 %v3590
    %v3733 = vunpack.c.h.b16 %v3590
    %v3734 = vunpack.c.l.b16 %v3591
    %v3735 = vunpack.c.h.b16 %v3591
    %v3736 = vunpack.c.l.b16 %v3592
    %v3737 = vunpack.c.h.b16 %v3592
    %v3738 = vunpack.c.l.b16 %v3593
    %v3739 = vunpack.c.h.b16 %v3593
    %v3740 = vunpack.c.l.b16 %v3594
    %v3741 = vunpack.c.h.b16 %v3594
    %v3742 = vunpack.c.l.b16 %v3595
    %v3743 = vunpack.c.h.b16 %v3595
    %v3744 = vunpack.c.l.b16 %v3596
    %v3745 = vunpack.c.h.b16 %v3596
    %v3746 = vunpack.c.l.b16 %v3597
    %v3747 = vunpack.c.h.b16 %v3597
    %v3748 = vunpack.c.l.b16 %v3598
    %v3749 = vunpack.c.h.b16 %v3598
    %v3750 = vunpack.c.l.b16 %v3599
    %v3751 = vunpack.c.h.b16 %v3599
    %v3752 = vunpack.c.l.b16 %v3600
    %v3753 = vunpack.c.h.b16 %v3600
    %v3754 = vunpack.c.l.b16 %v3601
    %v3755 = vunpack.c.h.b16 %v3601
    %v3756 = vunpack.c.l.b16 %v3602
    %v3757 = vunpack.c.h.b16 %v3602
    %v3758 = vunpack.c.l.b16 %v3603
    %v3759 = vunpack.c.h.b16 %v3603
    %v3760 = vunpack.c.l.b16 %v3604
    %v3761 = vunpack.c.h.b16 %v3604
    %v3762 = vunpack.c.l.b16 %v3605
    %v3763 = vunpack.c.h.b16 %v3605
    %v3764 = vunpack.c.l.b16 %v3606
    %v3765 = vunpack.c.h.b16 %v3606
    %v3766 = vunpack.c.l.b16 %v3607
    %v3767 = vunpack.c.h.b16 %v3607
    %v3768 = vunpack.c.l.b16 %v3608
    %v3769 = vunpack.c.h.b16 %v3608
    %v3770 = vunpack.c.l.b16 %v3609
    %v3771 = vunpack.c.h.b16 %v3609
    %v3772 = vunpack.c.l.b16 %v3610
    %v3773 = vunpack.c.h.b16 %v3610
    %v3774 = vunpack.c.l.b16 %v3611
    %v3775 = vunpack.c.h.b16 %v3611
    %v3776 = vunpack.c.l.b16 %v3612
    %v3777 = vunpack.c.h.b16 %v3612
    %v3778 = vunpack.c.l.b16 %v3613
    %v3779 = vunpack.c.h.b16 %v3613
    %v3780 = vunpack.c.l.b16 %v3614
    %v3781 = vunpack.c.h.b16 %v3614
    %v3782 = vunpack.c.l.b16 %v3615
    %v3783 = vunpack.c.h.b16 %v3615
    %v3784 = vunpack.c.l.b16 %v3616
    %v3785 = vunpack.c.h.b16 %v3616
    %v3786 = vunpack.c.l.b16 %v3617
    %v3787 = vunpack.c.h.b16 %v3617
    %v3788 = vunpack.c.l.b16 %v3618
    %v3789 = vunpack.c.h.b16 %v3618
    %v3790 = vunpack.c.l.b16 %v3619
    %v3791 = vunpack.c.h.b16 %v3619
    %v3792 = vunpack.c.l.b16 %v3620
    %v3793 = vunpack.c.h.b16 %v3620
    %v3794 = vunpack.c.l.b16 %v3621
    %v3795 = vunpack.c.h.b16 %v3621
    %v3796 = vunpack.c.l.b16 %v3622
    %v3797 = vunpack.c.h.b16 %v3622
    %v3798 = vunpack.c.l.b16 %v3623
    %v3799 = vunpack.c.h.b16 %v3623
    %v3800 = vunpack.c.l.b16 %v3624
    %v3801 = vunpack.c.h.b16 %v3624
    %v3802 = vunpack.c.l.b16 %v3625
    %v3803 = vunpack.c.h.b16 %v3625
    %v3804 = vunpack.c.l.b16 %v3626
    %v3805 = vunpack.c.h.b16 %v3626
    %v3806 = vunpack.c.l.b16 %v3627
    %v3807 = vunpack.c.h.b16 %v3627
    %v3808 = vunpack.c.l.b16 %v3628
    %v3809 = vunpack.c.h.b16 %v3628
    %v3810 = vunpack.c.l.b16 %v3629
    %v3811 = vunpack.c.h.b16 %v3629
    %v3812 = vunpack.c.l.b16 %v3630
    %v3813 = vunpack.c.h.b16 %v3630
    %v3814 = vunpack.c.l.b16 %v3631
    %v3815 = vunpack.c.h.b16 %v3631
    %v3816 = vunpack.c.l.b16 %v3632
    %v3817 = vunpack.c.h.b16 %v3632
    %v3818 = vunpack.c.l.b16 %v3633
    %v3819 = vunpack.c.h.b16 %v3633
    %v3820 = vunpack.c.l.b16 %v3634
    %v3821 = vunpack.c.h.b16 %v3634
    %v3822 = vunpack.c.l.b16 %v3635
    %v3823 = vunpack.c.h.b16 %v3635
    %v3824 = vunpack.c.l.b16 %v3636
    %v3825 = vunpack.c.h.b16 %v3636
    %v3826 = vunpack.c.l.b16 %v3637
    %v3827 = vunpack.c.h.b16 %v3637
    %v3828 = vunpack.c.l.b16 %v3638
    %v3829 = vunpack.c.h.b16 %v3638
    %v3830 = vunpack.c.l.b16 %v3639
    %v3831 = vunpack.c.h.b16 %v3639
    %v3832 = vpack.c.b16 %v3706, %v3704
    %v3833 = vpack.c.b16 %v3707, %v3705
    %v3834 = vpack.c.b16 %v3710, %v3708
    %v3835 = vpack.c.b16 %v3711, %v3709
    %v3836 = vpack.c.b16 %v3714, %v3712
    %v3837 = vpack.c.b16 %v3715, %v3713
    %v3838 = vpack.c.b16 %v3718, %v3716
    %v3839 = vpack.c.b16 %v3719, %v3717
    %v3840 = vpack.c.b16 %v3722, %v3720
    %v3841 = vpack.c.b16 %v3723, %v3721
    %v3842 = vpack.c.b16 %v3726, %v3724
    %v3843 = vpack.c.b16 %v3727, %v3725
    %v3844 = vpack.c.b16 %v3730, %v3728
    %v3845 = vpack.c.b16 %v3731, %v3729
    %v3846 = vpack.c.b16 %v3734, %v3732
    %v3847 = vpack.c.b16 %v3735, %v3733
    %v3848 = vpack.c.b16 %v3738, %v3736
    %v3849 = vpack.c.b16 %v3739, %v3737
    %v3850 = vpack.c.b16 %v3742, %v3740
    %v3851 = vpack.c.b16 %v3743, %v3741
    %v3852 = vpack.c.b16 %v3746, %v3744
    %v3853 = vpack.c.b16 %v3747, %v3745
    %v3854 = vpack.c.b16 %v3750, %v3748
    %v3855 = vpack.c.b16 %v3751, %v3749
    %v3856 = vpack.c.b16 %v3754, %v3752
    %v3857 = vpack.c.b16 %v3755, %v3753
    %v3858 = vpack.c.b16 %v3758, %v3756
    %v3859 = vpack.c.b16 %v3759, %v3757
    %v3860 = vpack.c.b16 %v3762, %v3760
    %v3861 = vpack.c.b16 %v3763, %v3761
    %v3862 = vpack.c.b16 %v3766, %v3764
    %v3863 = vpack.c.b16 %v3767, %v3765
    %v3864 = vpack.c.b16 %v3770, %v3768
    %v3865 = vpack.c.b16 %v3771, %v3769
    %v3866 = vpack.c.b16 %v3774, %v3772
    %v3867 = vpack.c.b16 %v3775, %v3773
    %v3868 = vpack.c.b16 %v3778, %v3776
    %v3869 = vpack.c.b16 %v3779, %v3777
    %v3870 = vpack.c.b16 %v3782, %v3780
    %v3871 = vpack.c.b16 %v3783, %v3781
    %v3872 = vpack.c.b16 %v3786, %v3784
    %v3873 = vpack.c.b16 %v3787, %v3785
    %v3874 = vpack.c.b16 %v3790, %v3788
    %v3875 = vpack.c.b16 %v3791, %v3789
    %v3876 = vpack.c.b16 %v3794, %v3792
    %v3877 = vpack.c.b16 %v3795, %v3793
    %v3878 = vpack.c.b16 %v3798, %v3796
    %v3879 = vpack.c.b16 %v3799, %v3797
    %v3880 = vpack.c.b16 %v3802, %v3800
    %v3881 = vpack.c.b16 %v3803, %v3801
    %v3882 = vpack.c.b16 %v3806, %v3804
    %v3883 = vpack.c.b16 %v3807, %v3805
    %v3884 = vpack.c.b16 %v3810, %v3808
    %v3885 = vpack.c.b16 %v3811, %v3809
    %v3886 = vpack.c.b16 %v3814, %v3812
    %v3887 = vpack.c.b16 %v3815, %v3813
    %v3888 = vpack.c.b16 %v3818, %v3816
    %v3889 = vpack.c.b16 %v3819, %v3817
    %v3890 = vpack.c.b16 %v3822, %v3820
    %v3891 = vpack.c.b16 %v3823, %v3821
    %v3892 = vpack.c.b16 %v3826, %v3824
    %v3893 = vpack.c.b16 %v3827, %v3825
    %v3894 = vpack.c.b16 %v3830, %v3828
    %v3895 = vpack.c.b16 %v3831, %v3829
    %3960 = vmatpush.bf16.msra.mxu0 %v3846
    %3961 = vmatpush.bf16.msra.mxu0 %v3844
    %3962 = vmatpush.bf16.msra.mxu0 %v3842
    %3963 = vmatpush.bf16.msra.mxu0 %v3840
    %3964 = vmatpush.bf16.msra.mxu0 %v3838
    %3965 = vmatpush.bf16.msra.mxu0 %v3836
    %3966 = vmatpush.bf16.msra.mxu0 %v3834
    %3967 = vmatpush.bf16.msra.mxu0 %v3832
    %3968 = vmatmul.bf16.gmra.mxu0 %v1111
    %v3969 = vpop.f32.mrf.mxu0
    %v3970 = vadd.f32 0.0, %v3969
    %v3971 = vpop.f32.mrf.mxu0
    %3972 = vdwg.mxu0
    %3973 = vmatpush.bf16.msra.mxu0 %v3862
    %3974 = vmatpush.bf16.msra.mxu0 %v3860
    %3975 = vmatpush.bf16.msra.mxu0 %v3858
    %3976 = vmatpush.bf16.msra.mxu0 %v3856
    %3977 = vmatpush.bf16.msra.mxu0 %v3854
    %3978 = vmatpush.bf16.msra.mxu0 %v3852
    %3979 = vmatpush.bf16.msra.mxu0 %v3850
    %3980 = vmatpush.bf16.msra.mxu0 %v3848
    %3981 = vmatmul.bf16.gmra.mxu0 %v1112
    %v3982 = vpop.f32.mrf.mxu0
    %v3983 = vadd.f32 %v3970, %v3982
    %v3984 = vpop.f32.mrf.mxu0
    %3985 = vdwg.mxu0
    %3986 = vmatpush.bf16.msra.mxu0 %v3878
    %3987 = vmatpush.bf16.msra.mxu0 %v3876
    %3988 = vmatpush.bf16.msra.mxu0 %v3874
    %3989 = vmatpush.bf16.msra.mxu0 %v3872
    %3990 = vmatpush.bf16.msra.mxu0 %v3870
    %3991 = vmatpush.bf16.msra.mxu0 %v3868
    %3992 = vmatpush.bf16.msra.mxu0 %v3866
    %3993 = vmatpush.bf16.msra.mxu0 %v3864
    %3994 = vmatmul.bf16.gmra.mxu0 %v1113
    %v3995 = vpop.f32.mrf.mxu0
    %v3996 = vadd.f32 %v3983, %v3995
    %v3997 = vpop.f32.mrf.mxu0
    %3998 = vdwg.mxu0
    %3999 = vmatpush.bf16.msra.mxu0 %v3894
    %4000 = vmatpush.bf16.msra.mxu0 %v3892
    %4001 = vmatpush.bf16.msra.mxu0 %v3890
    %4002 = vmatpush.bf16.msra.mxu0 %v3888
    %4003 = vmatpush.bf16.msra.mxu0 %v3886
    %4004 = vmatpush.bf16.msra.mxu0 %v3884
    %4005 = vmatpush.bf16.msra.mxu0 %v3882
    %4006 = vmatpush.bf16.msra.mxu0 %v3880
    %4007 = vmatmul.bf16.gmra.mxu0 %v1114
    %v4008 = vpop.f32.mrf.mxu0
    %v4009 = vadd.f32 %v3996, %v4008
    %v4010 = vpop.f32.mrf.mxu0
    %4011 = vdwg.mxu0
    %4012 = vmatpush.bf16.msra.mxu0 %v3847
    %4013 = vmatpush.bf16.msra.mxu0 %v3845
    %4014 = vmatpush.bf16.msra.mxu0 %v3843
    %4015 = vmatpush.bf16.msra.mxu0 %v3841
    %4016 = vmatpush.bf16.msra.mxu0 %v3839
    %4017 = vmatpush.bf16.msra.mxu0 %v3837
    %4018 = vmatpush.bf16.msra.mxu0 %v3835
    %4019 = vmatpush.bf16.msra.mxu0 %v3833
    %4020 = vmatmul.bf16.gmra.mxu0 %v1111
    %v4021 = vpop.f32.mrf.mxu0
    %v4022 = vadd.f32 0.0, %v4021
    %v4023 = vpop.f32.mrf.mxu0
    %4024 = vdwg.mxu0
    %4025 = vmatpush.bf16.msra.mxu0 %v3863
    %4026 = vmatpush.bf16.msra.mxu0 %v3861
    %4027 = vmatpush.bf16.msra.mxu0 %v3859
    %4028 = vmatpush.bf16.msra.mxu0 %v3857
    %4029 = vmatpush.bf16.msra.mxu0 %v3855
    %4030 = vmatpush.bf16.msra.mxu0 %v3853
    %4031 = vmatpush.bf16.msra.mxu0 %v3851
    %4032 = vmatpush.bf16.msra.mxu0 %v3849
    %4033 = vmatmul.bf16.gmra.mxu0 %v1112
    %v4034 = vpop.f32.mrf.mxu0
    %v4035 = vadd.f32 %v4022, %v4034
    %v4036 = vpop.f32.mrf.mxu0
    %4037 = vdwg.mxu0
    %4038 = vmatpush.bf16.msra.mxu0 %v3879
    %4039 = vmatpush.bf16.msra.mxu0 %v3877
    %4040 = vmatpush.bf16.msra.mxu0 %v3875
    %4041 = vmatpush.bf16.msra.mxu0 %v3873
    %4042 = vmatpush.bf16.msra.mxu0 %v3871
    %4043 = vmatpush.bf16.msra.mxu0 %v3869
    %4044 = vmatpush.bf16.msra.mxu0 %v3867
    %4045 = vmatpush.bf16.msra.mxu0 %v3865
    %4046 = vmatmul.bf16.gmra.mxu0 %v1113
    %v4047 = vpop.f32.mrf.mxu0
    %v4048 = vadd.f32 %v4035, %v4047
    %v4049 = vpop.f32.mrf.mxu0
    %4050 = vdwg.mxu0
    %4051 = vmatpush.bf16.msra.mxu0 %v3895
    %4052 = vmatpush.bf16.msra.mxu0 %v3893
    %4053 = vmatpush.bf16.msra.mxu0 %v3891
    %4054 = vmatpush.bf16.msra.mxu0 %v3889
    %4055 = vmatpush.bf16.msra.mxu0 %v3887
    %4056 = vmatpush.bf16.msra.mxu0 %v3885
    %4057 = vmatpush.bf16.msra.mxu0 %v3883
    %4058 = vmatpush.bf16.msra.mxu0 %v3881
    %4059 = vmatmul.bf16.gmra.mxu0 %v1114
    %v4060 = vpop.f32.mrf.mxu0
    %v4061 = vadd.f32 %v4048, %v4060
    %v4062 = vpop.f32.mrf.mxu0
    %4063 = vdwg.mxu0
    %v4064 = vld [vmem:[#allocation13 + $0x13] sm:$0x3]
    %v4065 = vld [vmem:[#allocation13 + $0x1b] sm:$0x3]
    %v4066 = vrot.slane %v4009, 4
    %v4067 = vadd.f32 %v4009, %v4066
    %v4068 = vrot.slane %v4067, 2
    %v4069 = vadd.f32 %v4067, %v4068
    %v4070 = vrot.slane %v4069, 1
    %v4071 = vadd.f32 %v4069, %v4070
    %v4072 = vrot.slane %v4061, 4
    %v4073 = vadd.f32 %v4061, %v4072
    %v4074 = vrot.slane %v4073, 2
    %v4075 = vadd.f32 %v4073, %v4074
    %v4076 = vrot.slane %v4075, 1
    %v4077 = vadd.f32 %v4075, %v4076
    %v4078 = vmul.f32 %v4009, %v4009
    %v4079 = vmul.f32 %v4061, %v4061
    %v4080 = vrot.slane %v4078, 4
    %v4081 = vadd.f32 %v4078, %v4080
    %v4082 = vrot.slane %v4081, 2
    %v4083 = vadd.f32 %v4081, %v4082
    %v4084 = vrot.slane %v4083, 1
    %v4085 = vadd.f32 %v4083, %v4084
    %v4086 = vrot.slane %v4079, 4
    %v4087 = vadd.f32 %v4079, %v4086
    %v4088 = vrot.slane %v4087, 2
    %v4089 = vadd.f32 %v4087, %v4088
    %v4090 = vrot.slane %v4089, 1
    %v4091 = vadd.f32 %v4089, %v4090
    %v4092 = vmul.f32 %v4071, 0.125
    %v4093 = vmul.f32 %v4077, 0.125
    %v4094 = vmul.f32 %v4085, 0.125
    %v4095 = vmul.f32 %v4091, 0.125
    %v4096 = vmul.f32 %v4092, %v4092
    %v4097 = vmul.f32 %v4093, %v4093
    %v4098 = vsub.f32 %v4094, %v4096
    %v4099 = vsub.f32 %v4095, %v4097
    %v4100 = vsub.f32 %v4009, %v4092
    %v4101 = vsub.f32 %v4061, %v4093
    %v4102 = vadd.f32 %v4098, 0.8
    %v4103 = vadd.f32 %v4099, 0.8
    %v4104 = vrsqrt.pop %v4102
    %v4105 = vmul.f32 %v4104, %v4102
    %v4106 = vmul.f32 %v4105, %v4104
    %v4107 = vmul.f32 0.5, %v4106
    %v4108 = vsub.f32 1.5, %v4107
    %v4109 = vmul.f32 %v4104, %v4108
    %vm4110 = vweird.f32 %v4102
    %vm4111 = vweird.f32 %v4104
    %vm4112 = vmor %vm4110, %vm4111
    %v4113 = vsel %vm4112, %v4104, %v4109
    %v4114 = vrsqrt.pop %v4103
    %v4115 = vmul.f32 %v4114, %v4103
    %v4116 = vmul.f32 %v4115, %v4114
    %v4117 = vmul.f32 0.5, %v4116
    %v4118 = vsub.f32 1.5, %v4117
    %v4119 = vmul.f32 %v4114, %v4118
    %vm4120 = vweird.f32 %v4103
    %vm4121 = vweird.f32 %v4114
    %vm4122 = vmor %vm4120, %vm4121
    %v4123 = vsel %vm4122, %v4114, %v4119
    %v4124 = vmul.f32 %v4100, %v4113
    %v4125 = vmul.f32 %v4101, %v4123
    %v4127 = vperm.slane %v4064, 0
    %v4128 = vperm.slane %v4064, 1
    %v4131 = vmul.f32 %v4124, %v4127
    %v4132 = vmul.f32 %v4125, %v4128
    %v4134 = vperm.slane %v4065, 0
    %v4135 = vperm.slane %v4065, 1
    %v4138 = vadd.f32 %v4131, %v4134
    %v4139 = vadd.f32 %v4132, %v4135
    %v4140 = vmul.f32 %v4138, 0.2
    %v4141 = vmul.f32 %v4139, 0.2
    %v4142 = vmax.f32 %v4138, %v4140
    %v4143 = vmax.f32 %v4139, %v4141
    %v4144 = vpack.c.bf16 %v4142, %v4142
    %v4145 = vpack.c.bf16 %v4143, %v4143
    %s4146 = sshll.u32 %s1689, 4
    %4147 = dma.done %s199, %s4146
    %v4148 = vld [vmem:[%s198] sm:$0xff]
    %v4149 = vld [vmem:[%s198 + $0x8] sm:$0xff]
    %v4150 = vld [vmem:[%s198 + $0x10] sm:$0xff]
    %v4151 = vld [vmem:[%s198 + $0x18] sm:$0xff]
    %v4152 = vld [vmem:[%s198 + $0x20] sm:$0xff]
    %v4153 = vld [vmem:[%s198 + $0x28] sm:$0xff]
    %v4154 = vld [vmem:[%s198 + $0x30] sm:$0xff]
    %v4155 = vld [vmem:[%s198 + $0x38] sm:$0xff]
    %v4156 = vld [vmem:[%s198 + $0x40] sm:$0xff]
    %v4157 = vld [vmem:[%s198 + $0x48] sm:$0xff]
    %v4158 = vld [vmem:[%s198 + $0x50] sm:$0xff]
    %v4159 = vld [vmem:[%s198 + $0x58] sm:$0xff]
    %v4160 = vld [vmem:[%s198 + $0x60] sm:$0xff]
    %v4161 = vld [vmem:[%s198 + $0x68] sm:$0xff]
    %v4162 = vld [vmem:[%s198 + $0x70] sm:$0xff]
    %v4163 = vld [vmem:[%s198 + $0x78] sm:$0xff]
    %v4164 = vld [vmem:[%s198 + $0x80] sm:$0xff]
    %v4165 = vld [vmem:[%s198 + $0x88] sm:$0xff]
    %v4166 = vld [vmem:[%s198 + $0x90] sm:$0xff]
    %v4167 = vld [vmem:[%s198 + $0x98] sm:$0xff]
    %v4168 = vld [vmem:[%s198 + $0xa0] sm:$0xff]
    %v4169 = vld [vmem:[%s198 + $0xa8] sm:$0xff]
    %v4170 = vld [vmem:[%s198 + $0xb0] sm:$0xff]
    %v4171 = vld [vmem:[%s198 + $0xb8] sm:$0xff]
    %v4172 = vld [vmem:[%s198 + $0xc0] sm:$0xff]
    %v4173 = vld [vmem:[%s198 + $0xc8] sm:$0xff]
    %v4174 = vld [vmem:[%s198 + $0xd0] sm:$0xff]
    %v4175 = vld [vmem:[%s198 + $0xd8] sm:$0xff]
    %v4176 = vld [vmem:[%s198 + $0xe0] sm:$0xff]
    %v4177 = vld [vmem:[%s198 + $0xe8] sm:$0xff]
    %v4178 = vld [vmem:[%s198 + $0xf0] sm:$0xff]
    %v4179 = vld [vmem:[%s198 + $0xf8] sm:$0xff]
    %v4212 = vunpack.c.l.b16 %v4148
    %v4213 = vunpack.c.h.b16 %v4148
    %v4214 = vunpack.c.l.b16 %v4149
    %v4215 = vunpack.c.h.b16 %v4149
    %v4216 = vunpack.c.l.b16 %v4150
    %v4217 = vunpack.c.h.b16 %v4150
    %v4218 = vunpack.c.l.b16 %v4151
    %v4219 = vunpack.c.h.b16 %v4151
    %v4220 = vunpack.c.l.b16 %v4152
    %v4221 = vunpack.c.h.b16 %v4152
    %v4222 = vunpack.c.l.b16 %v4153
    %v4223 = vunpack.c.h.b16 %v4153
    %v4224 = vunpack.c.l.b16 %v4154
    %v4225 = vunpack.c.h.b16 %v4154
    %v4226 = vunpack.c.l.b16 %v4155
    %v4227 = vunpack.c.h.b16 %v4155
    %v4228 = vunpack.c.l.b16 %v4156
    %v4229 = vunpack.c.h.b16 %v4156
    %v4230 = vunpack.c.l.b16 %v4157
    %v4231 = vunpack.c.h.b16 %v4157
    %v4232 = vunpack.c.l.b16 %v4158
    %v4233 = vunpack.c.h.b16 %v4158
    %v4234 = vunpack.c.l.b16 %v4159
    %v4235 = vunpack.c.h.b16 %v4159
    %v4236 = vunpack.c.l.b16 %v4160
    %v4237 = vunpack.c.h.b16 %v4160
    %v4238 = vunpack.c.l.b16 %v4161
    %v4239 = vunpack.c.h.b16 %v4161
    %v4240 = vunpack.c.l.b16 %v4162
    %v4241 = vunpack.c.h.b16 %v4162
    %v4242 = vunpack.c.l.b16 %v4163
    %v4243 = vunpack.c.h.b16 %v4163
    %v4244 = vunpack.c.l.b16 %v4164
    %v4245 = vunpack.c.h.b16 %v4164
    %v4246 = vunpack.c.l.b16 %v4165
    %v4247 = vunpack.c.h.b16 %v4165
    %v4248 = vunpack.c.l.b16 %v4166
    %v4249 = vunpack.c.h.b16 %v4166
    %v4250 = vunpack.c.l.b16 %v4167
    %v4251 = vunpack.c.h.b16 %v4167
    %v4252 = vunpack.c.l.b16 %v4168
    %v4253 = vunpack.c.h.b16 %v4168
    %v4254 = vunpack.c.l.b16 %v4169
    %v4255 = vunpack.c.h.b16 %v4169
    %v4256 = vunpack.c.l.b16 %v4170
    %v4257 = vunpack.c.h.b16 %v4170
    %v4258 = vunpack.c.l.b16 %v4171
    %v4259 = vunpack.c.h.b16 %v4171
    %v4260 = vunpack.c.l.b16 %v4172
    %v4261 = vunpack.c.h.b16 %v4172
    %v4262 = vunpack.c.l.b16 %v4173
    %v4263 = vunpack.c.h.b16 %v4173
    %v4264 = vunpack.c.l.b16 %v4174
    %v4265 = vunpack.c.h.b16 %v4174
    %v4266 = vunpack.c.l.b16 %v4175
    %v4267 = vunpack.c.h.b16 %v4175
    %v4268 = vunpack.c.l.b16 %v4176
    %v4269 = vunpack.c.h.b16 %v4176
    %v4270 = vunpack.c.l.b16 %v4177
    %v4271 = vunpack.c.h.b16 %v4177
    %v4272 = vunpack.c.l.b16 %v4178
    %v4273 = vunpack.c.h.b16 %v4178
    %v4274 = vunpack.c.l.b16 %v4179
    %v4275 = vunpack.c.h.b16 %v4179
    %v4276 = vpack.c.b16 %v4214, %v4212
    %v4277 = vpack.c.b16 %v4215, %v4213
    %v4278 = vpack.c.b16 %v4218, %v4216
    %v4279 = vpack.c.b16 %v4219, %v4217
    %v4280 = vpack.c.b16 %v4222, %v4220
    %v4281 = vpack.c.b16 %v4223, %v4221
    %v4282 = vpack.c.b16 %v4226, %v4224
    %v4283 = vpack.c.b16 %v4227, %v4225
    %v4284 = vpack.c.b16 %v4230, %v4228
    %v4285 = vpack.c.b16 %v4231, %v4229
    %v4286 = vpack.c.b16 %v4234, %v4232
    %v4287 = vpack.c.b16 %v4235, %v4233
    %v4288 = vpack.c.b16 %v4238, %v4236
    %v4289 = vpack.c.b16 %v4239, %v4237
    %v4290 = vpack.c.b16 %v4242, %v4240
    %v4291 = vpack.c.b16 %v4243, %v4241
    %v4292 = vpack.c.b16 %v4246, %v4244
    %v4293 = vpack.c.b16 %v4247, %v4245
    %v4294 = vpack.c.b16 %v4250, %v4248
    %v4295 = vpack.c.b16 %v4251, %v4249
    %v4296 = vpack.c.b16 %v4254, %v4252
    %v4297 = vpack.c.b16 %v4255, %v4253
    %v4298 = vpack.c.b16 %v4258, %v4256
    %v4299 = vpack.c.b16 %v4259, %v4257
    %v4300 = vpack.c.b16 %v4262, %v4260
    %v4301 = vpack.c.b16 %v4263, %v4261
    %v4302 = vpack.c.b16 %v4266, %v4264
    %v4303 = vpack.c.b16 %v4267, %v4265
    %v4304 = vpack.c.b16 %v4270, %v4268
    %v4305 = vpack.c.b16 %v4271, %v4269
    %v4306 = vpack.c.b16 %v4274, %v4272
    %v4307 = vpack.c.b16 %v4275, %v4273
    %4340 = vmatpush.bf16.msra.mxu0 %v4290
    %4341 = vmatpush.bf16.msra.mxu0 %v4288
    %4342 = vmatpush.bf16.msra.mxu0 %v4286
    %4343 = vmatpush.bf16.msra.mxu0 %v4284
    %4344 = vmatpush.bf16.msra.mxu0 %v4282
    %4345 = vmatpush.bf16.msra.mxu0 %v4280
    %4346 = vmatpush.bf16.msra.mxu0 %v4278
    %4347 = vmatpush.bf16.msra.mxu0 %v4276
    %4348 = vmatmul.bf16.gmra.mxu0 %v4144
    %v4349 = vpop.f32.mrf.mxu0
    %v4350 = vadd.f32 0.0, %v4349
    %v4351 = vpop.f32.mrf.mxu0
    %4352 = vdwg.mxu0
    %4353 = vmatpush.bf16.msra.mxu0 %v4306
    %4354 = vmatpush.bf16.msra.mxu0 %v4304
    %4355 = vmatpush.bf16.msra.mxu0 %v4302
    %4356 = vmatpush.bf16.msra.mxu0 %v4300
    %4357 = vmatpush.bf16.msra.mxu0 %v4298
    %4358 = vmatpush.bf16.msra.mxu0 %v4296
    %4359 = vmatpush.bf16.msra.mxu0 %v4294
    %4360 = vmatpush.bf16.msra.mxu0 %v4292
    %4361 = vmatmul.bf16.gmra.mxu0 %v4145
    %v4362 = vpop.f32.mrf.mxu0
    %v4363 = vadd.f32 %v4350, %v4362
    %v4364 = vpop.f32.mrf.mxu0
    %4365 = vdwg.mxu0
    %4366 = vmatpush.bf16.msra.mxu0 %v4291
    %4367 = vmatpush.bf16.msra.mxu0 %v4289
    %4368 = vmatpush.bf16.msra.mxu0 %v4287
    %4369 = vmatpush.bf16.msra.mxu0 %v4285
    %4370 = vmatpush.bf16.msra.mxu0 %v4283
    %4371 = vmatpush.bf16.msra.mxu0 %v4281
    %4372 = vmatpush.bf16.msra.mxu0 %v4279
    %4373 = vmatpush.bf16.msra.mxu0 %v4277
    %4374 = vmatmul.bf16.gmra.mxu0 %v4144
    %v4375 = vpop.f32.mrf.mxu0
    %v4376 = vadd.f32 0.0, %v4375
    %v4377 = vpop.f32.mrf.mxu0
    %4378 = vdwg.mxu0
    %4379 = vmatpush.bf16.msra.mxu0 %v4307
    %4380 = vmatpush.bf16.msra.mxu0 %v4305
    %4381 = vmatpush.bf16.msra.mxu0 %v4303
    %4382 = vmatpush.bf16.msra.mxu0 %v4301
    %4383 = vmatpush.bf16.msra.mxu0 %v4299
    %4384 = vmatpush.bf16.msra.mxu0 %v4297
    %4385 = vmatpush.bf16.msra.mxu0 %v4295
    %4386 = vmatpush.bf16.msra.mxu0 %v4293
    %4387 = vmatmul.bf16.gmra.mxu0 %v4145
    %v4388 = vpop.f32.mrf.mxu0
    %v4389 = vadd.f32 %v4376, %v4388
    %v4390 = vpop.f32.mrf.mxu0
    %4391 = vdwg.mxu0
    %v4392 = vadd.f32 %v3572, %v4363
    %v4393 = vadd.f32 %v3573, %v4389
    %v4394 = vld [vmem:[#allocation13 + $0x1d] sm:$0x3]
    %v4396 = vperm.slane %v4394, 0
    %v4397 = vperm.slane %v4394, 1
    %v4400 = vadd.f32 %v4392, %v4396
    %v4401 = vadd.f32 %v4393, %v4397
    %v4402 = vtanh.pop %v4400
    %v4403 = vtanh.pop %v4401
    %4404 = vst [vmem:[#allocation14] sm:$0xff] %v4402
    %4405 = vst [vmem:[#allocation14 + $0x8] sm:$0xff] %v4403
    // Predicated region
    $region66: #{tpu_custom_call.1} parent=1 // pred_check
      _
    $region67: #{tpu_custom_call.1} parent=1 // pred_check_branch
      %4407 = sbr.rel (0) target = $region69
    $region68: #{tpu_custom_call.1} parent=1 // pred_region
      %4409 = vsyncadd [#allocation10], 0
      %s4411 = sshll.u32 [#allocation14], 4
      %s4412 = int_to_ptr.vmem [resolvable:$true] %s4411
      %s4413 = sshll.u32 %s7, 4
      %s4414 = int_to_ptr.hbm [resolvable:$true] %s4413
      %4416 = dma.vmem_to_hbm [thread:$0]  %s4412, 256, %s4414, [#allocation10]
    $region69: #{tpu_custom_call.1} parent=1 // pred_fallthru
      _
    // Predicated region
    $region70: #{tpu_custom_call.1} parent=1 // pred_check
      _
    $region71: #{tpu_custom_call.1} parent=1 // pred_check_branch
      %4418 = sbr.rel (0) target = $region73
    $region72: #{tpu_custom_call.1} parent=1 // pred_region
      %4420 = dma.done [#allocation10], 256
    $region73: #{tpu_custom_call.1} parent=1 // pred_fallthru
      _
    %4421 = vsyncpa [#allocation9], 1
    %4422 = vsyncpa [#allocation12], 1
    %4423 = vsyncpa [#allocation10], 1
  %4424 = vsyncmov [#allocation6]
  %s4425 = vpop.sfrf %4424
  %p4426 = scmp.eq.s32.totalorder %s4425, 0
  %p4427 = pneg %p4426
  %4429 = shalt.err (%p4427)
  %s4430 = scalar_lea.sflag [#allocation6], 1
  %4431 = vsyncmov %s4430
  %s4432 = vpop.sfrf %4431
  %p4433 = scmp.eq.s32.totalorder %s4432, 0
  %p4434 = pneg %p4433
  %4436 = shalt.err (%p4434)
  %4437 = vsyncmov [#allocation7]
  %s4438 = vpop.sfrf %4437
  %p4439 = scmp.eq.s32.totalorder %s4438, 0
  %p4440 = pneg %p4439
  %4442 = shalt.err (%p4440)
  %s4443 = scalar_lea.sflag [#allocation7], 1
  %4444 = vsyncmov %s4443
  %s4445 = vpop.sfrf %4444
  %p4446 = scmp.eq.s32.totalorder %s4445, 0
  %p4447 = pneg %p4446
  %4449 = shalt.err (%p4447)
  %s4450 = scalar_lea.sflag [#allocation7], 2
  %4451 = vsyncmov %s4450
  %s4452 = vpop.sfrf %4451
  %p4453 = scmp.eq.s32.totalorder %s4452, 0
  %p4454 = pneg %p4453
  %4456 = shalt.err (%p4454)
  %s4457 = scalar_lea.sflag [#allocation7], 3
  %4458 = vsyncmov %s4457
  %s4459 = vpop.sfrf %4458
  %p4460 = scmp.eq.s32.totalorder %s4459, 0
  %p4461 = pneg %p4460
  %4463 = shalt.err (%p4461)
  %s4464 = scalar_lea.sflag [#allocation7], 4
  %4465 = vsyncmov %s4464
  %s4466 = vpop.sfrf %4465
  %p4467 = scmp.eq.s32.totalorder %s4466, 0
  %p4468 = pneg %p4467
  %4470 = shalt.err (%p4468)
  %s4471 = scalar_lea.sflag [#allocation7], 5
  %4472 = vsyncmov %s4471
  %s4473 = vpop.sfrf %4472
  %p4474 = scmp.eq.s32.totalorder %s4473, 0
  %p4475 = pneg %p4474
  %4477 = shalt.err (%p4475)
  %s4478 = scalar_lea.sflag [#allocation7], 6
  %4479 = vsyncmov %s4478
  %s4480 = vpop.sfrf %4479
  %p4481 = scmp.eq.s32.totalorder %s4480, 0
  %p4482 = pneg %p4481
  %4484 = shalt.err (%p4482)
  %s4485 = scalar_lea.sflag [#allocation7], 7
  %4486 = vsyncmov %s4485
  %s4487 = vpop.sfrf %4486
  %p4488 = scmp.eq.s32.totalorder %s4487, 0
  %p4489 = pneg %p4488
  %4491 = shalt.err (%p4489)

</llo_original>
